<compile_context>
chip_gen: v7x
topology: tpu7x:2x2x1
jax: 0.10.0
libtpu: 0.0.40
codegen_flags: <defaults>
</compile_context>

<pallas_src>
import functools

import jax
import jax.numpy as jnp
from jax import lax
from jax.experimental import pallas as pl
from jax.experimental.pallas import tpu as pltpu


# --------------------------- fused Pallas kernel ---------------------------

def _attention_stage(y3, w_qkv, gamma, C, Cq):
    """One torch self_attn stage on position-major blocked activations.

    y3:    (R, A, C) float32.  Row r, col a holds flat position p = r*A + a of
           the per-channel activation, i.e. exactly the torch
           `.view(B, -1, axis)` blocking with axis length A.
    w_qkv: (C, C + 2*Cq) bf16, columns packed as [Wv^T | Wq^T | Wk^T].
    Returns (R, A, C) float32:  gamma * attention(y) + y.
    """
    R, A, _ = y3.shape

    # Fused q/k/v projection: one batched matmul instead of three.
    w3 = jnp.broadcast_to(w_qkv, (R,) + w_qkv.shape)              # (R, C, C+2Cq)
    qkv = jnp.einsum('rac,rcd->rad', y3.astype(jnp.bfloat16), w3,
                     preferred_element_type=jnp.float32)          # (R, A, C+2Cq)
    v = qkv[:, :, :C].astype(jnp.bfloat16)                        # (R, A, C)
    q = qkv[:, :, C:C + Cq].astype(jnp.bfloat16)                  # (R, A, Cq)
    k = qkv[:, :, C + Cq:].astype(jnp.bfloat16)                   # (R, A, Cq)

    # scores[a, b] = sum_{c, r} q[r, a, c] * k[r, b, c]
    s3 = jnp.einsum('rac,rbc->rab', q, k,
                    preferred_element_type=jnp.float32)           # (R, A, A)
    scores = jnp.sum(s3, axis=0)                                  # (A, A)
    scores = scores - jnp.max(scores, axis=-1, keepdims=True)
    e = jnp.exp(scores)
    inv = pl.reciprocal(jnp.sum(e, axis=-1, keepdims=True), approx=True)
    attn = (gamma * inv) * e        # gamma folded into the attention matrix

    # out[r, a, c] = sum_b attn[a, b] * v[r, b, c];  residual added (gamma is
    # already inside attn, so this is gamma*out + y exactly).
    attn3 = jnp.broadcast_to(attn.astype(jnp.bfloat16)[None], (R, A, A))
    out3 = jnp.einsum('rab,rbc->rac', attn3, v,
                      preferred_element_type=jnp.float32)         # (R, A, C)
    return out3 + y3


def _aa_fused_kernel(gamma_ref, xcol_ref, wconv_ref, wqkvh_ref, wqkvw_ref,
                     o_ref, *, C, Cq):
    """Whole AA_kernel forward for one batch element (grid=(B,))."""
    _, R1, A1, K = xcol_ref.shape
    _, R2, A2, _ = o_ref.shape

    # ---- fused conv0(1x1) + conv1(3x3, pad 1): single K=9*Cin contraction ----
    x3 = xcol_ref[0]                                              # (R1, A1, 9*Cin)
    wc3 = jnp.broadcast_to(wconv_ref[...], (R1, K, C))            # (R1, 9*Cin, C)
    y3 = jnp.einsum('rak,rkc->rac', x3, wc3,
                    preferred_element_type=jnp.float32)           # (R1, A1, C)

    # ---- axial attention over H (torch self_attn(mode='h')) ----
    y3 = _attention_stage(y3, wqkvh_ref[...], gamma_ref[0], C, Cq)

    # ---- re-block for the W stage (only traced when H != W) ----
    if (R1, A1) != (R2, A2):
        y3 = y3.reshape(R2, A2, C)

    # ---- axial attention over W (torch self_attn(mode='w')) ----
    y3 = _attention_stage(y3, wqkvw_ref[...], gamma_ref[1], C, Cq)

    # Single full-block store (no per-block masked partial stores).
    o_ref[0] = y3.astype(o_ref.dtype)


# ------------------------------ wrapper (glue) ------------------------------

def aa_kernel_forward(x, p):
    """x: (B, Cin, H, W) NCHW -> (B, Cout, H, W)."""
    B, Cin, H, W = x.shape
    Cout = p['conv1_w'].shape[0]
    Cq = p['h_wq'].shape[0]
    HW = H * W
    A1, A2 = H, W                 # torch self_attn axis lengths (H / W stages)
    R1, R2 = HW // A1, HW // A2
    K = 9 * Cin

    # Fold conv0 (1x1) into conv1 (3x3): exact (both linear, bias-free).
    w_comb = jnp.einsum('ocyx,ci->oiyx', p['conv1_w'], p['conv0_w'])
    w_conv = jnp.transpose(w_comb, (2, 3, 1, 0)).reshape(K, Cout)
    w_conv = w_conv.astype(jnp.bfloat16)

    # Position-major im2col (tap order (ky, kx, cin) matches w_conv), blocked
    # by the stage-1 axis: shape (B, R1, A1, 9*Cin).
    xpad = jnp.pad(x, ((0, 0), (0, 0), (1, 1), (1, 1)))
    taps = [xpad[:, :, dy:dy + H, dx:dx + W]
            for dy in range(3) for dx in range(3)]
    xcol = jnp.stack(taps, axis=1)                        # (B, 9, Cin, H, W)
    xcol = jnp.transpose(xcol, (0, 3, 4, 1, 2))           # (B, H, W, 9, Cin)
    xcol = xcol.reshape(B, R1, A1, K).astype(jnp.bfloat16)

    # Fused per-stage projection weights: columns [Wv^T | Wq^T | Wk^T].
    w_qkv_h = jnp.concatenate(
        [p['h_wv'].T, p['h_wq'].T, p['h_wk'].T], axis=1).astype(jnp.bfloat16)
    w_qkv_w = jnp.concatenate(
        [p['w_wv'].T, p['w_wq'].T, p['w_wk'].T], axis=1).astype(jnp.bfloat16)

    gammas = jnp.stack([jnp.asarray(p['h_gamma'], jnp.float32).reshape(()),
                        jnp.asarray(p['w_gamma'], jnp.float32).reshape(())])

    kernel = functools.partial(_aa_fused_kernel, C=Cout, Cq=Cq)
    out = pl.pallas_call(
        kernel,
        out_shape=jax.ShapeDtypeStruct((B, R2, A2, Cout), jnp.float32),
        grid=(B,),
        in_specs=[
            pl.BlockSpec(memory_space=pltpu.MemorySpace.SMEM),       # gammas (2,)
            pl.BlockSpec((1, R1, A1, K), lambda b: (b, 0, 0, 0)),    # im2col
            pl.BlockSpec((K, Cout), lambda b: (0, 0)),               # conv weight
            pl.BlockSpec((Cout, Cout + 2 * Cq), lambda b: (0, 0)),   # H qkv weight
            pl.BlockSpec((Cout, Cout + 2 * Cq), lambda b: (0, 0)),   # W qkv weight
        ],
        out_specs=pl.BlockSpec((1, R2, A2, Cout), lambda b: (b, 0, 0, 0)),
        compiler_params=pltpu.CompilerParams(
            dimension_semantics=("parallel",)),
    )(gammas, xcol, w_conv, w_qkv_h, w_qkv_w)

    # (B, R2, A2, C) == (B, H, W, C); back to NCHW (tiny XLA transpose).
    return jnp.transpose(out.reshape(B, H, W, Cout), (0, 3, 1, 2))


# --------------------------- pure-JAX reference ---------------------------

def _ref_attn(z, wq, wk, wv, gamma, axis_len):
    B, C, H, W = z.shape
    hp = lax.Precision.HIGHEST
    q = jnp.einsum('oc,bchw->bohw', wq, z, precision=hp).reshape(B, -1, axis_len)
    k = jnp.einsum('oc,bchw->bohw', wk, z, precision=hp).reshape(B, -1, axis_len)
    v = jnp.einsum('oc,bchw->bohw', wv, z, precision=hp).reshape(B, -1, axis_len)
    scores = jnp.einsum('bla,blc->bac', q, k, precision=hp)
    attn = jax.nn.softmax(scores, axis=-1)
    out = jnp.einsum('bla,bca->blc', v, attn, precision=hp).reshape(B, C, H, W)
    return gamma * out + z


def _ref_forward(x, p):
    hp = lax.Precision.HIGHEST
    y = jnp.einsum('oc,bchw->bohw', p['conv0_w'], x, precision=hp)
    B, C, H, W = y.shape
    yp = jnp.pad(y, ((0, 0), (0, 0), (1, 1), (1, 1)))
    y3 = jnp.zeros_like(y)
    for dy in range(3):
        for dx in range(3):
            y3 = y3 + jnp.einsum('oc,bchw->bohw', p['conv1_w'][:, :, dy, dx],
                                 yp[:, :, dy:dy + H, dx:dx + W], precision=hp)
    hx = _ref_attn(y3, p['h_wq'], p['h_wk'], p['h_wv'], p['h_gamma'], H)
    return _ref_attn(hx, p['w_wq'], p['w_wk'], p['w_wv'], p['w_gamma'], W)


# ---------------------------------- main ----------------------------------

if __name__ == "__main__":
    B, Cin, Cout, H, W = 2, 4, 32, 16, 16
    Cq = Cout // 8
    key = jax.random.PRNGKey(0)
    ks = jax.random.split(key, 9)
    s = 0.1
    # TODO(synk): real CaraNet Conv wrappers include BatchNorm(+ReLU); the
    # stated spec here is pure bias-free convs, which is what we implement.
    params = {
        'conv0_w': s * jax.random.normal(ks[0], (Cout, Cin), jnp.float32),
        'conv1_w': s * jax.random.normal(ks[1], (Cout, Cout, 3, 3), jnp.float32),
        'h_wq': s * jax.random.normal(ks[2], (Cq, Cout), jnp.float32),
        'h_wk': s * jax.random.normal(ks[3], (Cq, Cout), jnp.float32),
        'h_wv': s * jax.random.normal(ks[4], (Cout, Cout), jnp.float32),
        # PyTorch inits gamma to 0 (attention branch disabled at init); use a
        # deterministic nonzero value so the attention path is exercised.
        'h_gamma': jnp.float32(0.1),
        'w_wq': s * jax.random.normal(ks[5], (Cq, Cout), jnp.float32),
        'w_wk': s * jax.random.normal(ks[6], (Cq, Cout), jnp.float32),
        'w_wv': s * jax.random.normal(ks[7], (Cout, Cout), jnp.float32),
        'w_gamma': jnp.float32(0.2),
    }
    x = jax.random.normal(ks[8], (B, Cin, H, W), jnp.float32)

    fwd = jax.jit(aa_kernel_forward)
    out = jax.block_until_ready(fwd(x, params))
    assert out.shape == (B, Cout, H, W)

    ref = _ref_forward(x, params)
    err_max = float(jnp.max(jnp.abs(out - ref)))
    err_mean = float(jnp.mean(jnp.abs(out - ref)))
    # bf16 MXU operands (per perf review) vs HIGHEST-precision f32 reference:
    # expected worst-case abs error is ~few*1e-3 at these magnitudes, so these
    # bounds keep ~10x headroom while still catching structural errors (which
    # are O(0.1-1)).
    assert err_max < 3e-2 and err_mean < 3e-3, (err_max, err_mean)
    print("KERNEL_OK")
</pallas_src>

<mosaic_0001>
module attributes {stable_mosaic.version = 11 : i64} {
  func.func @_aa_fused_kernel(%arg0: i32, %arg1: memref<2xf32, #tpu.memory_space<smem>>, %arg2: memref<1x16x16x36xbf16, #tpu.memory_space<vmem>>, %arg3: memref<36x32xbf16, #tpu.memory_space<vmem>>, %arg4: memref<32x40xbf16, #tpu.memory_space<vmem>>, %arg5: memref<32x40xbf16, #tpu.memory_space<vmem>>, %arg6: memref<1x16x16x32xf32, #tpu.memory_space<vmem>>) attributes {dimension_semantics = [#tpu.dimension_semantics<parallel>], iteration_bounds = array<i64: 2>, scalar_prefetch = 0 : i64, scratch_operands = 0 : i64, tpu.core_type = #tpu.core_type<tc>, window_params = [{transform_indices = @transform_0, window_bounds = array<i64: 2>}, {transform_indices = @transform_1, window_bounds = array<i64: 1, 16, 16, 36>}, {pipeline_mode = #tpu.pipeline_mode<synchronous>, transform_indices = @transform_2, window_bounds = array<i64: 36, 32>}, {pipeline_mode = #tpu.pipeline_mode<synchronous>, transform_indices = @transform_3, window_bounds = array<i64: 32, 40>}, {pipeline_mode = #tpu.pipeline_mode<synchronous>, transform_indices = @transform_4, window_bounds = array<i64: 32, 40>}, {transform_indices = @transform_5, window_bounds = array<i64: 1, 16, 16, 32>}]} {
    %c0 = arith.constant 0 : index
    %c0_0 = arith.constant 0 : index
    %c0_1 = arith.constant 0 : index
    %c0_2 = arith.constant 0 : index
    %0 = vector.load %arg2[%c0, %c0_0, %c0_1, %c0_2] : memref<1x16x16x36xbf16, #tpu.memory_space<vmem>>, vector<1x16x16x36xbf16>
    %1 = vector.shape_cast %0 : vector<1x16x16x36xbf16> to vector<16x16x36xbf16>
    %c0_3 = arith.constant 0 : index
    %c0_4 = arith.constant 0 : index
    %2 = vector.load %arg3[%c0_3, %c0_4] : memref<36x32xbf16, #tpu.memory_space<vmem>>, vector<36x32xbf16>
    %3 = vector.shape_cast %2 : vector<36x32xbf16> to vector<1x36x32xbf16>
    %4 = vector.broadcast %3 : vector<1x36x32xbf16> to vector<16x36x32xbf16>
    "tpu.trace_start"() <{level = 10 : i32, message = "rak,rkc->rac"}> : () -> ()
    %cst = arith.constant dense<0.000000e+00> : vector<16x16x32xf32>
    %5 = tpu.matmul %1, %4, %cst {dimension_numbers = #tpu.dot_dimension_numbers<[2], [1], [1], [2], [0, 0, 0, 1, 1, 2], [0], [0]>} : vector<16x16x36xbf16>, vector<16x36x32xbf16>, vector<16x16x32xf32> -> vector<16x16x32xf32>
    "tpu.trace_stop"() : () -> ()
    %c0_5 = arith.constant 0 : index
    %c0_6 = arith.constant 0 : index
    %6 = vector.load %arg4[%c0_5, %c0_6] : memref<32x40xbf16, #tpu.memory_space<vmem>>, vector<32x40xbf16>
    %c0_7 = arith.constant 0 : index
    %7 = memref.load %arg1[%c0_7] : memref<2xf32, #tpu.memory_space<smem>>
    %8 = vector.shape_cast %6 : vector<32x40xbf16> to vector<1x32x40xbf16>
    %9 = vector.broadcast %8 : vector<1x32x40xbf16> to vector<16x32x40xbf16>
    %10 = arith.truncf %5 : vector<16x16x32xf32> to vector<16x16x32xbf16>
    "tpu.trace_start"() <{level = 10 : i32, message = "rac,rcd->rad"}> : () -> ()
    %cst_8 = arith.constant dense<0.000000e+00> : vector<16x16x40xf32>
    %11 = tpu.matmul %10, %9, %cst_8 {dimension_numbers = #tpu.dot_dimension_numbers<[2], [1], [1], [2], [0, 0, 0, 1, 1, 2], [0], [0]>} : vector<16x16x32xbf16>, vector<16x32x40xbf16>, vector<16x16x40xf32> -> vector<16x16x40xf32>
    "tpu.trace_stop"() : () -> ()
    %12 = vector.extract_strided_slice %11 {offsets = [0, 0, 0], sizes = [16, 16, 32], strides = [1, 1, 1]} : vector<16x16x40xf32> to vector<16x16x32xf32>
    %13 = arith.truncf %12 : vector<16x16x32xf32> to vector<16x16x32xbf16>
    %14 = vector.extract_strided_slice %11 {offsets = [0, 0, 32], sizes = [16, 16, 4], strides = [1, 1, 1]} : vector<16x16x40xf32> to vector<16x16x4xf32>
    %15 = arith.truncf %14 : vector<16x16x4xf32> to vector<16x16x4xbf16>
    %16 = vector.extract_strided_slice %11 {offsets = [0, 0, 36], sizes = [16, 16, 4], strides = [1, 1, 1]} : vector<16x16x40xf32> to vector<16x16x4xf32>
    %17 = arith.truncf %16 : vector<16x16x4xf32> to vector<16x16x4xbf16>
    "tpu.trace_start"() <{level = 10 : i32, message = "rac,rbc->rab"}> : () -> ()
    %cst_9 = arith.constant dense<0.000000e+00> : vector<16x16x16xf32>
    %18 = tpu.matmul %15, %17, %cst_9 {dimension_numbers = #tpu.dot_dimension_numbers<[2], [2], [1], [1], [0, 0, 0, 1, 1, 1], [0], [0]>} : vector<16x16x4xbf16>, vector<16x16x4xbf16>, vector<16x16x16xf32> -> vector<16x16x16xf32>
    "tpu.trace_stop"() : () -> ()
    %cst_10 = arith.constant dense<0.000000e+00> : vector<16x16xf32>
    %19 = vector.multi_reduction <add>, %18, %cst_10 [0] : vector<16x16x16xf32> to vector<16x16xf32>
    %cst_11 = arith.constant dense<0xFF800000> : vector<16xf32>
    %20 = vector.multi_reduction <maximumf>, %19, %cst_11 [1] : vector<16x16xf32> to vector<16xf32>
    %21 = vector.shape_cast %20 : vector<16xf32> to vector<16x1xf32>
    %22 = vector.broadcast %21 : vector<16x1xf32> to vector<16x16xf32>
    %23 = arith.subf %19, %22 : vector<16x16xf32>
    %24 = math.exp %23 : vector<16x16xf32>
    %cst_12 = arith.constant dense<0.000000e+00> : vector<16xf32>
    %25 = vector.multi_reduction <add>, %24, %cst_12 [1] : vector<16x16xf32> to vector<16xf32>
    %26 = vector.shape_cast %25 : vector<16xf32> to vector<16x1xf32>
    %27 = tpu.reciprocal %26 {approx = true} : vector<16x1xf32> -> vector<16x1xf32>
    %28 = vector.broadcast %7 : f32 to vector<16x1xf32>
    %29 = arith.mulf %28, %27 : vector<16x1xf32>
    %30 = vector.broadcast %29 : vector<16x1xf32> to vector<16x16xf32>
    %31 = arith.mulf %30, %24 : vector<16x16xf32>
    %32 = arith.truncf %31 : vector<16x16xf32> to vector<16x16xbf16>
    %33 = vector.shape_cast %32 : vector<16x16xbf16> to vector<1x16x16xbf16>
    %34 = vector.shape_cast %33 : vector<1x16x16xbf16> to vector<1x16x16xbf16>
    %35 = vector.broadcast %34 : vector<1x16x16xbf16> to vector<16x16x16xbf16>
    "tpu.trace_start"() <{level = 10 : i32, message = "rab,rbc->rac"}> : () -> ()
    %cst_13 = arith.constant dense<0.000000e+00> : vector<16x16x32xf32>
    %36 = tpu.matmul %35, %13, %cst_13 {dimension_numbers = #tpu.dot_dimension_numbers<[2], [1], [1], [2], [0, 0, 0, 1, 1, 2], [0], [0]>} : vector<16x16x16xbf16>, vector<16x16x32xbf16>, vector<16x16x32xf32> -> vector<16x16x32xf32>
    "tpu.trace_stop"() : () -> ()
    %37 = arith.addf %36, %5 : vector<16x16x32xf32>
    %c0_14 = arith.constant 0 : index
    %c0_15 = arith.constant 0 : index
    %38 = vector.load %arg5[%c0_14, %c0_15] : memref<32x40xbf16, #tpu.memory_space<vmem>>, vector<32x40xbf16>
    %c1 = arith.constant 1 : index
    %39 = memref.load %arg1[%c1] : memref<2xf32, #tpu.memory_space<smem>>
    %40 = vector.shape_cast %38 : vector<32x40xbf16> to vector<1x32x40xbf16>
    %41 = vector.broadcast %40 : vector<1x32x40xbf16> to vector<16x32x40xbf16>
    %42 = arith.truncf %37 : vector<16x16x32xf32> to vector<16x16x32xbf16>
    "tpu.trace_start"() <{level = 10 : i32, message = "rac,rcd->rad"}> : () -> ()
    %cst_16 = arith.constant dense<0.000000e+00> : vector<16x16x40xf32>
    %43 = tpu.matmul %42, %41, %cst_16 {dimension_numbers = #tpu.dot_dimension_numbers<[2], [1], [1], [2], [0, 0, 0, 1, 1, 2], [0], [0]>} : vector<16x16x32xbf16>, vector<16x32x40xbf16>, vector<16x16x40xf32> -> vector<16x16x40xf32>
    "tpu.trace_stop"() : () -> ()
    %44 = vector.extract_strided_slice %43 {offsets = [0, 0, 0], sizes = [16, 16, 32], strides = [1, 1, 1]} : vector<16x16x40xf32> to vector<16x16x32xf32>
    %45 = arith.truncf %44 : vector<16x16x32xf32> to vector<16x16x32xbf16>
    %46 = vector.extract_strided_slice %43 {offsets = [0, 0, 32], sizes = [16, 16, 4], strides = [1, 1, 1]} : vector<16x16x40xf32> to vector<16x16x4xf32>
    %47 = arith.truncf %46 : vector<16x16x4xf32> to vector<16x16x4xbf16>
    %48 = vector.extract_strided_slice %43 {offsets = [0, 0, 36], sizes = [16, 16, 4], strides = [1, 1, 1]} : vector<16x16x40xf32> to vector<16x16x4xf32>
    %49 = arith.truncf %48 : vector<16x16x4xf32> to vector<16x16x4xbf16>
    "tpu.trace_start"() <{level = 10 : i32, message = "rac,rbc->rab"}> : () -> ()
    %cst_17 = arith.constant dense<0.000000e+00> : vector<16x16x16xf32>
    %50 = tpu.matmul %47, %49, %cst_17 {dimension_numbers = #tpu.dot_dimension_numbers<[2], [2], [1], [1], [0, 0, 0, 1, 1, 1], [0], [0]>} : vector<16x16x4xbf16>, vector<16x16x4xbf16>, vector<16x16x16xf32> -> vector<16x16x16xf32>
    "tpu.trace_stop"() : () -> ()
    %cst_18 = arith.constant dense<0.000000e+00> : vector<16x16xf32>
    %51 = vector.multi_reduction <add>, %50, %cst_18 [0] : vector<16x16x16xf32> to vector<16x16xf32>
    %cst_19 = arith.constant dense<0xFF800000> : vector<16xf32>
    %52 = vector.multi_reduction <maximumf>, %51, %cst_19 [1] : vector<16x16xf32> to vector<16xf32>
    %53 = vector.shape_cast %52 : vector<16xf32> to vector<16x1xf32>
    %54 = vector.broadcast %53 : vector<16x1xf32> to vector<16x16xf32>
    %55 = arith.subf %51, %54 : vector<16x16xf32>
    %56 = math.exp %55 : vector<16x16xf32>
    %cst_20 = arith.constant dense<0.000000e+00> : vector<16xf32>
    %57 = vector.multi_reduction <add>, %56, %cst_20 [1] : vector<16x16xf32> to vector<16xf32>
    %58 = vector.shape_cast %57 : vector<16xf32> to vector<16x1xf32>
    %59 = tpu.reciprocal %58 {approx = true} : vector<16x1xf32> -> vector<16x1xf32>
    %60 = vector.broadcast %39 : f32 to vector<16x1xf32>
    %61 = arith.mulf %60, %59 : vector<16x1xf32>
    %62 = vector.broadcast %61 : vector<16x1xf32> to vector<16x16xf32>
    %63 = arith.mulf %62, %56 : vector<16x16xf32>
    %64 = arith.truncf %63 : vector<16x16xf32> to vector<16x16xbf16>
    %65 = vector.shape_cast %64 : vector<16x16xbf16> to vector<1x16x16xbf16>
    %66 = vector.shape_cast %65 : vector<1x16x16xbf16> to vector<1x16x16xbf16>
    %67 = vector.broadcast %66 : vector<1x16x16xbf16> to vector<16x16x16xbf16>
    "tpu.trace_start"() <{level = 10 : i32, message = "rab,rbc->rac"}> : () -> ()
    %cst_21 = arith.constant dense<0.000000e+00> : vector<16x16x32xf32>
    %68 = tpu.matmul %67, %45, %cst_21 {dimension_numbers = #tpu.dot_dimension_numbers<[2], [1], [1], [2], [0, 0, 0, 1, 1, 2], [0], [0]>} : vector<16x16x16xbf16>, vector<16x16x32xbf16>, vector<16x16x32xf32> -> vector<16x16x32xf32>
    "tpu.trace_stop"() : () -> ()
    %69 = arith.addf %68, %37 : vector<16x16x32xf32>
    %c0_22 = arith.constant 0 : index
    %c0_23 = arith.constant 0 : index
    %c0_24 = arith.constant 0 : index
    %c0_25 = arith.constant 0 : index
    %70 = vector.load %arg6[%c0_22, %c0_23, %c0_24, %c0_25] : memref<1x16x16x32xf32, #tpu.memory_space<vmem>>, vector<1x16x16x32xf32>
    %71 = vector.shape_cast %70 : vector<1x16x16x32xf32> to vector<16x16x32xf32>
    %72 = vector.shape_cast %69 : vector<16x16x32xf32> to vector<1x16x16x32xf32>
    tpu.vector_store %arg6[%c0_22, %c0_23, %c0_24, %c0_25], %72 {strides = array<i32>} : memref<1x16x16x32xf32, #tpu.memory_space<vmem>>, vector<1x16x16x32xf32>,
    return
  }
  func.func @transform_0(%arg0: i32) -> i32 {
    %c0_i32 = arith.constant 0 : i32
    %c0_i32_0 = arith.constant 0 : i32
    return %c0_i32 : i32
  }
  func.func @transform_1(%arg0: i32) -> (i32, i32, i32, i32) {
    %c0_i32 = arith.constant 0 : i32
    %c0_i32_0 = arith.constant 0 : i32
    %c0_i32_1 = arith.constant 0 : i32
    %c0_i32_2 = arith.constant 0 : i32
    return %arg0, %c0_i32, %c0_i32_0, %c0_i32_1 : i32, i32, i32, i32
  }
  func.func @transform_2(%arg0: i32) -> (i32, i32) {
    %c0_i32 = arith.constant 0 : i32
    %c0_i32_0 = arith.constant 0 : i32
    %c0_i32_1 = arith.constant 0 : i32
    return %c0_i32, %c0_i32_0 : i32, i32
  }
  func.func @transform_3(%arg0: i32) -> (i32, i32) {
    %c0_i32 = arith.constant 0 : i32
    %c0_i32_0 = arith.constant 0 : i32
    %c0_i32_1 = arith.constant 0 : i32
    return %c0_i32, %c0_i32_0 : i32, i32
  }
  func.func @transform_4(%arg0: i32) -> (i32, i32) {
    %c0_i32 = arith.constant 0 : i32
    %c0_i32_0 = arith.constant 0 : i32
    %c0_i32_1 = arith.constant 0 : i32
    return %c0_i32, %c0_i32_0 : i32, i32
  }
  func.func @transform_5(%arg0: i32) -> (i32, i32, i32, i32) {
    %c0_i32 = arith.constant 0 : i32
    %c0_i32_0 = arith.constant 0 : i32
    %c0_i32_1 = arith.constant 0 : i32
    %c0_i32_2 = arith.constant 0 : i32
    return %arg0, %c0_i32, %c0_i32_0, %c0_i32_1 : i32, i32, i32, i32
  }
}

</mosaic_0001>

<llo_original>
// kernel: aa_kernel_forward.1
$region0: #{aa_kernel_forward.1}
  #allocation0 [shape = 'u32[]', space=smem, size = 0x4, offset = 0x4, fixed_abs, tag = 'smem constant byte address 0x4 - core index']
  #allocation1 [shape = 'u32[144,128]{1,0:T(1,128)}', space=vmem, size = 0x12000, scoped, tag = 'internal scratch']
  %s0 = inlined_call_operand.vmem [shape: f32[2], index: 0, kind: input, shape index: {}]
  %s1 = inlined_call_operand.vmem [shape: bf16[2,16,16,36], index: 1, kind: input, shape index: {}]
  %s2 = inlined_call_operand.vmem [shape: bf16[36,32], index: 2, kind: input, shape index: {}]
  %s3 = inlined_call_operand.vmem [shape: bf16[32,40], index: 3, kind: input, shape index: {}]
  %s4 = inlined_call_operand.vmem [shape: bf16[32,40], index: 4, kind: input, shape index: {}]
  %s5 = inlined_call_operand.hbm [shape: f32[2,16,16,32], index: 5, kind: output, shape index: {}]
  %s6 = sld [smem:[#allocation0]]
  $region57: #{aa_kernel_forward.1} parent=0
    _
  %s8 = ssub.s32 1, %s6
  %s9 = scalar_select 0, %s8, %s6
  $region1: #{aa_kernel_forward.1} parent=0
    #allocation2 [shape = 'u8[512]{0}', space=smem, size = 0x200, scoped, tag = 'input window, operand 0, single buffered']
    #allocation3 [shape = 's32[2]{0}', space=sflag, size = 0x8, scoped, tag = 'scoped memory for aa_kernel_forward.1']
    #allocation4 [shape = 's32[2]{0}', space=sflag, size = 0x8, scoped, tag = 'scoped memory for aa_kernel_forward.1']
    #allocation5 [shape = 'u8[262144]{0}', space=vmem, size = 0x40000, scoped, tag = 'output window, operand 0']
    %10 = vsyncpa [#allocation4], 0
    %11 = vsyncpa [#allocation3], 0
    %s12 = scalar_lea.sflag [#allocation3], 1
    %13 = vsyncpa %s12, 0
    loop: start=0, step=1, limit=4
    $region2: #{aa_kernel_forward.1} parent=1 // loop_pre_header
      _
    $region3: #{aa_kernel_forward.1} parent=1 // loop_header
      %s15 = sphi 0, %s19
      %p16 = scmp.ge.s32.totalorder %s15, 4
      %s23 = sphi 0, %s23
      %s25 = sphi 0, %s23
      %s26 = sphi 0, %s25
      %s40 = sphi 0, %s26
      %s46 = sphi 0, %s48
      %s49 = sphi 0, %s46
      %s50 = sphi 0, %s49
      %s66 = sphi 0, %s50
      %s70 = sphi 0, %s70
      %s72 = sphi 0, %s70
      %s73 = sphi 0, %s72
      %s87 = sphi 0, %s73
      %s91 = sphi 0, %s91
      %s93 = sphi 0, %s91
      %s94 = sphi 0, %s93
      %s108 = sphi 0, %s94
      %s112 = sphi 0, %s112
      %s114 = sphi 0, %s112
      %s115 = sphi 0, %s114
      %s129 = sphi 0, %s115
      %s135 = sphi 0, %s137
      %s138 = sphi 0, %s135
      %s139 = sphi 0, %s138
      %s155 = sphi 0, %s139
    $region4: #{aa_kernel_forward.1} parent=1 // loop_header_branch
      %18 = sbr.rel (%p16) target = $region8
    $region5: #{aa_kernel_forward.1} parent=1 // loop_body
      %s20 = ssub.s32 %s15, 1
      %s21 = ssub.s32 %s15, 2
      %s22 = sadd.s32 %s15, 1
      %s24 = sadd.s32 %s23, 1
      %p27 = scmp.eq.s32.totalorder %s15, 1
      %p28 = scmp.ne.s32.totalorder %s23, %s25
      %p29 = scmp.eq.s32.totalorder %s15, 0
      %p30 = por %p28, %p29
      %p31 = scmp.ne.s32.totalorder %s23, %s25
      %p32 = scmp.eq.s32.totalorder %s20, 1
      %p33 = por %p31, %p32
      %p34 = scmp.ne.s32.totalorder %s25, %s26
      %p35 = scmp.eq.s32.totalorder %s20, 0
      %p36 = por %p34, %p35
      %p37 = scmp.ne.s32.totalorder %s25, %s26
      %p38 = scmp.eq.s32.totalorder %s21, 1
      %p39 = por %p37, %p38
      %p41 = scmp.ne.s32.totalorder %s26, %s40
      %p42 = scmp.eq.s32.totalorder %s21, 0
      %p43 = por %p41, %p42
      %s44 = ssub.s32 %s15, %s22
      %p45 = scmp.eq.s32.totalorder %s44, 0
      %s47 = sadd.s32 %s46, 1
      %s48 = scalar_select %p45, %s46, %s47
      %p51 = pneg %p45
      %p52 = scmp.eq.s32.totalorder %s15, 1
      %p53 = por %p51, %p52
      %p54 = scmp.ne.s32.totalorder %s46, %s49
      %p55 = scmp.eq.s32.totalorder %s15, 0
      %p56 = por %p54, %p55
      %p57 = scmp.ne.s32.totalorder %s46, %s49
      %p58 = scmp.eq.s32.totalorder %s20, 1
      %p59 = por %p57, %p58
      %p60 = scmp.ne.s32.totalorder %s49, %s50
      %p61 = scmp.eq.s32.totalorder %s20, 0
      %p62 = por %p60, %p61
      %p63 = scmp.ne.s32.totalorder %s49, %s50
      %p64 = scmp.eq.s32.totalorder %s21, 1
      %p65 = por %p63, %p64
      %p67 = scmp.ne.s32.totalorder %s50, %s66
      %p68 = scmp.eq.s32.totalorder %s21, 0
      %p69 = por %p67, %p68
      %s71 = sadd.s32 %s70, 1
      %p74 = scmp.eq.s32.totalorder %s15, 1
      %p75 = scmp.ne.s32.totalorder %s70, %s72
      %p76 = scmp.eq.s32.totalorder %s15, 0
      %p77 = por %p75, %p76
      %p78 = scmp.ne.s32.totalorder %s70, %s72
      %p79 = scmp.eq.s32.totalorder %s20, 1
      %p80 = por %p78, %p79
      %p81 = scmp.ne.s32.totalorder %s72, %s73
      %p82 = scmp.eq.s32.totalorder %s20, 0
      %p83 = por %p81, %p82
      %p84 = scmp.ne.s32.totalorder %s72, %s73
      %p85 = scmp.eq.s32.totalorder %s21, 1
      %p86 = por %p84, %p85
      %p88 = scmp.ne.s32.totalorder %s73, %s87
      %p89 = scmp.eq.s32.totalorder %s21, 0
      %p90 = por %p88, %p89
      %s92 = sadd.s32 %s91, 1
      %p95 = scmp.eq.s32.totalorder %s15, 1
      %p96 = scmp.ne.s32.totalorder %s91, %s93
      %p97 = scmp.eq.s32.totalorder %s15, 0
      %p98 = por %p96, %p97
      %p99 = scmp.ne.s32.totalorder %s91, %s93
      %p100 = scmp.eq.s32.totalorder %s20, 1
      %p101 = por %p99, %p100
      %p102 = scmp.ne.s32.totalorder %s93, %s94
      %p103 = scmp.eq.s32.totalorder %s20, 0
      %p104 = por %p102, %p103
      %p105 = scmp.ne.s32.totalorder %s93, %s94
      %p106 = scmp.eq.s32.totalorder %s21, 1
      %p107 = por %p105, %p106
      %p109 = scmp.ne.s32.totalorder %s94, %s108
      %p110 = scmp.eq.s32.totalorder %s21, 0
      %p111 = por %p109, %p110
      %s113 = sadd.s32 %s112, 1
      %p116 = scmp.eq.s32.totalorder %s15, 1
      %p117 = scmp.ne.s32.totalorder %s112, %s114
      %p118 = scmp.eq.s32.totalorder %s15, 0
      %p119 = por %p117, %p118
      %p120 = scmp.ne.s32.totalorder %s112, %s114
      %p121 = scmp.eq.s32.totalorder %s20, 1
      %p122 = por %p120, %p121
      %p123 = scmp.ne.s32.totalorder %s114, %s115
      %p124 = scmp.eq.s32.totalorder %s20, 0
      %p125 = por %p123, %p124
      %p126 = scmp.ne.s32.totalorder %s114, %s115
      %p127 = scmp.eq.s32.totalorder %s21, 1
      %p128 = por %p126, %p127
      %p130 = scmp.ne.s32.totalorder %s115, %s129
      %p131 = scmp.eq.s32.totalorder %s21, 0
      %p132 = por %p130, %p131
      %s133 = ssub.s32 %s15, %s22
      %p134 = scmp.eq.s32.totalorder %s133, 0
      %s136 = sadd.s32 %s135, 1
      %s137 = scalar_select %p134, %s135, %s136
      %p140 = pneg %p134
      %p141 = scmp.eq.s32.totalorder %s15, 1
      %p142 = por %p140, %p141
      %p143 = scmp.ne.s32.totalorder %s135, %s138
      %p144 = scmp.eq.s32.totalorder %s15, 0
      %p145 = por %p143, %p144
      %p146 = scmp.ne.s32.totalorder %s135, %s138
      %p147 = scmp.eq.s32.totalorder %s20, 1
      %p148 = por %p146, %p147
      %p149 = scmp.ne.s32.totalorder %s138, %s139
      %p150 = scmp.eq.s32.totalorder %s20, 0
      %p151 = por %p149, %p150
      %p152 = scmp.ne.s32.totalorder %s138, %s139
      %p153 = scmp.eq.s32.totalorder %s21, 1
      %p154 = por %p152, %p153
      %p156 = scmp.ne.s32.totalorder %s139, %s155
      %p157 = scmp.eq.s32.totalorder %s21, 0
      %p158 = por %p156, %p157
      %p159 = scmp.le.s32.totalorder 1, %s15
      %p160 = scmp.lt.s32.totalorder %s15, 3
      %p161 = pnand %p159, %p160
      %p162 = pneg %p161
      // Predicated region
      $region9: #{aa_kernel_forward.1} parent=5 // pred_check
        _
      $region10: #{aa_kernel_forward.1} parent=5 // pred_check_branch
        %164 = sbr.rel (%p161) target = $region12
      $region11: #{aa_kernel_forward.1} parent=5 // pred_region
        %s165 = ssub.s32 %s15, 1
        // Predicated region
        $region13: #{aa_kernel_forward.1} parent=11 // pred_check
          %p166 = pneg %p36
        $region14: #{aa_kernel_forward.1} parent=11 // pred_check_branch
          %168 = sbr.rel (%p166) target = $region16
        $region15: #{aa_kernel_forward.1} parent=11 // pred_region
          %s170 = ssub.s32 16, 16
          %171 = vsyncadd [#allocation4], %s170
          %s173 = sshll.u32 %s0, 4
          %s174 = int_to_ptr.vmem [resolvable:$true] %s173
          %176 = dma.vmem_to_smem %s174, 16, [#allocation2], [#allocation4]
        $region16: #{aa_kernel_forward.1} parent=11 // pred_fallthru
          _
        // Predicated region
        $region17: #{aa_kernel_forward.1} parent=11 // pred_check
          %p177 = pneg %p83
        $region18: #{aa_kernel_forward.1} parent=11 // pred_check_branch
          %179 = sbr.rel (%p177) target = $region20
        $region19: #{aa_kernel_forward.1} parent=11 // pred_region
          _
        $region20: #{aa_kernel_forward.1} parent=11 // pred_fallthru
          _
        // Predicated region
        $region21: #{aa_kernel_forward.1} parent=11 // pred_check
          %p180 = pneg %p104
        $region22: #{aa_kernel_forward.1} parent=11 // pred_check_branch
          %182 = sbr.rel (%p180) target = $region24
        $region23: #{aa_kernel_forward.1} parent=11 // pred_region
          _
        $region24: #{aa_kernel_forward.1} parent=11 // pred_fallthru
          _
        // Predicated region
        $region25: #{aa_kernel_forward.1} parent=11 // pred_check
          %p183 = pneg %p125
        $region26: #{aa_kernel_forward.1} parent=11 // pred_check_branch
          %185 = sbr.rel (%p183) target = $region28
        $region27: #{aa_kernel_forward.1} parent=11 // pred_region
          _
        $region28: #{aa_kernel_forward.1} parent=11 // pred_fallthru
          _
      $region12: #{aa_kernel_forward.1} parent=5 // pred_fallthru
        _
      %p186 = scmp.lt.s32.totalorder %s15, 2
      // Predicated region
      $region29: #{aa_kernel_forward.1} parent=5 // pred_check
        %p187 = pneg %p186
      $region30: #{aa_kernel_forward.1} parent=5 // pred_check_branch
        %189 = sbr.rel (%p187) target = $region32
      $region31: #{aa_kernel_forward.1} parent=5 // pred_region
        // Predicated region
        $region33: #{aa_kernel_forward.1} parent=31 // pred_check
          %p190 = pneg %p56
        $region34: #{aa_kernel_forward.1} parent=31 // pred_check_branch
          %192 = sbr.rel (%p190) target = $region36
        $region35: #{aa_kernel_forward.1} parent=31 // pred_region
          %p193 = scmp.lt.s32.totalorder %s15, 1
          %s194 = scalar_select %p193, %s15, 1
          %s195 = smul.addr %s194, 32
          %s196 = smul.addr %s195, 4
          %s197 = scalar_lea.vmem %s1, %s196
        $region36: #{aa_kernel_forward.1} parent=31 // pred_fallthru
          _
      $region32: #{aa_kernel_forward.1} parent=5 // pred_fallthru
        _
      %p198 = scmp.le.s32.totalorder 1, %s15
      %p199 = scmp.lt.s32.totalorder %s15, 3
      %p200 = pnand %p198, %p199
      %p201 = pneg %p200
      // Predicated region
      $region37: #{aa_kernel_forward.1} parent=5 // pred_check
        _
      $region38: #{aa_kernel_forward.1} parent=5 // pred_check_branch
        %203 = sbr.rel (%p200) target = $region40
      $region39: #{aa_kernel_forward.1} parent=5 // pred_region
        %s204 = ssub.s32 %s15, 1
        // Predicated region
        $region41: #{aa_kernel_forward.1} parent=39 // pred_check
          %p205 = pneg %p36
        $region42: #{aa_kernel_forward.1} parent=39 // pred_check_branch
          %207 = sbr.rel (%p205) target = $region44
        $region43: #{aa_kernel_forward.1} parent=39 // pred_region
          %208 = dma.done [#allocation4], 16
        $region44: #{aa_kernel_forward.1} parent=39 // pred_fallthru
          _
        %209 = sfence
        %p210 = pneg %p36
        %p211 = pneg %p33
        %p212 = scmp.lt.s32.totalorder %s20, 1
        %s213 = scalar_select %p212, %s20, 1
        %s214 = smul.addr %s213, 32
        %s215 = smul.addr %s214, 4
        %s216 = scalar_lea.vmem %s1, %s215
        %p217 = pneg %p62
        %p218 = pneg %p59
        %p219 = pneg %p83
        %p220 = pneg %p80
        %p221 = pneg %p104
        %p222 = pneg %p101
        %p223 = pneg %p125
        %p224 = pneg %p122
        %p225 = pneg %p151
        %p226 = pneg %p148
        %s227 = sand.u32 %s138, 1
        %s228 = scalar_lea.sflag [#allocation3], %s227
        %s229 = sand.u32 %s138, 1
        %s230 = smul.addr %s229, 256
        %s231 = scalar_lea.vmem [#allocation5], %s230
        %p232 = scmp.lt.s32.totalorder %s20, 1
        %s233 = scalar_select %p232, %s20, 1
        %s234 = smul.addr %s233, 32
        %s235 = smul.addr %s234, 4
        %s236 = scalar_lea.vmem %s1, %s235
        %v238 = vld [vmem:[%s236] sm:$0xf]
        %v239 = vld [vmem:[%s236 + $0x4] sm:$0xf]
        %v240 = vld [vmem:[%s236 + $0x8] sm:$0xf]
        %v241 = vld [vmem:[%s236 + $0xc] sm:$0xf]
        %v242 = vld [vmem:[%s236 + $0x10] sm:$0xf]
        %v243 = vld [vmem:[%s236 + $0x14] sm:$0xf]
        %v244 = vld [vmem:[%s236 + $0x18] sm:$0xf]
        %v245 = vld [vmem:[%s236 + $0x1c] sm:$0xf]
        %v246 = vld [vmem:[%s236 + $0x20] sm:$0xf]
        %v247 = vld [vmem:[%s236 + $0x24] sm:$0xf]
        %v248 = vld [vmem:[%s236 + $0x28] sm:$0xf]
        %v249 = vld [vmem:[%s236 + $0x2c] sm:$0xf]
        %v250 = vld [vmem:[%s236 + $0x30] sm:$0xf]
        %v251 = vld [vmem:[%s236 + $0x34] sm:$0xf]
        %v252 = vld [vmem:[%s236 + $0x38] sm:$0xf]
        %v253 = vld [vmem:[%s236 + $0x3c] sm:$0xf]
        %v254 = vld [vmem:[%s236 + $0x40] sm:$0xf]
        %v255 = vld [vmem:[%s236 + $0x44] sm:$0xf]
        %v256 = vld [vmem:[%s236 + $0x48] sm:$0xf]
        %v257 = vld [vmem:[%s236 + $0x4c] sm:$0xf]
        %v258 = vld [vmem:[%s236 + $0x50] sm:$0xf]
        %v259 = vld [vmem:[%s236 + $0x54] sm:$0xf]
        %v260 = vld [vmem:[%s236 + $0x58] sm:$0xf]
        %v261 = vld [vmem:[%s236 + $0x5c] sm:$0xf]
        %v262 = vld [vmem:[%s236 + $0x60] sm:$0xf]
        %v263 = vld [vmem:[%s236 + $0x64] sm:$0xf]
        %v264 = vld [vmem:[%s236 + $0x68] sm:$0xf]
        %v265 = vld [vmem:[%s236 + $0x6c] sm:$0xf]
        %v266 = vld [vmem:[%s236 + $0x70] sm:$0xf]
        %v267 = vld [vmem:[%s236 + $0x74] sm:$0xf]
        %v268 = vld [vmem:[%s236 + $0x78] sm:$0xf]
        %v269 = vld [vmem:[%s236 + $0x7c] sm:$0xf]
        %v270 = vld [vmem:[%s2] sm:$0xf]
        %v271 = vld [vmem:[%s2 + $0x4] sm:$0xf]
        %v272 = vld [vmem:[%s2 + $0x8] sm:$0xf]
        %v273 = vld [vmem:[%s2 + $0xc] sm:$0xf]
        %v274 = vld [vmem:[%s2 + $0x10] sm:$0x3]
        %v277 = vunpack.c.l.b16 %v238
        %v278 = vunpack.c.l.b16 %v239
        %v279 = vpack.c.b16 %v278, %v277
        %v285 = vunpack.c.l.b16 %v270
        %v286 = vunpack.c.l.b16 %v271
        %v287 = vunpack.c.l.b16 %v272
        %v288 = vunpack.c.l.b16 %v273
        %v289 = vunpack.c.l.b16 %v274
        %v290 = vpack.c.b16 %v286, %v285
        %v291 = vpack.c.b16 %v288, %v287
        %v292 = vpack.c.b16 %v289, %v289
        %vm295 = vcmask 293888
        %v297 = vsel %vm295, %v279, 0
        %vm299 = vcmask 1041408
        %v301 = vsel %vm299, %v292, 0
        %303 = vmatprep.subr.bf16.mxu0 0
        %304 = vmatpush1.bf16.msra.mxu0 %v290
        %305 = vmatprep.subr.bf16.mxu0 0
        %306 = vmatpush1.bf16.msra.mxu0 %v291
        %307 = vmatprep.subr.bf16.mxu0 0
        %308 = vmatpush1.bf16.msra.mxu0 %v301
        %309 = vmatprep.subr.bf16.mxu0 0
        %310 = vmatpush1.bf16.msra.mxu0 0
        %311 = vmatprep.subr.bf16.mxu0 0
        %312 = vmatpush1.bf16.msra.mxu0 0
        %313 = vmatprep.subr.bf16.mxu0 0
        %314 = vmatpush1.bf16.msra.mxu0 0
        %315 = vmatprep.subr.bf16.mxu0 0
        %316 = vmatpush1.bf16.msra.mxu0 0
        %317 = vmatprep.subr.bf16.mxu0 0
        %318 = vmatpush1.bf16.msra.mxu0 0
        %319 = vmatprep.subr.bf16.mxu0 0
        %320 = vmatpush1.bf16.msra.mxu0 0
        %321 = vmatprep.subr.bf16.mxu0 0
        %322 = vmatpush1.bf16.msra.mxu0 0
        %323 = vmatprep.subr.bf16.mxu0 0
        %324 = vmatpush1.bf16.msra.mxu0 0
        %325 = vmatprep.subr.bf16.mxu0 0
        %326 = vmatpush1.bf16.msra.mxu0 0
        %327 = vmatprep.subr.bf16.mxu0 0
        %328 = vmatpush1.bf16.msra.mxu0 0
        %329 = vmatprep.subr.bf16.mxu0 0
        %330 = vmatpush1.bf16.msra.mxu0 0
        %331 = vmatprep.subr.bf16.mxu0 0
        %332 = vmatpush1.bf16.msra.mxu0 0
        %333 = vmatprep.subr.bf16.mxu0 0
        %334 = vmatpush1.bf16.msra.mxu0 0
        %335 = vmatprep.mubr.bf16.mxu0 0
        %336 = vmatmul.mubr.bf16.gmra.mrb[0].mxu0 %v297
        %v337 = vpop.f32.mrb[0].mxu0
        %v338 = vadd.f32 0.0, %v337
        %v339 = vpop.f32.mrb[0].mxu0
        %v340 = vpop.f32.mrb[0].mxu0
        %v341 = vadd.f32 0.0, %v340
        %v342 = vpop.f32.mrb[0].mxu0
        %343 = vdwg.mxu0
        %v346 = vunpack.c.l.b16 %v240
        %v347 = vunpack.c.l.b16 %v241
        %v348 = vpack.c.b16 %v347, %v346
        %v350 = vsel %vm295, %v348, 0
        %352 = vmatprep.subr.bf16.mxu0 0
        %353 = vmatpush1.bf16.msra.mxu0 %v290
        %354 = vmatprep.subr.bf16.mxu0 0
        %355 = vmatpush1.bf16.msra.mxu0 %v291
        %356 = vmatprep.subr.bf16.mxu0 0
        %357 = vmatpush1.bf16.msra.mxu0 %v301
        %358 = vmatprep.subr.bf16.mxu0 0
        %359 = vmatpush1.bf16.msra.mxu0 0
        %360 = vmatprep.subr.bf16.mxu0 0
        %361 = vmatpush1.bf16.msra.mxu0 0
        %362 = vmatprep.subr.bf16.mxu0 0
        %363 = vmatpush1.bf16.msra.mxu0 0
        %364 = vmatprep.subr.bf16.mxu0 0
        %365 = vmatpush1.bf16.msra.mxu0 0
        %366 = vmatprep.subr.bf16.mxu0 0
        %367 = vmatpush1.bf16.msra.mxu0 0
        %368 = vmatprep.subr.bf16.mxu0 0
        %369 = vmatpush1.bf16.msra.mxu0 0
        %370 = vmatprep.subr.bf16.mxu0 0
        %371 = vmatpush1.bf16.msra.mxu0 0
        %372 = vmatprep.subr.bf16.mxu0 0
        %373 = vmatpush1.bf16.msra.mxu0 0
        %374 = vmatprep.subr.bf16.mxu0 0
        %375 = vmatpush1.bf16.msra.mxu0 0
        %376 = vmatprep.subr.bf16.mxu0 0
        %377 = vmatpush1.bf16.msra.mxu0 0
        %378 = vmatprep.subr.bf16.mxu0 0
        %379 = vmatpush1.bf16.msra.mxu0 0
        %380 = vmatprep.subr.bf16.mxu0 0
        %381 = vmatpush1.bf16.msra.mxu0 0
        %382 = vmatprep.subr.bf16.mxu0 0
        %383 = vmatpush1.bf16.msra.mxu0 0
        %384 = vmatprep.mubr.bf16.mxu0 0
        %385 = vmatmul.mubr.bf16.gmra.mrb[0].mxu0 %v350
        %v386 = vpop.f32.mrb[0].mxu0
        %v387 = vadd.f32 0.0, %v386
        %v388 = vpop.f32.mrb[0].mxu0
        %v389 = vpop.f32.mrb[0].mxu0
        %v390 = vadd.f32 0.0, %v389
        %v391 = vpop.f32.mrb[0].mxu0
        %392 = vdwg.mxu0
        %v395 = vunpack.c.l.b16 %v242
        %v396 = vunpack.c.l.b16 %v243
        %v397 = vpack.c.b16 %v396, %v395
        %v399 = vsel %vm295, %v397, 0
        %401 = vmatprep.subr.bf16.mxu0 0
        %402 = vmatpush1.bf16.msra.mxu0 %v290
        %403 = vmatprep.subr.bf16.mxu0 0
        %404 = vmatpush1.bf16.msra.mxu0 %v291
        %405 = vmatprep.subr.bf16.mxu0 0
        %406 = vmatpush1.bf16.msra.mxu0 %v301
        %407 = vmatprep.subr.bf16.mxu0 0
        %408 = vmatpush1.bf16.msra.mxu0 0
        %409 = vmatprep.subr.bf16.mxu0 0
        %410 = vmatpush1.bf16.msra.mxu0 0
        %411 = vmatprep.subr.bf16.mxu0 0
        %412 = vmatpush1.bf16.msra.mxu0 0
        %413 = vmatprep.subr.bf16.mxu0 0
        %414 = vmatpush1.bf16.msra.mxu0 0
        %415 = vmatprep.subr.bf16.mxu0 0
        %416 = vmatpush1.bf16.msra.mxu0 0
        %417 = vmatprep.subr.bf16.mxu0 0
        %418 = vmatpush1.bf16.msra.mxu0 0
        %419 = vmatprep.subr.bf16.mxu0 0
        %420 = vmatpush1.bf16.msra.mxu0 0
        %421 = vmatprep.subr.bf16.mxu0 0
        %422 = vmatpush1.bf16.msra.mxu0 0
        %423 = vmatprep.subr.bf16.mxu0 0
        %424 = vmatpush1.bf16.msra.mxu0 0
        %425 = vmatprep.subr.bf16.mxu0 0
        %426 = vmatpush1.bf16.msra.mxu0 0
        %427 = vmatprep.subr.bf16.mxu0 0
        %428 = vmatpush1.bf16.msra.mxu0 0
        %429 = vmatprep.subr.bf16.mxu0 0
        %430 = vmatpush1.bf16.msra.mxu0 0
        %431 = vmatprep.subr.bf16.mxu0 0
        %432 = vmatpush1.bf16.msra.mxu0 0
        %433 = vmatprep.mubr.bf16.mxu0 0
        %434 = vmatmul.mubr.bf16.gmra.mrb[0].mxu0 %v399
        %v435 = vpop.f32.mrb[0].mxu0
        %v436 = vadd.f32 0.0, %v435
        %v437 = vpop.f32.mrb[0].mxu0
        %v438 = vpop.f32.mrb[0].mxu0
        %v439 = vadd.f32 0.0, %v438
        %v440 = vpop.f32.mrb[0].mxu0
        %441 = vdwg.mxu0
        %v444 = vunpack.c.l.b16 %v244
        %v445 = vunpack.c.l.b16 %v245
        %v446 = vpack.c.b16 %v445, %v444
        %v448 = vsel %vm295, %v446, 0
        %450 = vmatprep.subr.bf16.mxu0 0
        %451 = vmatpush1.bf16.msra.mxu0 %v290
        %452 = vmatprep.subr.bf16.mxu0 0
        %453 = vmatpush1.bf16.msra.mxu0 %v291
        %454 = vmatprep.subr.bf16.mxu0 0
        %455 = vmatpush1.bf16.msra.mxu0 %v301
        %456 = vmatprep.subr.bf16.mxu0 0
        %457 = vmatpush1.bf16.msra.mxu0 0
        %458 = vmatprep.subr.bf16.mxu0 0
        %459 = vmatpush1.bf16.msra.mxu0 0
        %460 = vmatprep.subr.bf16.mxu0 0
        %461 = vmatpush1.bf16.msra.mxu0 0
        %462 = vmatprep.subr.bf16.mxu0 0
        %463 = vmatpush1.bf16.msra.mxu0 0
        %464 = vmatprep.subr.bf16.mxu0 0
        %465 = vmatpush1.bf16.msra.mxu0 0
        %466 = vmatprep.subr.bf16.mxu0 0
        %467 = vmatpush1.bf16.msra.mxu0 0
        %468 = vmatprep.subr.bf16.mxu0 0
        %469 = vmatpush1.bf16.msra.mxu0 0
        %470 = vmatprep.subr.bf16.mxu0 0
        %471 = vmatpush1.bf16.msra.mxu0 0
        %472 = vmatprep.subr.bf16.mxu0 0
        %473 = vmatpush1.bf16.msra.mxu0 0
        %474 = vmatprep.subr.bf16.mxu0 0
        %475 = vmatpush1.bf16.msra.mxu0 0
        %476 = vmatprep.subr.bf16.mxu0 0
        %477 = vmatpush1.bf16.msra.mxu0 0
        %478 = vmatprep.subr.bf16.mxu0 0
        %479 = vmatpush1.bf16.msra.mxu0 0
        %480 = vmatprep.subr.bf16.mxu0 0
        %481 = vmatpush1.bf16.msra.mxu0 0
        %482 = vmatprep.mubr.bf16.mxu0 0
        %483 = vmatmul.mubr.bf16.gmra.mrb[0].mxu0 %v448
        %v484 = vpop.f32.mrb[0].mxu0
        %v485 = vadd.f32 0.0, %v484
        %v486 = vpop.f32.mrb[0].mxu0
        %v487 = vpop.f32.mrb[0].mxu0
        %v488 = vadd.f32 0.0, %v487
        %v489 = vpop.f32.mrb[0].mxu0
        %490 = vdwg.mxu0
        %v493 = vunpack.c.l.b16 %v246
        %v494 = vunpack.c.l.b16 %v247
        %v495 = vpack.c.b16 %v494, %v493
        %v497 = vsel %vm295, %v495, 0
        %499 = vmatprep.subr.bf16.mxu0 0
        %500 = vmatpush1.bf16.msra.mxu0 %v290
        %501 = vmatprep.subr.bf16.mxu0 0
        %502 = vmatpush1.bf16.msra.mxu0 %v291
        %503 = vmatprep.subr.bf16.mxu0 0
        %504 = vmatpush1.bf16.msra.mxu0 %v301
        %505 = vmatprep.subr.bf16.mxu0 0
        %506 = vmatpush1.bf16.msra.mxu0 0
        %507 = vmatprep.subr.bf16.mxu0 0
        %508 = vmatpush1.bf16.msra.mxu0 0
        %509 = vmatprep.subr.bf16.mxu0 0
        %510 = vmatpush1.bf16.msra.mxu0 0
        %511 = vmatprep.subr.bf16.mxu0 0
        %512 = vmatpush1.bf16.msra.mxu0 0
        %513 = vmatprep.subr.bf16.mxu0 0
        %514 = vmatpush1.bf16.msra.mxu0 0
        %515 = vmatprep.subr.bf16.mxu0 0
        %516 = vmatpush1.bf16.msra.mxu0 0
        %517 = vmatprep.subr.bf16.mxu0 0
        %518 = vmatpush1.bf16.msra.mxu0 0
        %519 = vmatprep.subr.bf16.mxu0 0
        %520 = vmatpush1.bf16.msra.mxu0 0
        %521 = vmatprep.subr.bf16.mxu0 0
        %522 = vmatpush1.bf16.msra.mxu0 0
        %523 = vmatprep.subr.bf16.mxu0 0
        %524 = vmatpush1.bf16.msra.mxu0 0
        %525 = vmatprep.subr.bf16.mxu0 0
        %526 = vmatpush1.bf16.msra.mxu0 0
        %527 = vmatprep.subr.bf16.mxu0 0
        %528 = vmatpush1.bf16.msra.mxu0 0
        %529 = vmatprep.subr.bf16.mxu0 0
        %530 = vmatpush1.bf16.msra.mxu0 0
        %531 = vmatprep.mubr.bf16.mxu0 0
        %532 = vmatmul.mubr.bf16.gmra.mrb[0].mxu0 %v497
        %v533 = vpop.f32.mrb[0].mxu0
        %v534 = vadd.f32 0.0, %v533
        %v535 = vpop.f32.mrb[0].mxu0
        %v536 = vpop.f32.mrb[0].mxu0
        %v537 = vadd.f32 0.0, %v536
        %v538 = vpop.f32.mrb[0].mxu0
        %539 = vdwg.mxu0
        %v542 = vunpack.c.l.b16 %v248
        %v543 = vunpack.c.l.b16 %v249
        %v544 = vpack.c.b16 %v543, %v542
        %v546 = vsel %vm295, %v544, 0
        %548 = vmatprep.subr.bf16.mxu0 0
        %549 = vmatpush1.bf16.msra.mxu0 %v290
        %550 = vmatprep.subr.bf16.mxu0 0
        %551 = vmatpush1.bf16.msra.mxu0 %v291
        %552 = vmatprep.subr.bf16.mxu0 0
        %553 = vmatpush1.bf16.msra.mxu0 %v301
        %554 = vmatprep.subr.bf16.mxu0 0
        %555 = vmatpush1.bf16.msra.mxu0 0
        %556 = vmatprep.subr.bf16.mxu0 0
        %557 = vmatpush1.bf16.msra.mxu0 0
        %558 = vmatprep.subr.bf16.mxu0 0
        %559 = vmatpush1.bf16.msra.mxu0 0
        %560 = vmatprep.subr.bf16.mxu0 0
        %561 = vmatpush1.bf16.msra.mxu0 0
        %562 = vmatprep.subr.bf16.mxu0 0
        %563 = vmatpush1.bf16.msra.mxu0 0
        %564 = vmatprep.subr.bf16.mxu0 0
        %565 = vmatpush1.bf16.msra.mxu0 0
        %566 = vmatprep.subr.bf16.mxu0 0
        %567 = vmatpush1.bf16.msra.mxu0 0
        %568 = vmatprep.subr.bf16.mxu0 0
        %569 = vmatpush1.bf16.msra.mxu0 0
        %570 = vmatprep.subr.bf16.mxu0 0
        %571 = vmatpush1.bf16.msra.mxu0 0
        %572 = vmatprep.subr.bf16.mxu0 0
        %573 = vmatpush1.bf16.msra.mxu0 0
        %574 = vmatprep.subr.bf16.mxu0 0
        %575 = vmatpush1.bf16.msra.mxu0 0
        %576 = vmatprep.subr.bf16.mxu0 0
        %577 = vmatpush1.bf16.msra.mxu0 0
        %578 = vmatprep.subr.bf16.mxu0 0
        %579 = vmatpush1.bf16.msra.mxu0 0
        %580 = vmatprep.mubr.bf16.mxu0 0
        %581 = vmatmul.mubr.bf16.gmra.mrb[0].mxu0 %v546
        %v582 = vpop.f32.mrb[0].mxu0
        %v583 = vadd.f32 0.0, %v582
        %v584 = vpop.f32.mrb[0].mxu0
        %v585 = vpop.f32.mrb[0].mxu0
        %v586 = vadd.f32 0.0, %v585
        %v587 = vpop.f32.mrb[0].mxu0
        %588 = vdwg.mxu0
        %v591 = vunpack.c.l.b16 %v250
        %v592 = vunpack.c.l.b16 %v251
        %v593 = vpack.c.b16 %v592, %v591
        %v595 = vsel %vm295, %v593, 0
        %597 = vmatprep.subr.bf16.mxu0 0
        %598 = vmatpush1.bf16.msra.mxu0 %v290
        %599 = vmatprep.subr.bf16.mxu0 0
        %600 = vmatpush1.bf16.msra.mxu0 %v291
        %601 = vmatprep.subr.bf16.mxu0 0
        %602 = vmatpush1.bf16.msra.mxu0 %v301
        %603 = vmatprep.subr.bf16.mxu0 0
        %604 = vmatpush1.bf16.msra.mxu0 0
        %605 = vmatprep.subr.bf16.mxu0 0
        %606 = vmatpush1.bf16.msra.mxu0 0
        %607 = vmatprep.subr.bf16.mxu0 0
        %608 = vmatpush1.bf16.msra.mxu0 0
        %609 = vmatprep.subr.bf16.mxu0 0
        %610 = vmatpush1.bf16.msra.mxu0 0
        %611 = vmatprep.subr.bf16.mxu0 0
        %612 = vmatpush1.bf16.msra.mxu0 0
        %613 = vmatprep.subr.bf16.mxu0 0
        %614 = vmatpush1.bf16.msra.mxu0 0
        %615 = vmatprep.subr.bf16.mxu0 0
        %616 = vmatpush1.bf16.msra.mxu0 0
        %617 = vmatprep.subr.bf16.mxu0 0
        %618 = vmatpush1.bf16.msra.mxu0 0
        %619 = vmatprep.subr.bf16.mxu0 0
        %620 = vmatpush1.bf16.msra.mxu0 0
        %621 = vmatprep.subr.bf16.mxu0 0
        %622 = vmatpush1.bf16.msra.mxu0 0
        %623 = vmatprep.subr.bf16.mxu0 0
        %624 = vmatpush1.bf16.msra.mxu0 0
        %625 = vmatprep.subr.bf16.mxu0 0
        %626 = vmatpush1.bf16.msra.mxu0 0
        %627 = vmatprep.subr.bf16.mxu0 0
        %628 = vmatpush1.bf16.msra.mxu0 0
        %629 = vmatprep.mubr.bf16.mxu0 0
        %630 = vmatmul.mubr.bf16.gmra.mrb[0].mxu0 %v595
        %v631 = vpop.f32.mrb[0].mxu0
        %v632 = vadd.f32 0.0, %v631
        %v633 = vpop.f32.mrb[0].mxu0
        %v634 = vpop.f32.mrb[0].mxu0
        %v635 = vadd.f32 0.0, %v634
        %v636 = vpop.f32.mrb[0].mxu0
        %637 = vdwg.mxu0
        %v640 = vunpack.c.l.b16 %v252
        %v641 = vunpack.c.l.b16 %v253
        %v642 = vpack.c.b16 %v641, %v640
        %v644 = vsel %vm295, %v642, 0
        %646 = vmatprep.subr.bf16.mxu0 0
        %647 = vmatpush1.bf16.msra.mxu0 %v290
        %648 = vmatprep.subr.bf16.mxu0 0
        %649 = vmatpush1.bf16.msra.mxu0 %v291
        %650 = vmatprep.subr.bf16.mxu0 0
        %651 = vmatpush1.bf16.msra.mxu0 %v301
        %652 = vmatprep.subr.bf16.mxu0 0
        %653 = vmatpush1.bf16.msra.mxu0 0
        %654 = vmatprep.subr.bf16.mxu0 0
        %655 = vmatpush1.bf16.msra.mxu0 0
        %656 = vmatprep.subr.bf16.mxu0 0
        %657 = vmatpush1.bf16.msra.mxu0 0
        %658 = vmatprep.subr.bf16.mxu0 0
        %659 = vmatpush1.bf16.msra.mxu0 0
        %660 = vmatprep.subr.bf16.mxu0 0
        %661 = vmatpush1.bf16.msra.mxu0 0
        %662 = vmatprep.subr.bf16.mxu0 0
        %663 = vmatpush1.bf16.msra.mxu0 0
        %664 = vmatprep.subr.bf16.mxu0 0
        %665 = vmatpush1.bf16.msra.mxu0 0
        %666 = vmatprep.subr.bf16.mxu0 0
        %667 = vmatpush1.bf16.msra.mxu0 0
        %668 = vmatprep.subr.bf16.mxu0 0
        %669 = vmatpush1.bf16.msra.mxu0 0
        %670 = vmatprep.subr.bf16.mxu0 0
        %671 = vmatpush1.bf16.msra.mxu0 0
        %672 = vmatprep.subr.bf16.mxu0 0
        %673 = vmatpush1.bf16.msra.mxu0 0
        %674 = vmatprep.subr.bf16.mxu0 0
        %675 = vmatpush1.bf16.msra.mxu0 0
        %676 = vmatprep.subr.bf16.mxu0 0
        %677 = vmatpush1.bf16.msra.mxu0 0
        %678 = vmatprep.mubr.bf16.mxu0 0
        %679 = vmatmul.mubr.bf16.gmra.mrb[0].mxu0 %v644
        %v680 = vpop.f32.mrb[0].mxu0
        %v681 = vadd.f32 0.0, %v680
        %v682 = vpop.f32.mrb[0].mxu0
        %v683 = vpop.f32.mrb[0].mxu0
        %v684 = vadd.f32 0.0, %v683
        %v685 = vpop.f32.mrb[0].mxu0
        %686 = vdwg.mxu0
        %v689 = vunpack.c.l.b16 %v254
        %v690 = vunpack.c.l.b16 %v255
        %v691 = vpack.c.b16 %v690, %v689
        %v693 = vsel %vm295, %v691, 0
        %695 = vmatprep.subr.bf16.mxu0 0
        %696 = vmatpush1.bf16.msra.mxu0 %v290
        %697 = vmatprep.subr.bf16.mxu0 0
        %698 = vmatpush1.bf16.msra.mxu0 %v291
        %699 = vmatprep.subr.bf16.mxu0 0
        %700 = vmatpush1.bf16.msra.mxu0 %v301
        %701 = vmatprep.subr.bf16.mxu0 0
        %702 = vmatpush1.bf16.msra.mxu0 0
        %703 = vmatprep.subr.bf16.mxu0 0
        %704 = vmatpush1.bf16.msra.mxu0 0
        %705 = vmatprep.subr.bf16.mxu0 0
        %706 = vmatpush1.bf16.msra.mxu0 0
        %707 = vmatprep.subr.bf16.mxu0 0
        %708 = vmatpush1.bf16.msra.mxu0 0
        %709 = vmatprep.subr.bf16.mxu0 0
        %710 = vmatpush1.bf16.msra.mxu0 0
        %711 = vmatprep.subr.bf16.mxu0 0
        %712 = vmatpush1.bf16.msra.mxu0 0
        %713 = vmatprep.subr.bf16.mxu0 0
        %714 = vmatpush1.bf16.msra.mxu0 0
        %715 = vmatprep.subr.bf16.mxu0 0
        %716 = vmatpush1.bf16.msra.mxu0 0
        %717 = vmatprep.subr.bf16.mxu0 0
        %718 = vmatpush1.bf16.msra.mxu0 0
        %719 = vmatprep.subr.bf16.mxu0 0
        %720 = vmatpush1.bf16.msra.mxu0 0
        %721 = vmatprep.subr.bf16.mxu0 0
        %722 = vmatpush1.bf16.msra.mxu0 0
        %723 = vmatprep.subr.bf16.mxu0 0
        %724 = vmatpush1.bf16.msra.mxu0 0
        %725 = vmatprep.subr.bf16.mxu0 0
        %726 = vmatpush1.bf16.msra.mxu0 0
        %727 = vmatprep.mubr.bf16.mxu0 0
        %728 = vmatmul.mubr.bf16.gmra.mrb[0].mxu0 %v693
        %v729 = vpop.f32.mrb[0].mxu0
        %v730 = vadd.f32 0.0, %v729
        %v731 = vpop.f32.mrb[0].mxu0
        %v732 = vpop.f32.mrb[0].mxu0
        %v733 = vadd.f32 0.0, %v732
        %v734 = vpop.f32.mrb[0].mxu0
        %735 = vdwg.mxu0
        %v738 = vunpack.c.l.b16 %v256
        %v739 = vunpack.c.l.b16 %v257
        %v740 = vpack.c.b16 %v739, %v738
        %v742 = vsel %vm295, %v740, 0
        %744 = vmatprep.subr.bf16.mxu0 0
        %745 = vmatpush1.bf16.msra.mxu0 %v290
        %746 = vmatprep.subr.bf16.mxu0 0
        %747 = vmatpush1.bf16.msra.mxu0 %v291
        %748 = vmatprep.subr.bf16.mxu0 0
        %749 = vmatpush1.bf16.msra.mxu0 %v301
        %750 = vmatprep.subr.bf16.mxu0 0
        %751 = vmatpush1.bf16.msra.mxu0 0
        %752 = vmatprep.subr.bf16.mxu0 0
        %753 = vmatpush1.bf16.msra.mxu0 0
        %754 = vmatprep.subr.bf16.mxu0 0
        %755 = vmatpush1.bf16.msra.mxu0 0
        %756 = vmatprep.subr.bf16.mxu0 0
        %757 = vmatpush1.bf16.msra.mxu0 0
        %758 = vmatprep.subr.bf16.mxu0 0
        %759 = vmatpush1.bf16.msra.mxu0 0
        %760 = vmatprep.subr.bf16.mxu0 0
        %761 = vmatpush1.bf16.msra.mxu0 0
        %762 = vmatprep.subr.bf16.mxu0 0
        %763 = vmatpush1.bf16.msra.mxu0 0
        %764 = vmatprep.subr.bf16.mxu0 0
        %765 = vmatpush1.bf16.msra.mxu0 0
        %766 = vmatprep.subr.bf16.mxu0 0
        %767 = vmatpush1.bf16.msra.mxu0 0
        %768 = vmatprep.subr.bf16.mxu0 0
        %769 = vmatpush1.bf16.msra.mxu0 0
        %770 = vmatprep.subr.bf16.mxu0 0
        %771 = vmatpush1.bf16.msra.mxu0 0
        %772 = vmatprep.subr.bf16.mxu0 0
        %773 = vmatpush1.bf16.msra.mxu0 0
        %774 = vmatprep.subr.bf16.mxu0 0
        %775 = vmatpush1.bf16.msra.mxu0 0
        %776 = vmatprep.mubr.bf16.mxu0 0
        %777 = vmatmul.mubr.bf16.gmra.mrb[0].mxu0 %v742
        %v778 = vpop.f32.mrb[0].mxu0
        %v779 = vadd.f32 0.0, %v778
        %v780 = vpop.f32.mrb[0].mxu0
        %v781 = vpop.f32.mrb[0].mxu0
        %v782 = vadd.f32 0.0, %v781
        %v783 = vpop.f32.mrb[0].mxu0
        %784 = vdwg.mxu0
        %v787 = vunpack.c.l.b16 %v258
        %v788 = vunpack.c.l.b16 %v259
        %v789 = vpack.c.b16 %v788, %v787
        %v791 = vsel %vm295, %v789, 0
        %793 = vmatprep.subr.bf16.mxu0 0
        %794 = vmatpush1.bf16.msra.mxu0 %v290
        %795 = vmatprep.subr.bf16.mxu0 0
        %796 = vmatpush1.bf16.msra.mxu0 %v291
        %797 = vmatprep.subr.bf16.mxu0 0
        %798 = vmatpush1.bf16.msra.mxu0 %v301
        %799 = vmatprep.subr.bf16.mxu0 0
        %800 = vmatpush1.bf16.msra.mxu0 0
        %801 = vmatprep.subr.bf16.mxu0 0
        %802 = vmatpush1.bf16.msra.mxu0 0
        %803 = vmatprep.subr.bf16.mxu0 0
        %804 = vmatpush1.bf16.msra.mxu0 0
        %805 = vmatprep.subr.bf16.mxu0 0
        %806 = vmatpush1.bf16.msra.mxu0 0
        %807 = vmatprep.subr.bf16.mxu0 0
        %808 = vmatpush1.bf16.msra.mxu0 0
        %809 = vmatprep.subr.bf16.mxu0 0
        %810 = vmatpush1.bf16.msra.mxu0 0
        %811 = vmatprep.subr.bf16.mxu0 0
        %812 = vmatpush1.bf16.msra.mxu0 0
        %813 = vmatprep.subr.bf16.mxu0 0
        %814 = vmatpush1.bf16.msra.mxu0 0
        %815 = vmatprep.subr.bf16.mxu0 0
        %816 = vmatpush1.bf16.msra.mxu0 0
        %817 = vmatprep.subr.bf16.mxu0 0
        %818 = vmatpush1.bf16.msra.mxu0 0
        %819 = vmatprep.subr.bf16.mxu0 0
        %820 = vmatpush1.bf16.msra.mxu0 0
        %821 = vmatprep.subr.bf16.mxu0 0
        %822 = vmatpush1.bf16.msra.mxu0 0
        %823 = vmatprep.subr.bf16.mxu0 0
        %824 = vmatpush1.bf16.msra.mxu0 0
        %825 = vmatprep.mubr.bf16.mxu0 0
        %826 = vmatmul.mubr.bf16.gmra.mrb[0].mxu0 %v791
        %v827 = vpop.f32.mrb[0].mxu0
        %v828 = vadd.f32 0.0, %v827
        %v829 = vpop.f32.mrb[0].mxu0
        %v830 = vpop.f32.mrb[0].mxu0
        %v831 = vadd.f32 0.0, %v830
        %v832 = vpop.f32.mrb[0].mxu0
        %833 = vdwg.mxu0
        %v836 = vunpack.c.l.b16 %v260
        %v837 = vunpack.c.l.b16 %v261
        %v838 = vpack.c.b16 %v837, %v836
        %v840 = vsel %vm295, %v838, 0
        %842 = vmatprep.subr.bf16.mxu0 0
        %843 = vmatpush1.bf16.msra.mxu0 %v290
        %844 = vmatprep.subr.bf16.mxu0 0
        %845 = vmatpush1.bf16.msra.mxu0 %v291
        %846 = vmatprep.subr.bf16.mxu0 0
        %847 = vmatpush1.bf16.msra.mxu0 %v301
        %848 = vmatprep.subr.bf16.mxu0 0
        %849 = vmatpush1.bf16.msra.mxu0 0
        %850 = vmatprep.subr.bf16.mxu0 0
        %851 = vmatpush1.bf16.msra.mxu0 0
        %852 = vmatprep.subr.bf16.mxu0 0
        %853 = vmatpush1.bf16.msra.mxu0 0
        %854 = vmatprep.subr.bf16.mxu0 0
        %855 = vmatpush1.bf16.msra.mxu0 0
        %856 = vmatprep.subr.bf16.mxu0 0
        %857 = vmatpush1.bf16.msra.mxu0 0
        %858 = vmatprep.subr.bf16.mxu0 0
        %859 = vmatpush1.bf16.msra.mxu0 0
        %860 = vmatprep.subr.bf16.mxu0 0
        %861 = vmatpush1.bf16.msra.mxu0 0
        %862 = vmatprep.subr.bf16.mxu0 0
        %863 = vmatpush1.bf16.msra.mxu0 0
        %864 = vmatprep.subr.bf16.mxu0 0
        %865 = vmatpush1.bf16.msra.mxu0 0
        %866 = vmatprep.subr.bf16.mxu0 0
        %867 = vmatpush1.bf16.msra.mxu0 0
        %868 = vmatprep.subr.bf16.mxu0 0
        %869 = vmatpush1.bf16.msra.mxu0 0
        %870 = vmatprep.subr.bf16.mxu0 0
        %871 = vmatpush1.bf16.msra.mxu0 0
        %872 = vmatprep.subr.bf16.mxu0 0
        %873 = vmatpush1.bf16.msra.mxu0 0
        %874 = vmatprep.mubr.bf16.mxu0 0
        %875 = vmatmul.mubr.bf16.gmra.mrb[0].mxu0 %v840
        %v876 = vpop.f32.mrb[0].mxu0
        %v877 = vadd.f32 0.0, %v876
        %v878 = vpop.f32.mrb[0].mxu0
        %v879 = vpop.f32.mrb[0].mxu0
        %v880 = vadd.f32 0.0, %v879
        %v881 = vpop.f32.mrb[0].mxu0
        %882 = vdwg.mxu0
        %v885 = vunpack.c.l.b16 %v262
        %v886 = vunpack.c.l.b16 %v263
        %v887 = vpack.c.b16 %v886, %v885
        %v889 = vsel %vm295, %v887, 0
        %891 = vmatprep.subr.bf16.mxu0 0
        %892 = vmatpush1.bf16.msra.mxu0 %v290
        %893 = vmatprep.subr.bf16.mxu0 0
        %894 = vmatpush1.bf16.msra.mxu0 %v291
        %895 = vmatprep.subr.bf16.mxu0 0
        %896 = vmatpush1.bf16.msra.mxu0 %v301
        %897 = vmatprep.subr.bf16.mxu0 0
        %898 = vmatpush1.bf16.msra.mxu0 0
        %899 = vmatprep.subr.bf16.mxu0 0
        %900 = vmatpush1.bf16.msra.mxu0 0
        %901 = vmatprep.subr.bf16.mxu0 0
        %902 = vmatpush1.bf16.msra.mxu0 0
        %903 = vmatprep.subr.bf16.mxu0 0
        %904 = vmatpush1.bf16.msra.mxu0 0
        %905 = vmatprep.subr.bf16.mxu0 0
        %906 = vmatpush1.bf16.msra.mxu0 0
        %907 = vmatprep.subr.bf16.mxu0 0
        %908 = vmatpush1.bf16.msra.mxu0 0
        %909 = vmatprep.subr.bf16.mxu0 0
        %910 = vmatpush1.bf16.msra.mxu0 0
        %911 = vmatprep.subr.bf16.mxu0 0
        %912 = vmatpush1.bf16.msra.mxu0 0
        %913 = vmatprep.subr.bf16.mxu0 0
        %914 = vmatpush1.bf16.msra.mxu0 0
        %915 = vmatprep.subr.bf16.mxu0 0
        %916 = vmatpush1.bf16.msra.mxu0 0
        %917 = vmatprep.subr.bf16.mxu0 0
        %918 = vmatpush1.bf16.msra.mxu0 0
        %919 = vmatprep.subr.bf16.mxu0 0
        %920 = vmatpush1.bf16.msra.mxu0 0
        %921 = vmatprep.subr.bf16.mxu0 0
        %922 = vmatpush1.bf16.msra.mxu0 0
        %923 = vmatprep.mubr.bf16.mxu0 0
        %924 = vmatmul.mubr.bf16.gmra.mrb[0].mxu0 %v889
        %v925 = vpop.f32.mrb[0].mxu0
        %v926 = vadd.f32 0.0, %v925
        %v927 = vpop.f32.mrb[0].mxu0
        %v928 = vpop.f32.mrb[0].mxu0
        %v929 = vadd.f32 0.0, %v928
        %v930 = vpop.f32.mrb[0].mxu0
        %931 = vdwg.mxu0
        %v934 = vunpack.c.l.b16 %v264
        %v935 = vunpack.c.l.b16 %v265
        %v936 = vpack.c.b16 %v935, %v934
        %v938 = vsel %vm295, %v936, 0
        %940 = vmatprep.subr.bf16.mxu0 0
        %941 = vmatpush1.bf16.msra.mxu0 %v290
        %942 = vmatprep.subr.bf16.mxu0 0
        %943 = vmatpush1.bf16.msra.mxu0 %v291
        %944 = vmatprep.subr.bf16.mxu0 0
        %945 = vmatpush1.bf16.msra.mxu0 %v301
        %946 = vmatprep.subr.bf16.mxu0 0
        %947 = vmatpush1.bf16.msra.mxu0 0
        %948 = vmatprep.subr.bf16.mxu0 0
        %949 = vmatpush1.bf16.msra.mxu0 0
        %950 = vmatprep.subr.bf16.mxu0 0
        %951 = vmatpush1.bf16.msra.mxu0 0
        %952 = vmatprep.subr.bf16.mxu0 0
        %953 = vmatpush1.bf16.msra.mxu0 0
        %954 = vmatprep.subr.bf16.mxu0 0
        %955 = vmatpush1.bf16.msra.mxu0 0
        %956 = vmatprep.subr.bf16.mxu0 0
        %957 = vmatpush1.bf16.msra.mxu0 0
        %958 = vmatprep.subr.bf16.mxu0 0
        %959 = vmatpush1.bf16.msra.mxu0 0
        %960 = vmatprep.subr.bf16.mxu0 0
        %961 = vmatpush1.bf16.msra.mxu0 0
        %962 = vmatprep.subr.bf16.mxu0 0
        %963 = vmatpush1.bf16.msra.mxu0 0
        %964 = vmatprep.subr.bf16.mxu0 0
        %965 = vmatpush1.bf16.msra.mxu0 0
        %966 = vmatprep.subr.bf16.mxu0 0
        %967 = vmatpush1.bf16.msra.mxu0 0
        %968 = vmatprep.subr.bf16.mxu0 0
        %969 = vmatpush1.bf16.msra.mxu0 0
        %970 = vmatprep.subr.bf16.mxu0 0
        %971 = vmatpush1.bf16.msra.mxu0 0
        %972 = vmatprep.mubr.bf16.mxu0 0
        %973 = vmatmul.mubr.bf16.gmra.mrb[0].mxu0 %v938
        %v974 = vpop.f32.mrb[0].mxu0
        %v975 = vadd.f32 0.0, %v974
        %v976 = vpop.f32.mrb[0].mxu0
        %v977 = vpop.f32.mrb[0].mxu0
        %v978 = vadd.f32 0.0, %v977
        %v979 = vpop.f32.mrb[0].mxu0
        %980 = vdwg.mxu0
        %v983 = vunpack.c.l.b16 %v266
        %v984 = vunpack.c.l.b16 %v267
        %v985 = vpack.c.b16 %v984, %v983
        %v987 = vsel %vm295, %v985, 0
        %989 = vmatprep.subr.bf16.mxu0 0
        %990 = vmatpush1.bf16.msra.mxu0 %v290
        %991 = vmatprep.subr.bf16.mxu0 0
        %992 = vmatpush1.bf16.msra.mxu0 %v291
        %993 = vmatprep.subr.bf16.mxu0 0
        %994 = vmatpush1.bf16.msra.mxu0 %v301
        %995 = vmatprep.subr.bf16.mxu0 0
        %996 = vmatpush1.bf16.msra.mxu0 0
        %997 = vmatprep.subr.bf16.mxu0 0
        %998 = vmatpush1.bf16.msra.mxu0 0
        %999 = vmatprep.subr.bf16.mxu0 0
        %1000 = vmatpush1.bf16.msra.mxu0 0
        %1001 = vmatprep.subr.bf16.mxu0 0
        %1002 = vmatpush1.bf16.msra.mxu0 0
        %1003 = vmatprep.subr.bf16.mxu0 0
        %1004 = vmatpush1.bf16.msra.mxu0 0
        %1005 = vmatprep.subr.bf16.mxu0 0
        %1006 = vmatpush1.bf16.msra.mxu0 0
        %1007 = vmatprep.subr.bf16.mxu0 0
        %1008 = vmatpush1.bf16.msra.mxu0 0
        %1009 = vmatprep.subr.bf16.mxu0 0
        %1010 = vmatpush1.bf16.msra.mxu0 0
        %1011 = vmatprep.subr.bf16.mxu0 0
        %1012 = vmatpush1.bf16.msra.mxu0 0
        %1013 = vmatprep.subr.bf16.mxu0 0
        %1014 = vmatpush1.bf16.msra.mxu0 0
        %1015 = vmatprep.subr.bf16.mxu0 0
        %1016 = vmatpush1.bf16.msra.mxu0 0
        %1017 = vmatprep.subr.bf16.mxu0 0
        %1018 = vmatpush1.bf16.msra.mxu0 0
        %1019 = vmatprep.subr.bf16.mxu0 0
        %1020 = vmatpush1.bf16.msra.mxu0 0
        %1021 = vmatprep.mubr.bf16.mxu0 0
        %1022 = vmatmul.mubr.bf16.gmra.mrb[0].mxu0 %v987
        %v1023 = vpop.f32.mrb[0].mxu0
        %v1024 = vadd.f32 0.0, %v1023
        %v1025 = vpop.f32.mrb[0].mxu0
        %v1026 = vpop.f32.mrb[0].mxu0
        %v1027 = vadd.f32 0.0, %v1026
        %v1028 = vpop.f32.mrb[0].mxu0
        %1029 = vdwg.mxu0
        %v1032 = vunpack.c.l.b16 %v268
        %v1033 = vunpack.c.l.b16 %v269
        %v1034 = vpack.c.b16 %v1033, %v1032
        %v1036 = vsel %vm295, %v1034, 0
        %1038 = vmatprep.subr.bf16.mxu0 0
        %1039 = vmatpush1.bf16.msra.mxu0 %v290
        %1040 = vmatprep.subr.bf16.mxu0 0
        %1041 = vmatpush1.bf16.msra.mxu0 %v291
        %1042 = vmatprep.subr.bf16.mxu0 0
        %1043 = vmatpush1.bf16.msra.mxu0 %v301
        %1044 = vmatprep.subr.bf16.mxu0 0
        %1045 = vmatpush1.bf16.msra.mxu0 0
        %1046 = vmatprep.subr.bf16.mxu0 0
        %1047 = vmatpush1.bf16.msra.mxu0 0
        %1048 = vmatprep.subr.bf16.mxu0 0
        %1049 = vmatpush1.bf16.msra.mxu0 0
        %1050 = vmatprep.subr.bf16.mxu0 0
        %1051 = vmatpush1.bf16.msra.mxu0 0
        %1052 = vmatprep.subr.bf16.mxu0 0
        %1053 = vmatpush1.bf16.msra.mxu0 0
        %1054 = vmatprep.subr.bf16.mxu0 0
        %1055 = vmatpush1.bf16.msra.mxu0 0
        %1056 = vmatprep.subr.bf16.mxu0 0
        %1057 = vmatpush1.bf16.msra.mxu0 0
        %1058 = vmatprep.subr.bf16.mxu0 0
        %1059 = vmatpush1.bf16.msra.mxu0 0
        %1060 = vmatprep.subr.bf16.mxu0 0
        %1061 = vmatpush1.bf16.msra.mxu0 0
        %1062 = vmatprep.subr.bf16.mxu0 0
        %1063 = vmatpush1.bf16.msra.mxu0 0
        %1064 = vmatprep.subr.bf16.mxu0 0
        %1065 = vmatpush1.bf16.msra.mxu0 0
        %1066 = vmatprep.subr.bf16.mxu0 0
        %1067 = vmatpush1.bf16.msra.mxu0 0
        %1068 = vmatprep.subr.bf16.mxu0 0
        %1069 = vmatpush1.bf16.msra.mxu0 0
        %1070 = vmatprep.mubr.bf16.mxu0 0
        %1071 = vmatmul.mubr.bf16.gmra.mrb[0].mxu0 %v1036
        %v1072 = vpop.f32.mrb[0].mxu0
        %v1073 = vadd.f32 0.0, %v1072
        %v1074 = vpop.f32.mrb[0].mxu0
        %v1075 = vpop.f32.mrb[0].mxu0
        %v1076 = vadd.f32 0.0, %v1075
        %v1077 = vpop.f32.mrb[0].mxu0
        %1078 = vdwg.mxu0
        %v1079 = vld [vmem:[%s3] sm:$0xf]
        %v1080 = vld [vmem:[%s3 + $0x4] sm:$0xf]
        %v1081 = vld [vmem:[%s3 + $0x8] sm:$0xf]
        %v1082 = vld [vmem:[%s3 + $0xc] sm:$0xf]
        %s1083 = sld [smem:[#allocation2]]
        %v1084 = vpack.c.bf16 %v341, %v338
        %v1085 = vpack.c.bf16 %v390, %v387
        %v1086 = vpack.c.bf16 %v439, %v436
        %v1087 = vpack.c.bf16 %v488, %v485
        %v1088 = vpack.c.bf16 %v537, %v534
        %v1089 = vpack.c.bf16 %v586, %v583
        %v1090 = vpack.c.bf16 %v635, %v632
        %v1091 = vpack.c.bf16 %v684, %v681
        %v1092 = vpack.c.bf16 %v733, %v730
        %v1093 = vpack.c.bf16 %v782, %v779
        %v1094 = vpack.c.bf16 %v831, %v828
        %v1095 = vpack.c.bf16 %v880, %v877
        %v1096 = vpack.c.bf16 %v929, %v926
        %v1097 = vpack.c.bf16 %v978, %v975
        %v1098 = vpack.c.bf16 %v1027, %v1024
        %v1099 = vpack.c.bf16 %v1076, %v1073
        %v1104 = vunpack.c.l.b16 %v1079
        %v1105 = vunpack.c.l.b16 %v1080
        %v1106 = vunpack.c.l.b16 %v1081
        %v1107 = vunpack.c.l.b16 %v1082
        %v1108 = vpack.c.b16 %v1105, %v1104
        %v1109 = vpack.c.b16 %v1107, %v1106
        %vm1112 = vcmask 261120
        %v1114 = vsel %vm1112, %v1084, 0
        %1116 = vmatprep.subr.bf16.mxu0 0
        %1117 = vmatpush1.bf16.msra.mxu0 %v1108
        %1118 = vmatprep.subr.bf16.mxu0 0
        %1119 = vmatpush1.bf16.msra.mxu0 %v1109
        %1120 = vmatprep.subr.bf16.mxu0 0
        %1121 = vmatpush1.bf16.msra.mxu0 0
        %1122 = vmatprep.subr.bf16.mxu0 0
        %1123 = vmatpush1.bf16.msra.mxu0 0
        %1124 = vmatprep.subr.bf16.mxu0 0
        %1125 = vmatpush1.bf16.msra.mxu0 0
        %1126 = vmatprep.subr.bf16.mxu0 0
        %1127 = vmatpush1.bf16.msra.mxu0 0
        %1128 = vmatprep.subr.bf16.mxu0 0
        %1129 = vmatpush1.bf16.msra.mxu0 0
        %1130 = vmatprep.subr.bf16.mxu0 0
        %1131 = vmatpush1.bf16.msra.mxu0 0
        %1132 = vmatprep.subr.bf16.mxu0 0
        %1133 = vmatpush1.bf16.msra.mxu0 0
        %1134 = vmatprep.subr.bf16.mxu0 0
        %1135 = vmatpush1.bf16.msra.mxu0 0
        %1136 = vmatprep.subr.bf16.mxu0 0
        %1137 = vmatpush1.bf16.msra.mxu0 0
        %1138 = vmatprep.subr.bf16.mxu0 0
        %1139 = vmatpush1.bf16.msra.mxu0 0
        %1140 = vmatprep.subr.bf16.mxu0 0
        %1141 = vmatpush1.bf16.msra.mxu0 0
        %1142 = vmatprep.subr.bf16.mxu0 0
        %1143 = vmatpush1.bf16.msra.mxu0 0
        %1144 = vmatprep.subr.bf16.mxu0 0
        %1145 = vmatpush1.bf16.msra.mxu0 0
        %1146 = vmatprep.subr.bf16.mxu0 0
        %1147 = vmatpush1.bf16.msra.mxu0 0
        %1148 = vmatprep.mubr.bf16.mxu0 0
        %1149 = vmatmul.mubr.bf16.gmra.mrb[0].mxu0 %v1114
        %v1150 = vpop.f32.mrb[0].mxu0
        %v1151 = vadd.f32 0.0, %v1150
        %v1152 = vpop.f32.mrb[0].mxu0
        %v1153 = vpop.f32.mrb[0].mxu0
        %v1154 = vadd.f32 0.0, %v1153
        %v1155 = vpop.f32.mrb[0].mxu0
        %1156 = vdwg.mxu0
        %v1158 = vsel %vm1112, %v1085, 0
        %1160 = vmatprep.subr.bf16.mxu0 0
        %1161 = vmatpush1.bf16.msra.mxu0 %v1108
        %1162 = vmatprep.subr.bf16.mxu0 0
        %1163 = vmatpush1.bf16.msra.mxu0 %v1109
        %1164 = vmatprep.subr.bf16.mxu0 0
        %1165 = vmatpush1.bf16.msra.mxu0 0
        %1166 = vmatprep.subr.bf16.mxu0 0
        %1167 = vmatpush1.bf16.msra.mxu0 0
        %1168 = vmatprep.subr.bf16.mxu0 0
        %1169 = vmatpush1.bf16.msra.mxu0 0
        %1170 = vmatprep.subr.bf16.mxu0 0
        %1171 = vmatpush1.bf16.msra.mxu0 0
        %1172 = vmatprep.subr.bf16.mxu0 0
        %1173 = vmatpush1.bf16.msra.mxu0 0
        %1174 = vmatprep.subr.bf16.mxu0 0
        %1175 = vmatpush1.bf16.msra.mxu0 0
        %1176 = vmatprep.subr.bf16.mxu0 0
        %1177 = vmatpush1.bf16.msra.mxu0 0
        %1178 = vmatprep.subr.bf16.mxu0 0
        %1179 = vmatpush1.bf16.msra.mxu0 0
        %1180 = vmatprep.subr.bf16.mxu0 0
        %1181 = vmatpush1.bf16.msra.mxu0 0
        %1182 = vmatprep.subr.bf16.mxu0 0
        %1183 = vmatpush1.bf16.msra.mxu0 0
        %1184 = vmatprep.subr.bf16.mxu0 0
        %1185 = vmatpush1.bf16.msra.mxu0 0
        %1186 = vmatprep.subr.bf16.mxu0 0
        %1187 = vmatpush1.bf16.msra.mxu0 0
        %1188 = vmatprep.subr.bf16.mxu0 0
        %1189 = vmatpush1.bf16.msra.mxu0 0
        %1190 = vmatprep.subr.bf16.mxu0 0
        %1191 = vmatpush1.bf16.msra.mxu0 0
        %1192 = vmatprep.mubr.bf16.mxu0 0
        %1193 = vmatmul.mubr.bf16.gmra.mrb[0].mxu0 %v1158
        %v1194 = vpop.f32.mrb[0].mxu0
        %v1195 = vadd.f32 0.0, %v1194
        %v1196 = vpop.f32.mrb[0].mxu0
        %v1197 = vpop.f32.mrb[0].mxu0
        %v1198 = vadd.f32 0.0, %v1197
        %v1199 = vpop.f32.mrb[0].mxu0
        %1200 = vdwg.mxu0
        %v1202 = vsel %vm1112, %v1086, 0
        %1204 = vmatprep.subr.bf16.mxu0 0
        %1205 = vmatpush1.bf16.msra.mxu0 %v1108
        %1206 = vmatprep.subr.bf16.mxu0 0
        %1207 = vmatpush1.bf16.msra.mxu0 %v1109
        %1208 = vmatprep.subr.bf16.mxu0 0
        %1209 = vmatpush1.bf16.msra.mxu0 0
        %1210 = vmatprep.subr.bf16.mxu0 0
        %1211 = vmatpush1.bf16.msra.mxu0 0
        %1212 = vmatprep.subr.bf16.mxu0 0
        %1213 = vmatpush1.bf16.msra.mxu0 0
        %1214 = vmatprep.subr.bf16.mxu0 0
        %1215 = vmatpush1.bf16.msra.mxu0 0
        %1216 = vmatprep.subr.bf16.mxu0 0
        %1217 = vmatpush1.bf16.msra.mxu0 0
        %1218 = vmatprep.subr.bf16.mxu0 0
        %1219 = vmatpush1.bf16.msra.mxu0 0
        %1220 = vmatprep.subr.bf16.mxu0 0
        %1221 = vmatpush1.bf16.msra.mxu0 0
        %1222 = vmatprep.subr.bf16.mxu0 0
        %1223 = vmatpush1.bf16.msra.mxu0 0
        %1224 = vmatprep.subr.bf16.mxu0 0
        %1225 = vmatpush1.bf16.msra.mxu0 0
        %1226 = vmatprep.subr.bf16.mxu0 0
        %1227 = vmatpush1.bf16.msra.mxu0 0
        %1228 = vmatprep.subr.bf16.mxu0 0
        %1229 = vmatpush1.bf16.msra.mxu0 0
        %1230 = vmatprep.subr.bf16.mxu0 0
        %1231 = vmatpush1.bf16.msra.mxu0 0
        %1232 = vmatprep.subr.bf16.mxu0 0
        %1233 = vmatpush1.bf16.msra.mxu0 0
        %1234 = vmatprep.subr.bf16.mxu0 0
        %1235 = vmatpush1.bf16.msra.mxu0 0
        %1236 = vmatprep.mubr.bf16.mxu0 0
        %1237 = vmatmul.mubr.bf16.gmra.mrb[0].mxu0 %v1202
        %v1238 = vpop.f32.mrb[0].mxu0
        %v1239 = vadd.f32 0.0, %v1238
        %v1240 = vpop.f32.mrb[0].mxu0
        %v1241 = vpop.f32.mrb[0].mxu0
        %v1242 = vadd.f32 0.0, %v1241
        %v1243 = vpop.f32.mrb[0].mxu0
        %1244 = vdwg.mxu0
        %v1246 = vsel %vm1112, %v1087, 0
        %1248 = vmatprep.subr.bf16.mxu0 0
        %1249 = vmatpush1.bf16.msra.mxu0 %v1108
        %1250 = vmatprep.subr.bf16.mxu0 0
        %1251 = vmatpush1.bf16.msra.mxu0 %v1109
        %1252 = vmatprep.subr.bf16.mxu0 0
        %1253 = vmatpush1.bf16.msra.mxu0 0
        %1254 = vmatprep.subr.bf16.mxu0 0
        %1255 = vmatpush1.bf16.msra.mxu0 0
        %1256 = vmatprep.subr.bf16.mxu0 0
        %1257 = vmatpush1.bf16.msra.mxu0 0
        %1258 = vmatprep.subr.bf16.mxu0 0
        %1259 = vmatpush1.bf16.msra.mxu0 0
        %1260 = vmatprep.subr.bf16.mxu0 0
        %1261 = vmatpush1.bf16.msra.mxu0 0
        %1262 = vmatprep.subr.bf16.mxu0 0
        %1263 = vmatpush1.bf16.msra.mxu0 0
        %1264 = vmatprep.subr.bf16.mxu0 0
        %1265 = vmatpush1.bf16.msra.mxu0 0
        %1266 = vmatprep.subr.bf16.mxu0 0
        %1267 = vmatpush1.bf16.msra.mxu0 0
        %1268 = vmatprep.subr.bf16.mxu0 0
        %1269 = vmatpush1.bf16.msra.mxu0 0
        %1270 = vmatprep.subr.bf16.mxu0 0
        %1271 = vmatpush1.bf16.msra.mxu0 0
        %1272 = vmatprep.subr.bf16.mxu0 0
        %1273 = vmatpush1.bf16.msra.mxu0 0
        %1274 = vmatprep.subr.bf16.mxu0 0
        %1275 = vmatpush1.bf16.msra.mxu0 0
        %1276 = vmatprep.subr.bf16.mxu0 0
        %1277 = vmatpush1.bf16.msra.mxu0 0
        %1278 = vmatprep.subr.bf16.mxu0 0
        %1279 = vmatpush1.bf16.msra.mxu0 0
        %1280 = vmatprep.mubr.bf16.mxu0 0
        %1281 = vmatmul.mubr.bf16.gmra.mrb[0].mxu0 %v1246
        %v1282 = vpop.f32.mrb[0].mxu0
        %v1283 = vadd.f32 0.0, %v1282
        %v1284 = vpop.f32.mrb[0].mxu0
        %v1285 = vpop.f32.mrb[0].mxu0
        %v1286 = vadd.f32 0.0, %v1285
        %v1287 = vpop.f32.mrb[0].mxu0
        %1288 = vdwg.mxu0
        %v1290 = vsel %vm1112, %v1088, 0
        %1292 = vmatprep.subr.bf16.mxu0 0
        %1293 = vmatpush1.bf16.msra.mxu0 %v1108
        %1294 = vmatprep.subr.bf16.mxu0 0
        %1295 = vmatpush1.bf16.msra.mxu0 %v1109
        %1296 = vmatprep.subr.bf16.mxu0 0
        %1297 = vmatpush1.bf16.msra.mxu0 0
        %1298 = vmatprep.subr.bf16.mxu0 0
        %1299 = vmatpush1.bf16.msra.mxu0 0
        %1300 = vmatprep.subr.bf16.mxu0 0
        %1301 = vmatpush1.bf16.msra.mxu0 0
        %1302 = vmatprep.subr.bf16.mxu0 0
        %1303 = vmatpush1.bf16.msra.mxu0 0
        %1304 = vmatprep.subr.bf16.mxu0 0
        %1305 = vmatpush1.bf16.msra.mxu0 0
        %1306 = vmatprep.subr.bf16.mxu0 0
        %1307 = vmatpush1.bf16.msra.mxu0 0
        %1308 = vmatprep.subr.bf16.mxu0 0
        %1309 = vmatpush1.bf16.msra.mxu0 0
        %1310 = vmatprep.subr.bf16.mxu0 0
        %1311 = vmatpush1.bf16.msra.mxu0 0
        %1312 = vmatprep.subr.bf16.mxu0 0
        %1313 = vmatpush1.bf16.msra.mxu0 0
        %1314 = vmatprep.subr.bf16.mxu0 0
        %1315 = vmatpush1.bf16.msra.mxu0 0
        %1316 = vmatprep.subr.bf16.mxu0 0
        %1317 = vmatpush1.bf16.msra.mxu0 0
        %1318 = vmatprep.subr.bf16.mxu0 0
        %1319 = vmatpush1.bf16.msra.mxu0 0
        %1320 = vmatprep.subr.bf16.mxu0 0
        %1321 = vmatpush1.bf16.msra.mxu0 0
        %1322 = vmatprep.subr.bf16.mxu0 0
        %1323 = vmatpush1.bf16.msra.mxu0 0
        %1324 = vmatprep.mubr.bf16.mxu0 0
        %1325 = vmatmul.mubr.bf16.gmra.mrb[0].mxu0 %v1290
        %v1326 = vpop.f32.mrb[0].mxu0
        %v1327 = vadd.f32 0.0, %v1326
        %v1328 = vpop.f32.mrb[0].mxu0
        %v1329 = vpop.f32.mrb[0].mxu0
        %v1330 = vadd.f32 0.0, %v1329
        %v1331 = vpop.f32.mrb[0].mxu0
        %1332 = vdwg.mxu0
        %v1334 = vsel %vm1112, %v1089, 0
        %1336 = vmatprep.subr.bf16.mxu0 0
        %1337 = vmatpush1.bf16.msra.mxu0 %v1108
        %1338 = vmatprep.subr.bf16.mxu0 0
        %1339 = vmatpush1.bf16.msra.mxu0 %v1109
        %1340 = vmatprep.subr.bf16.mxu0 0
        %1341 = vmatpush1.bf16.msra.mxu0 0
        %1342 = vmatprep.subr.bf16.mxu0 0
        %1343 = vmatpush1.bf16.msra.mxu0 0
        %1344 = vmatprep.subr.bf16.mxu0 0
        %1345 = vmatpush1.bf16.msra.mxu0 0
        %1346 = vmatprep.subr.bf16.mxu0 0
        %1347 = vmatpush1.bf16.msra.mxu0 0
        %1348 = vmatprep.subr.bf16.mxu0 0
        %1349 = vmatpush1.bf16.msra.mxu0 0
        %1350 = vmatprep.subr.bf16.mxu0 0
        %1351 = vmatpush1.bf16.msra.mxu0 0
        %1352 = vmatprep.subr.bf16.mxu0 0
        %1353 = vmatpush1.bf16.msra.mxu0 0
        %1354 = vmatprep.subr.bf16.mxu0 0
        %1355 = vmatpush1.bf16.msra.mxu0 0
        %1356 = vmatprep.subr.bf16.mxu0 0
        %1357 = vmatpush1.bf16.msra.mxu0 0
        %1358 = vmatprep.subr.bf16.mxu0 0
        %1359 = vmatpush1.bf16.msra.mxu0 0
        %1360 = vmatprep.subr.bf16.mxu0 0
        %1361 = vmatpush1.bf16.msra.mxu0 0
        %1362 = vmatprep.subr.bf16.mxu0 0
        %1363 = vmatpush1.bf16.msra.mxu0 0
        %1364 = vmatprep.subr.bf16.mxu0 0
        %1365 = vmatpush1.bf16.msra.mxu0 0
        %1366 = vmatprep.subr.bf16.mxu0 0
        %1367 = vmatpush1.bf16.msra.mxu0 0
        %1368 = vmatprep.mubr.bf16.mxu0 0
        %1369 = vmatmul.mubr.bf16.gmra.mrb[0].mxu0 %v1334
        %v1370 = vpop.f32.mrb[0].mxu0
        %v1371 = vadd.f32 0.0, %v1370
        %v1372 = vpop.f32.mrb[0].mxu0
        %v1373 = vpop.f32.mrb[0].mxu0
        %v1374 = vadd.f32 0.0, %v1373
        %v1375 = vpop.f32.mrb[0].mxu0
        %1376 = vdwg.mxu0
        %v1378 = vsel %vm1112, %v1090, 0
        %1380 = vmatprep.subr.bf16.mxu0 0
        %1381 = vmatpush1.bf16.msra.mxu0 %v1108
        %1382 = vmatprep.subr.bf16.mxu0 0
        %1383 = vmatpush1.bf16.msra.mxu0 %v1109
        %1384 = vmatprep.subr.bf16.mxu0 0
        %1385 = vmatpush1.bf16.msra.mxu0 0
        %1386 = vmatprep.subr.bf16.mxu0 0
        %1387 = vmatpush1.bf16.msra.mxu0 0
        %1388 = vmatprep.subr.bf16.mxu0 0
        %1389 = vmatpush1.bf16.msra.mxu0 0
        %1390 = vmatprep.subr.bf16.mxu0 0
        %1391 = vmatpush1.bf16.msra.mxu0 0
        %1392 = vmatprep.subr.bf16.mxu0 0
        %1393 = vmatpush1.bf16.msra.mxu0 0
        %1394 = vmatprep.subr.bf16.mxu0 0
        %1395 = vmatpush1.bf16.msra.mxu0 0
        %1396 = vmatprep.subr.bf16.mxu0 0
        %1397 = vmatpush1.bf16.msra.mxu0 0
        %1398 = vmatprep.subr.bf16.mxu0 0
        %1399 = vmatpush1.bf16.msra.mxu0 0
        %1400 = vmatprep.subr.bf16.mxu0 0
        %1401 = vmatpush1.bf16.msra.mxu0 0
        %1402 = vmatprep.subr.bf16.mxu0 0
        %1403 = vmatpush1.bf16.msra.mxu0 0
        %1404 = vmatprep.subr.bf16.mxu0 0
        %1405 = vmatpush1.bf16.msra.mxu0 0
        %1406 = vmatprep.subr.bf16.mxu0 0
        %1407 = vmatpush1.bf16.msra.mxu0 0
        %1408 = vmatprep.subr.bf16.mxu0 0
        %1409 = vmatpush1.bf16.msra.mxu0 0
        %1410 = vmatprep.subr.bf16.mxu0 0
        %1411 = vmatpush1.bf16.msra.mxu0 0
        %1412 = vmatprep.mubr.bf16.mxu0 0
        %1413 = vmatmul.mubr.bf16.gmra.mrb[0].mxu0 %v1378
        %v1414 = vpop.f32.mrb[0].mxu0
        %v1415 = vadd.f32 0.0, %v1414
        %v1416 = vpop.f32.mrb[0].mxu0
        %v1417 = vpop.f32.mrb[0].mxu0
        %v1418 = vadd.f32 0.0, %v1417
        %v1419 = vpop.f32.mrb[0].mxu0
        %1420 = vdwg.mxu0
        %v1422 = vsel %vm1112, %v1091, 0
        %1424 = vmatprep.subr.bf16.mxu0 0
        %1425 = vmatpush1.bf16.msra.mxu0 %v1108
        %1426 = vmatprep.subr.bf16.mxu0 0
        %1427 = vmatpush1.bf16.msra.mxu0 %v1109
        %1428 = vmatprep.subr.bf16.mxu0 0
        %1429 = vmatpush1.bf16.msra.mxu0 0
        %1430 = vmatprep.subr.bf16.mxu0 0
        %1431 = vmatpush1.bf16.msra.mxu0 0
        %1432 = vmatprep.subr.bf16.mxu0 0
        %1433 = vmatpush1.bf16.msra.mxu0 0
        %1434 = vmatprep.subr.bf16.mxu0 0
        %1435 = vmatpush1.bf16.msra.mxu0 0
        %1436 = vmatprep.subr.bf16.mxu0 0
        %1437 = vmatpush1.bf16.msra.mxu0 0
        %1438 = vmatprep.subr.bf16.mxu0 0
        %1439 = vmatpush1.bf16.msra.mxu0 0
        %1440 = vmatprep.subr.bf16.mxu0 0
        %1441 = vmatpush1.bf16.msra.mxu0 0
        %1442 = vmatprep.subr.bf16.mxu0 0
        %1443 = vmatpush1.bf16.msra.mxu0 0
        %1444 = vmatprep.subr.bf16.mxu0 0
        %1445 = vmatpush1.bf16.msra.mxu0 0
        %1446 = vmatprep.subr.bf16.mxu0 0
        %1447 = vmatpush1.bf16.msra.mxu0 0
        %1448 = vmatprep.subr.bf16.mxu0 0
        %1449 = vmatpush1.bf16.msra.mxu0 0
        %1450 = vmatprep.subr.bf16.mxu0 0
        %1451 = vmatpush1.bf16.msra.mxu0 0
        %1452 = vmatprep.subr.bf16.mxu0 0
        %1453 = vmatpush1.bf16.msra.mxu0 0
        %1454 = vmatprep.subr.bf16.mxu0 0
        %1455 = vmatpush1.bf16.msra.mxu0 0
        %1456 = vmatprep.mubr.bf16.mxu0 0
        %1457 = vmatmul.mubr.bf16.gmra.mrb[0].mxu0 %v1422
        %v1458 = vpop.f32.mrb[0].mxu0
        %v1459 = vadd.f32 0.0, %v1458
        %v1460 = vpop.f32.mrb[0].mxu0
        %v1461 = vpop.f32.mrb[0].mxu0
        %v1462 = vadd.f32 0.0, %v1461
        %v1463 = vpop.f32.mrb[0].mxu0
        %1464 = vdwg.mxu0
        %v1466 = vsel %vm1112, %v1092, 0
        %1468 = vmatprep.subr.bf16.mxu0 0
        %1469 = vmatpush1.bf16.msra.mxu0 %v1108
        %1470 = vmatprep.subr.bf16.mxu0 0
        %1471 = vmatpush1.bf16.msra.mxu0 %v1109
        %1472 = vmatprep.subr.bf16.mxu0 0
        %1473 = vmatpush1.bf16.msra.mxu0 0
        %1474 = vmatprep.subr.bf16.mxu0 0
        %1475 = vmatpush1.bf16.msra.mxu0 0
        %1476 = vmatprep.subr.bf16.mxu0 0
        %1477 = vmatpush1.bf16.msra.mxu0 0
        %1478 = vmatprep.subr.bf16.mxu0 0
        %1479 = vmatpush1.bf16.msra.mxu0 0
        %1480 = vmatprep.subr.bf16.mxu0 0
        %1481 = vmatpush1.bf16.msra.mxu0 0
        %1482 = vmatprep.subr.bf16.mxu0 0
        %1483 = vmatpush1.bf16.msra.mxu0 0
        %1484 = vmatprep.subr.bf16.mxu0 0
        %1485 = vmatpush1.bf16.msra.mxu0 0
        %1486 = vmatprep.subr.bf16.mxu0 0
        %1487 = vmatpush1.bf16.msra.mxu0 0
        %1488 = vmatprep.subr.bf16.mxu0 0
        %1489 = vmatpush1.bf16.msra.mxu0 0
        %1490 = vmatprep.subr.bf16.mxu0 0
        %1491 = vmatpush1.bf16.msra.mxu0 0
        %1492 = vmatprep.subr.bf16.mxu0 0
        %1493 = vmatpush1.bf16.msra.mxu0 0
        %1494 = vmatprep.subr.bf16.mxu0 0
        %1495 = vmatpush1.bf16.msra.mxu0 0
        %1496 = vmatprep.subr.bf16.mxu0 0
        %1497 = vmatpush1.bf16.msra.mxu0 0
        %1498 = vmatprep.subr.bf16.mxu0 0
        %1499 = vmatpush1.bf16.msra.mxu0 0
        %1500 = vmatprep.mubr.bf16.mxu0 0
        %1501 = vmatmul.mubr.bf16.gmra.mrb[0].mxu0 %v1466
        %v1502 = vpop.f32.mrb[0].mxu0
        %v1503 = vadd.f32 0.0, %v1502
        %v1504 = vpop.f32.mrb[0].mxu0
        %v1505 = vpop.f32.mrb[0].mxu0
        %v1506 = vadd.f32 0.0, %v1505
        %v1507 = vpop.f32.mrb[0].mxu0
        %1508 = vdwg.mxu0
        %v1510 = vsel %vm1112, %v1093, 0
        %1512 = vmatprep.subr.bf16.mxu0 0
        %1513 = vmatpush1.bf16.msra.mxu0 %v1108
        %1514 = vmatprep.subr.bf16.mxu0 0
        %1515 = vmatpush1.bf16.msra.mxu0 %v1109
        %1516 = vmatprep.subr.bf16.mxu0 0
        %1517 = vmatpush1.bf16.msra.mxu0 0
        %1518 = vmatprep.subr.bf16.mxu0 0
        %1519 = vmatpush1.bf16.msra.mxu0 0
        %1520 = vmatprep.subr.bf16.mxu0 0
        %1521 = vmatpush1.bf16.msra.mxu0 0
        %1522 = vmatprep.subr.bf16.mxu0 0
        %1523 = vmatpush1.bf16.msra.mxu0 0
        %1524 = vmatprep.subr.bf16.mxu0 0
        %1525 = vmatpush1.bf16.msra.mxu0 0
        %1526 = vmatprep.subr.bf16.mxu0 0
        %1527 = vmatpush1.bf16.msra.mxu0 0
        %1528 = vmatprep.subr.bf16.mxu0 0
        %1529 = vmatpush1.bf16.msra.mxu0 0
        %1530 = vmatprep.subr.bf16.mxu0 0
        %1531 = vmatpush1.bf16.msra.mxu0 0
        %1532 = vmatprep.subr.bf16.mxu0 0
        %1533 = vmatpush1.bf16.msra.mxu0 0
        %1534 = vmatprep.subr.bf16.mxu0 0
        %1535 = vmatpush1.bf16.msra.mxu0 0
        %1536 = vmatprep.subr.bf16.mxu0 0
        %1537 = vmatpush1.bf16.msra.mxu0 0
        %1538 = vmatprep.subr.bf16.mxu0 0
        %1539 = vmatpush1.bf16.msra.mxu0 0
        %1540 = vmatprep.subr.bf16.mxu0 0
        %1541 = vmatpush1.bf16.msra.mxu0 0
        %1542 = vmatprep.subr.bf16.mxu0 0
        %1543 = vmatpush1.bf16.msra.mxu0 0
        %1544 = vmatprep.mubr.bf16.mxu0 0
        %1545 = vmatmul.mubr.bf16.gmra.mrb[0].mxu0 %v1510
        %v1546 = vpop.f32.mrb[0].mxu0
        %v1547 = vadd.f32 0.0, %v1546
        %v1548 = vpop.f32.mrb[0].mxu0
        %v1549 = vpop.f32.mrb[0].mxu0
        %v1550 = vadd.f32 0.0, %v1549
        %v1551 = vpop.f32.mrb[0].mxu0
        %1552 = vdwg.mxu0
        %v1554 = vsel %vm1112, %v1094, 0
        %1556 = vmatprep.subr.bf16.mxu0 0
        %1557 = vmatpush1.bf16.msra.mxu0 %v1108
        %1558 = vmatprep.subr.bf16.mxu0 0
        %1559 = vmatpush1.bf16.msra.mxu0 %v1109
        %1560 = vmatprep.subr.bf16.mxu0 0
        %1561 = vmatpush1.bf16.msra.mxu0 0
        %1562 = vmatprep.subr.bf16.mxu0 0
        %1563 = vmatpush1.bf16.msra.mxu0 0
        %1564 = vmatprep.subr.bf16.mxu0 0
        %1565 = vmatpush1.bf16.msra.mxu0 0
        %1566 = vmatprep.subr.bf16.mxu0 0
        %1567 = vmatpush1.bf16.msra.mxu0 0
        %1568 = vmatprep.subr.bf16.mxu0 0
        %1569 = vmatpush1.bf16.msra.mxu0 0
        %1570 = vmatprep.subr.bf16.mxu0 0
        %1571 = vmatpush1.bf16.msra.mxu0 0
        %1572 = vmatprep.subr.bf16.mxu0 0
        %1573 = vmatpush1.bf16.msra.mxu0 0
        %1574 = vmatprep.subr.bf16.mxu0 0
        %1575 = vmatpush1.bf16.msra.mxu0 0
        %1576 = vmatprep.subr.bf16.mxu0 0
        %1577 = vmatpush1.bf16.msra.mxu0 0
        %1578 = vmatprep.subr.bf16.mxu0 0
        %1579 = vmatpush1.bf16.msra.mxu0 0
        %1580 = vmatprep.subr.bf16.mxu0 0
        %1581 = vmatpush1.bf16.msra.mxu0 0
        %1582 = vmatprep.subr.bf16.mxu0 0
        %1583 = vmatpush1.bf16.msra.mxu0 0
        %1584 = vmatprep.subr.bf16.mxu0 0
        %1585 = vmatpush1.bf16.msra.mxu0 0
        %1586 = vmatprep.subr.bf16.mxu0 0
        %1587 = vmatpush1.bf16.msra.mxu0 0
        %1588 = vmatprep.mubr.bf16.mxu0 0
        %1589 = vmatmul.mubr.bf16.gmra.mrb[0].mxu0 %v1554
        %v1590 = vpop.f32.mrb[0].mxu0
        %v1591 = vadd.f32 0.0, %v1590
        %v1592 = vpop.f32.mrb[0].mxu0
        %v1593 = vpop.f32.mrb[0].mxu0
        %v1594 = vadd.f32 0.0, %v1593
        %v1595 = vpop.f32.mrb[0].mxu0
        %1596 = vdwg.mxu0
        %v1598 = vsel %vm1112, %v1095, 0
        %1600 = vmatprep.subr.bf16.mxu0 0
        %1601 = vmatpush1.bf16.msra.mxu0 %v1108
        %1602 = vmatprep.subr.bf16.mxu0 0
        %1603 = vmatpush1.bf16.msra.mxu0 %v1109
        %1604 = vmatprep.subr.bf16.mxu0 0
        %1605 = vmatpush1.bf16.msra.mxu0 0
        %1606 = vmatprep.subr.bf16.mxu0 0
        %1607 = vmatpush1.bf16.msra.mxu0 0
        %1608 = vmatprep.subr.bf16.mxu0 0
        %1609 = vmatpush1.bf16.msra.mxu0 0
        %1610 = vmatprep.subr.bf16.mxu0 0
        %1611 = vmatpush1.bf16.msra.mxu0 0
        %1612 = vmatprep.subr.bf16.mxu0 0
        %1613 = vmatpush1.bf16.msra.mxu0 0
        %1614 = vmatprep.subr.bf16.mxu0 0
        %1615 = vmatpush1.bf16.msra.mxu0 0
        %1616 = vmatprep.subr.bf16.mxu0 0
        %1617 = vmatpush1.bf16.msra.mxu0 0
        %1618 = vmatprep.subr.bf16.mxu0 0
        %1619 = vmatpush1.bf16.msra.mxu0 0
        %1620 = vmatprep.subr.bf16.mxu0 0
        %1621 = vmatpush1.bf16.msra.mxu0 0
        %1622 = vmatprep.subr.bf16.mxu0 0
        %1623 = vmatpush1.bf16.msra.mxu0 0
        %1624 = vmatprep.subr.bf16.mxu0 0
        %1625 = vmatpush1.bf16.msra.mxu0 0
        %1626 = vmatprep.subr.bf16.mxu0 0
        %1627 = vmatpush1.bf16.msra.mxu0 0
        %1628 = vmatprep.subr.bf16.mxu0 0
        %1629 = vmatpush1.bf16.msra.mxu0 0
        %1630 = vmatprep.subr.bf16.mxu0 0
        %1631 = vmatpush1.bf16.msra.mxu0 0
        %1632 = vmatprep.mubr.bf16.mxu0 0
        %1633 = vmatmul.mubr.bf16.gmra.mrb[0].mxu0 %v1598
        %v1634 = vpop.f32.mrb[0].mxu0
        %v1635 = vadd.f32 0.0, %v1634
        %v1636 = vpop.f32.mrb[0].mxu0
        %v1637 = vpop.f32.mrb[0].mxu0
        %v1638 = vadd.f32 0.0, %v1637
        %v1639 = vpop.f32.mrb[0].mxu0
        %1640 = vdwg.mxu0
        %v1642 = vsel %vm1112, %v1096, 0
        %1644 = vmatprep.subr.bf16.mxu0 0
        %1645 = vmatpush1.bf16.msra.mxu0 %v1108
        %1646 = vmatprep.subr.bf16.mxu0 0
        %1647 = vmatpush1.bf16.msra.mxu0 %v1109
        %1648 = vmatprep.subr.bf16.mxu0 0
        %1649 = vmatpush1.bf16.msra.mxu0 0
        %1650 = vmatprep.subr.bf16.mxu0 0
        %1651 = vmatpush1.bf16.msra.mxu0 0
        %1652 = vmatprep.subr.bf16.mxu0 0
        %1653 = vmatpush1.bf16.msra.mxu0 0
        %1654 = vmatprep.subr.bf16.mxu0 0
        %1655 = vmatpush1.bf16.msra.mxu0 0
        %1656 = vmatprep.subr.bf16.mxu0 0
        %1657 = vmatpush1.bf16.msra.mxu0 0
        %1658 = vmatprep.subr.bf16.mxu0 0
        %1659 = vmatpush1.bf16.msra.mxu0 0
        %1660 = vmatprep.subr.bf16.mxu0 0
        %1661 = vmatpush1.bf16.msra.mxu0 0
        %1662 = vmatprep.subr.bf16.mxu0 0
        %1663 = vmatpush1.bf16.msra.mxu0 0
        %1664 = vmatprep.subr.bf16.mxu0 0
        %1665 = vmatpush1.bf16.msra.mxu0 0
        %1666 = vmatprep.subr.bf16.mxu0 0
        %1667 = vmatpush1.bf16.msra.mxu0 0
        %1668 = vmatprep.subr.bf16.mxu0 0
        %1669 = vmatpush1.bf16.msra.mxu0 0
        %1670 = vmatprep.subr.bf16.mxu0 0
        %1671 = vmatpush1.bf16.msra.mxu0 0
        %1672 = vmatprep.subr.bf16.mxu0 0
        %1673 = vmatpush1.bf16.msra.mxu0 0
        %1674 = vmatprep.subr.bf16.mxu0 0
        %1675 = vmatpush1.bf16.msra.mxu0 0
        %1676 = vmatprep.mubr.bf16.mxu0 0
        %1677 = vmatmul.mubr.bf16.gmra.mrb[0].mxu0 %v1642
        %v1678 = vpop.f32.mrb[0].mxu0
        %v1679 = vadd.f32 0.0, %v1678
        %v1680 = vpop.f32.mrb[0].mxu0
        %v1681 = vpop.f32.mrb[0].mxu0
        %v1682 = vadd.f32 0.0, %v1681
        %v1683 = vpop.f32.mrb[0].mxu0
        %1684 = vdwg.mxu0
        %v1686 = vsel %vm1112, %v1097, 0
        %1688 = vmatprep.subr.bf16.mxu0 0
        %1689 = vmatpush1.bf16.msra.mxu0 %v1108
        %1690 = vmatprep.subr.bf16.mxu0 0
        %1691 = vmatpush1.bf16.msra.mxu0 %v1109
        %1692 = vmatprep.subr.bf16.mxu0 0
        %1693 = vmatpush1.bf16.msra.mxu0 0
        %1694 = vmatprep.subr.bf16.mxu0 0
        %1695 = vmatpush1.bf16.msra.mxu0 0
        %1696 = vmatprep.subr.bf16.mxu0 0
        %1697 = vmatpush1.bf16.msra.mxu0 0
        %1698 = vmatprep.subr.bf16.mxu0 0
        %1699 = vmatpush1.bf16.msra.mxu0 0
        %1700 = vmatprep.subr.bf16.mxu0 0
        %1701 = vmatpush1.bf16.msra.mxu0 0
        %1702 = vmatprep.subr.bf16.mxu0 0
        %1703 = vmatpush1.bf16.msra.mxu0 0
        %1704 = vmatprep.subr.bf16.mxu0 0
        %1705 = vmatpush1.bf16.msra.mxu0 0
        %1706 = vmatprep.subr.bf16.mxu0 0
        %1707 = vmatpush1.bf16.msra.mxu0 0
        %1708 = vmatprep.subr.bf16.mxu0 0
        %1709 = vmatpush1.bf16.msra.mxu0 0
        %1710 = vmatprep.subr.bf16.mxu0 0
        %1711 = vmatpush1.bf16.msra.mxu0 0
        %1712 = vmatprep.subr.bf16.mxu0 0
        %1713 = vmatpush1.bf16.msra.mxu0 0
        %1714 = vmatprep.subr.bf16.mxu0 0
        %1715 = vmatpush1.bf16.msra.mxu0 0
        %1716 = vmatprep.subr.bf16.mxu0 0
        %1717 = vmatpush1.bf16.msra.mxu0 0
        %1718 = vmatprep.subr.bf16.mxu0 0
        %1719 = vmatpush1.bf16.msra.mxu0 0
        %1720 = vmatprep.mubr.bf16.mxu0 0
        %1721 = vmatmul.mubr.bf16.gmra.mrb[0].mxu0 %v1686
        %v1722 = vpop.f32.mrb[0].mxu0
        %v1723 = vadd.f32 0.0, %v1722
        %v1724 = vpop.f32.mrb[0].mxu0
        %v1725 = vpop.f32.mrb[0].mxu0
        %v1726 = vadd.f32 0.0, %v1725
        %v1727 = vpop.f32.mrb[0].mxu0
        %1728 = vdwg.mxu0
        %v1730 = vsel %vm1112, %v1098, 0
        %1732 = vmatprep.subr.bf16.mxu0 0
        %1733 = vmatpush1.bf16.msra.mxu0 %v1108
        %1734 = vmatprep.subr.bf16.mxu0 0
        %1735 = vmatpush1.bf16.msra.mxu0 %v1109
        %1736 = vmatprep.subr.bf16.mxu0 0
        %1737 = vmatpush1.bf16.msra.mxu0 0
        %1738 = vmatprep.subr.bf16.mxu0 0
        %1739 = vmatpush1.bf16.msra.mxu0 0
        %1740 = vmatprep.subr.bf16.mxu0 0
        %1741 = vmatpush1.bf16.msra.mxu0 0
        %1742 = vmatprep.subr.bf16.mxu0 0
        %1743 = vmatpush1.bf16.msra.mxu0 0
        %1744 = vmatprep.subr.bf16.mxu0 0
        %1745 = vmatpush1.bf16.msra.mxu0 0
        %1746 = vmatprep.subr.bf16.mxu0 0
        %1747 = vmatpush1.bf16.msra.mxu0 0
        %1748 = vmatprep.subr.bf16.mxu0 0
        %1749 = vmatpush1.bf16.msra.mxu0 0
        %1750 = vmatprep.subr.bf16.mxu0 0
        %1751 = vmatpush1.bf16.msra.mxu0 0
        %1752 = vmatprep.subr.bf16.mxu0 0
        %1753 = vmatpush1.bf16.msra.mxu0 0
        %1754 = vmatprep.subr.bf16.mxu0 0
        %1755 = vmatpush1.bf16.msra.mxu0 0
        %1756 = vmatprep.subr.bf16.mxu0 0
        %1757 = vmatpush1.bf16.msra.mxu0 0
        %1758 = vmatprep.subr.bf16.mxu0 0
        %1759 = vmatpush1.bf16.msra.mxu0 0
        %1760 = vmatprep.subr.bf16.mxu0 0
        %1761 = vmatpush1.bf16.msra.mxu0 0
        %1762 = vmatprep.subr.bf16.mxu0 0
        %1763 = vmatpush1.bf16.msra.mxu0 0
        %1764 = vmatprep.mubr.bf16.mxu0 0
        %1765 = vmatmul.mubr.bf16.gmra.mrb[0].mxu0 %v1730
        %v1766 = vpop.f32.mrb[0].mxu0
        %v1767 = vadd.f32 0.0, %v1766
        %v1768 = vpop.f32.mrb[0].mxu0
        %v1769 = vpop.f32.mrb[0].mxu0
        %v1770 = vadd.f32 0.0, %v1769
        %v1771 = vpop.f32.mrb[0].mxu0
        %1772 = vdwg.mxu0
        %v1774 = vsel %vm1112, %v1099, 0
        %1776 = vmatprep.subr.bf16.mxu0 0
        %1777 = vmatpush1.bf16.msra.mxu0 %v1108
        %1778 = vmatprep.subr.bf16.mxu0 0
        %1779 = vmatpush1.bf16.msra.mxu0 %v1109
        %1780 = vmatprep.subr.bf16.mxu0 0
        %1781 = vmatpush1.bf16.msra.mxu0 0
        %1782 = vmatprep.subr.bf16.mxu0 0
        %1783 = vmatpush1.bf16.msra.mxu0 0
        %1784 = vmatprep.subr.bf16.mxu0 0
        %1785 = vmatpush1.bf16.msra.mxu0 0
        %1786 = vmatprep.subr.bf16.mxu0 0
        %1787 = vmatpush1.bf16.msra.mxu0 0
        %1788 = vmatprep.subr.bf16.mxu0 0
        %1789 = vmatpush1.bf16.msra.mxu0 0
        %1790 = vmatprep.subr.bf16.mxu0 0
        %1791 = vmatpush1.bf16.msra.mxu0 0
        %1792 = vmatprep.subr.bf16.mxu0 0
        %1793 = vmatpush1.bf16.msra.mxu0 0
        %1794 = vmatprep.subr.bf16.mxu0 0
        %1795 = vmatpush1.bf16.msra.mxu0 0
        %1796 = vmatprep.subr.bf16.mxu0 0
        %1797 = vmatpush1.bf16.msra.mxu0 0
        %1798 = vmatprep.subr.bf16.mxu0 0
        %1799 = vmatpush1.bf16.msra.mxu0 0
        %1800 = vmatprep.subr.bf16.mxu0 0
        %1801 = vmatpush1.bf16.msra.mxu0 0
        %1802 = vmatprep.subr.bf16.mxu0 0
        %1803 = vmatpush1.bf16.msra.mxu0 0
        %1804 = vmatprep.subr.bf16.mxu0 0
        %1805 = vmatpush1.bf16.msra.mxu0 0
        %1806 = vmatprep.subr.bf16.mxu0 0
        %1807 = vmatpush1.bf16.msra.mxu0 0
        %1808 = vmatprep.mubr.bf16.mxu0 0
        %1809 = vmatmul.mubr.bf16.gmra.mrb[0].mxu0 %v1774
        %v1810 = vpop.f32.mrb[0].mxu0
        %v1811 = vadd.f32 0.0, %v1810
        %v1812 = vpop.f32.mrb[0].mxu0
        %v1813 = vpop.f32.mrb[0].mxu0
        %v1814 = vadd.f32 0.0, %v1813
        %v1815 = vpop.f32.mrb[0].mxu0
        %1816 = vdwg.mxu0
        %v1817 = vpack.c.bf16 %v1154, %v1151
        %v1818 = vpack.c.bf16 %v1198, %v1195
        %v1819 = vpack.c.bf16 %v1242, %v1239
        %v1820 = vpack.c.bf16 %v1286, %v1283
        %v1821 = vpack.c.bf16 %v1330, %v1327
        %v1822 = vpack.c.bf16 %v1374, %v1371
        %v1823 = vpack.c.bf16 %v1418, %v1415
        %v1824 = vpack.c.bf16 %v1462, %v1459
        %v1825 = vpack.c.bf16 %v1506, %v1503
        %v1826 = vpack.c.bf16 %v1550, %v1547
        %v1827 = vpack.c.bf16 %v1594, %v1591
        %v1828 = vpack.c.bf16 %v1638, %v1635
        %v1829 = vpack.c.bf16 %v1682, %v1679
        %v1830 = vpack.c.bf16 %v1726, %v1723
        %v1831 = vpack.c.bf16 %v1770, %v1767
        %v1832 = vpack.c.bf16 %v1814, %v1811
        %1834 = vrot.lane.b32.xlu0 %v1817, 96
        %v1835 = vpop.permute.xlu0 %1834
        %1836 = vrot.lane.b32.xlu0 %v1817, 92
        %v1837 = vpop.permute.xlu0 %1836
        %vm1838 = vcmask 31744
        %v1840 = vsel %vm1838, %v1835, 0
        %v1843 = vsel %vm1838, %v1837, 0
        %1845 = vmatprep.subr.bf16.mxu0 0
        %1846 = vmatpush1.bf16.xpose.msra.mxu0 %v1843
        %1847 = vmatprep.subr.bf16.mxu0 0
        %1848 = vmatpush1.bf16.xpose.msra.mxu0 0
        %1849 = vmatprep.subr.bf16.mxu0 0
        %1850 = vmatpush1.bf16.xpose.msra.mxu0 0
        %1851 = vmatprep.subr.bf16.mxu0 0
        %1852 = vmatpush1.bf16.xpose.msra.mxu0 0
        %1853 = vmatprep.subr.bf16.mxu0 0
        %1854 = vmatpush1.bf16.xpose.msra.mxu0 0
        %1855 = vmatprep.subr.bf16.mxu0 0
        %1856 = vmatpush1.bf16.xpose.msra.mxu0 0
        %1857 = vmatprep.subr.bf16.mxu0 0
        %1858 = vmatpush1.bf16.xpose.msra.mxu0 0
        %1859 = vmatprep.subr.bf16.mxu0 0
        %1860 = vmatpush1.bf16.xpose.msra.mxu0 0
        %1861 = vmatprep.subr.bf16.mxu0 0
        %1862 = vmatpush1.bf16.xpose.msra.mxu0 0
        %1863 = vmatprep.subr.bf16.mxu0 0
        %1864 = vmatpush1.bf16.xpose.msra.mxu0 0
        %1865 = vmatprep.subr.bf16.mxu0 0
        %1866 = vmatpush1.bf16.xpose.msra.mxu0 0
        %1867 = vmatprep.subr.bf16.mxu0 0
        %1868 = vmatpush1.bf16.xpose.msra.mxu0 0
        %1869 = vmatprep.subr.bf16.mxu0 0
        %1870 = vmatpush1.bf16.xpose.msra.mxu0 0
        %1871 = vmatprep.subr.bf16.mxu0 0
        %1872 = vmatpush1.bf16.xpose.msra.mxu0 0
        %1873 = vmatprep.subr.bf16.mxu0 0
        %1874 = vmatpush1.bf16.xpose.msra.mxu0 0
        %1875 = vmatprep.subr.bf16.mxu0 0
        %1876 = vmatpush1.bf16.xpose.msra.mxu0 0
        %1877 = vmatprep.mubr.bf16.mxu0 0
        %1878 = vmatmul.mubr.bf16.gmra.mrb[0].mxu0 %v1840
        %v1879 = vpop.f32.mrb[0].mxu0
        %v1880 = vadd.f32 0.0, %v1879
        %v1881 = vpop.f32.mrb[0].mxu0
        %v1882 = vpop.f32.mrb[0].mxu0
        %v1883 = vadd.f32 0.0, %v1882
        %v1884 = vpop.f32.mrb[0].mxu0
        %1885 = vdwg.mxu0
        %1887 = vrot.lane.b32.xlu0 %v1818, 96
        %v1888 = vpop.permute.xlu0 %1887
        %1889 = vrot.lane.b32.xlu0 %v1818, 92
        %v1890 = vpop.permute.xlu0 %1889
        %v1892 = vsel %vm1838, %v1888, 0
        %v1895 = vsel %vm1838, %v1890, 0
        %1897 = vmatprep.subr.bf16.mxu0 0
        %1898 = vmatpush1.bf16.xpose.msra.mxu0 %v1895
        %1899 = vmatprep.subr.bf16.mxu0 0
        %1900 = vmatpush1.bf16.xpose.msra.mxu0 0
        %1901 = vmatprep.subr.bf16.mxu0 0
        %1902 = vmatpush1.bf16.xpose.msra.mxu0 0
        %1903 = vmatprep.subr.bf16.mxu0 0
        %1904 = vmatpush1.bf16.xpose.msra.mxu0 0
        %1905 = vmatprep.subr.bf16.mxu0 0
        %1906 = vmatpush1.bf16.xpose.msra.mxu0 0
        %1907 = vmatprep.subr.bf16.mxu0 0
        %1908 = vmatpush1.bf16.xpose.msra.mxu0 0
        %1909 = vmatprep.subr.bf16.mxu0 0
        %1910 = vmatpush1.bf16.xpose.msra.mxu0 0
        %1911 = vmatprep.subr.bf16.mxu0 0
        %1912 = vmatpush1.bf16.xpose.msra.mxu0 0
        %1913 = vmatprep.subr.bf16.mxu0 0
        %1914 = vmatpush1.bf16.xpose.msra.mxu0 0
        %1915 = vmatprep.subr.bf16.mxu0 0
        %1916 = vmatpush1.bf16.xpose.msra.mxu0 0
        %1917 = vmatprep.subr.bf16.mxu0 0
        %1918 = vmatpush1.bf16.xpose.msra.mxu0 0
        %1919 = vmatprep.subr.bf16.mxu0 0
        %1920 = vmatpush1.bf16.xpose.msra.mxu0 0
        %1921 = vmatprep.subr.bf16.mxu0 0
        %1922 = vmatpush1.bf16.xpose.msra.mxu0 0
        %1923 = vmatprep.subr.bf16.mxu0 0
        %1924 = vmatpush1.bf16.xpose.msra.mxu0 0
        %1925 = vmatprep.subr.bf16.mxu0 0
        %1926 = vmatpush1.bf16.xpose.msra.mxu0 0
        %1927 = vmatprep.subr.bf16.mxu0 0
        %1928 = vmatpush1.bf16.xpose.msra.mxu0 0
        %1929 = vmatprep.mubr.bf16.mxu0 0
        %1930 = vmatmul.mubr.bf16.gmra.mrb[0].mxu0 %v1892
        %v1931 = vpop.f32.mrb[0].mxu0
        %v1932 = vadd.f32 0.0, %v1931
        %v1933 = vpop.f32.mrb[0].mxu0
        %v1934 = vpop.f32.mrb[0].mxu0
        %v1935 = vadd.f32 0.0, %v1934
        %v1936 = vpop.f32.mrb[0].mxu0
        %1937 = vdwg.mxu0
        %1939 = vrot.lane.b32.xlu0 %v1819, 96
        %v1940 = vpop.permute.xlu0 %1939
        %1941 = vrot.lane.b32.xlu0 %v1819, 92
        %v1942 = vpop.permute.xlu0 %1941
        %v1944 = vsel %vm1838, %v1940, 0
        %v1947 = vsel %vm1838, %v1942, 0
        %1949 = vmatprep.subr.bf16.mxu0 0
        %1950 = vmatpush1.bf16.xpose.msra.mxu0 %v1947
        %1951 = vmatprep.subr.bf16.mxu0 0
        %1952 = vmatpush1.bf16.xpose.msra.mxu0 0
        %1953 = vmatprep.subr.bf16.mxu0 0
        %1954 = vmatpush1.bf16.xpose.msra.mxu0 0
        %1955 = vmatprep.subr.bf16.mxu0 0
        %1956 = vmatpush1.bf16.xpose.msra.mxu0 0
        %1957 = vmatprep.subr.bf16.mxu0 0
        %1958 = vmatpush1.bf16.xpose.msra.mxu0 0
        %1959 = vmatprep.subr.bf16.mxu0 0
        %1960 = vmatpush1.bf16.xpose.msra.mxu0 0
        %1961 = vmatprep.subr.bf16.mxu0 0
        %1962 = vmatpush1.bf16.xpose.msra.mxu0 0
        %1963 = vmatprep.subr.bf16.mxu0 0
        %1964 = vmatpush1.bf16.xpose.msra.mxu0 0
        %1965 = vmatprep.subr.bf16.mxu0 0
        %1966 = vmatpush1.bf16.xpose.msra.mxu0 0
        %1967 = vmatprep.subr.bf16.mxu0 0
        %1968 = vmatpush1.bf16.xpose.msra.mxu0 0
        %1969 = vmatprep.subr.bf16.mxu0 0
        %1970 = vmatpush1.bf16.xpose.msra.mxu0 0
        %1971 = vmatprep.subr.bf16.mxu0 0
        %1972 = vmatpush1.bf16.xpose.msra.mxu0 0
        %1973 = vmatprep.subr.bf16.mxu0 0
        %1974 = vmatpush1.bf16.xpose.msra.mxu0 0
        %1975 = vmatprep.subr.bf16.mxu0 0
        %1976 = vmatpush1.bf16.xpose.msra.mxu0 0
        %1977 = vmatprep.subr.bf16.mxu0 0
        %1978 = vmatpush1.bf16.xpose.msra.mxu0 0
        %1979 = vmatprep.subr.bf16.mxu0 0
        %1980 = vmatpush1.bf16.xpose.msra.mxu0 0
        %1981 = vmatprep.mubr.bf16.mxu0 0
        %1982 = vmatmul.mubr.bf16.gmra.mrb[0].mxu0 %v1944
        %v1983 = vpop.f32.mrb[0].mxu0
        %v1984 = vadd.f32 0.0, %v1983
        %v1985 = vpop.f32.mrb[0].mxu0
        %v1986 = vpop.f32.mrb[0].mxu0
        %v1987 = vadd.f32 0.0, %v1986
        %v1988 = vpop.f32.mrb[0].mxu0
        %1989 = vdwg.mxu0
        %1991 = vrot.lane.b32.xlu0 %v1820, 96
        %v1992 = vpop.permute.xlu0 %1991
        %1993 = vrot.lane.b32.xlu0 %v1820, 92
        %v1994 = vpop.permute.xlu0 %1993
        %v1996 = vsel %vm1838, %v1992, 0
        %v1999 = vsel %vm1838, %v1994, 0
        %2001 = vmatprep.subr.bf16.mxu0 0
        %2002 = vmatpush1.bf16.xpose.msra.mxu0 %v1999
        %2003 = vmatprep.subr.bf16.mxu0 0
        %2004 = vmatpush1.bf16.xpose.msra.mxu0 0
        %2005 = vmatprep.subr.bf16.mxu0 0
        %2006 = vmatpush1.bf16.xpose.msra.mxu0 0
        %2007 = vmatprep.subr.bf16.mxu0 0
        %2008 = vmatpush1.bf16.xpose.msra.mxu0 0
        %2009 = vmatprep.subr.bf16.mxu0 0
        %2010 = vmatpush1.bf16.xpose.msra.mxu0 0
        %2011 = vmatprep.subr.bf16.mxu0 0
        %2012 = vmatpush1.bf16.xpose.msra.mxu0 0
        %2013 = vmatprep.subr.bf16.mxu0 0
        %2014 = vmatpush1.bf16.xpose.msra.mxu0 0
        %2015 = vmatprep.subr.bf16.mxu0 0
        %2016 = vmatpush1.bf16.xpose.msra.mxu0 0
        %2017 = vmatprep.subr.bf16.mxu0 0
        %2018 = vmatpush1.bf16.xpose.msra.mxu0 0
        %2019 = vmatprep.subr.bf16.mxu0 0
        %2020 = vmatpush1.bf16.xpose.msra.mxu0 0
        %2021 = vmatprep.subr.bf16.mxu0 0
        %2022 = vmatpush1.bf16.xpose.msra.mxu0 0
        %2023 = vmatprep.subr.bf16.mxu0 0
        %2024 = vmatpush1.bf16.xpose.msra.mxu0 0
        %2025 = vmatprep.subr.bf16.mxu0 0
        %2026 = vmatpush1.bf16.xpose.msra.mxu0 0
        %2027 = vmatprep.subr.bf16.mxu0 0
        %2028 = vmatpush1.bf16.xpose.msra.mxu0 0
        %2029 = vmatprep.subr.bf16.mxu0 0
        %2030 = vmatpush1.bf16.xpose.msra.mxu0 0
        %2031 = vmatprep.subr.bf16.mxu0 0
        %2032 = vmatpush1.bf16.xpose.msra.mxu0 0
        %2033 = vmatprep.mubr.bf16.mxu0 0
        %2034 = vmatmul.mubr.bf16.gmra.mrb[0].mxu0 %v1996
        %v2035 = vpop.f32.mrb[0].mxu0
        %v2036 = vadd.f32 0.0, %v2035
        %v2037 = vpop.f32.mrb[0].mxu0
        %v2038 = vpop.f32.mrb[0].mxu0
        %v2039 = vadd.f32 0.0, %v2038
        %v2040 = vpop.f32.mrb[0].mxu0
        %2041 = vdwg.mxu0
        %2043 = vrot.lane.b32.xlu0 %v1821, 96
        %v2044 = vpop.permute.xlu0 %2043
        %2045 = vrot.lane.b32.xlu0 %v1821, 92
        %v2046 = vpop.permute.xlu0 %2045
        %v2048 = vsel %vm1838, %v2044, 0
        %v2051 = vsel %vm1838, %v2046, 0
        %2053 = vmatprep.subr.bf16.mxu0 0
        %2054 = vmatpush1.bf16.xpose.msra.mxu0 %v2051
        %2055 = vmatprep.subr.bf16.mxu0 0
        %2056 = vmatpush1.bf16.xpose.msra.mxu0 0
        %2057 = vmatprep.subr.bf16.mxu0 0
        %2058 = vmatpush1.bf16.xpose.msra.mxu0 0
        %2059 = vmatprep.subr.bf16.mxu0 0
        %2060 = vmatpush1.bf16.xpose.msra.mxu0 0
        %2061 = vmatprep.subr.bf16.mxu0 0
        %2062 = vmatpush1.bf16.xpose.msra.mxu0 0
        %2063 = vmatprep.subr.bf16.mxu0 0
        %2064 = vmatpush1.bf16.xpose.msra.mxu0 0
        %2065 = vmatprep.subr.bf16.mxu0 0
        %2066 = vmatpush1.bf16.xpose.msra.mxu0 0
        %2067 = vmatprep.subr.bf16.mxu0 0
        %2068 = vmatpush1.bf16.xpose.msra.mxu0 0
        %2069 = vmatprep.subr.bf16.mxu0 0
        %2070 = vmatpush1.bf16.xpose.msra.mxu0 0
        %2071 = vmatprep.subr.bf16.mxu0 0
        %2072 = vmatpush1.bf16.xpose.msra.mxu0 0
        %2073 = vmatprep.subr.bf16.mxu0 0
        %2074 = vmatpush1.bf16.xpose.msra.mxu0 0
        %2075 = vmatprep.subr.bf16.mxu0 0
        %2076 = vmatpush1.bf16.xpose.msra.mxu0 0
        %2077 = vmatprep.subr.bf16.mxu0 0
        %2078 = vmatpush1.bf16.xpose.msra.mxu0 0
        %2079 = vmatprep.subr.bf16.mxu0 0
        %2080 = vmatpush1.bf16.xpose.msra.mxu0 0
        %2081 = vmatprep.subr.bf16.mxu0 0
        %2082 = vmatpush1.bf16.xpose.msra.mxu0 0
        %2083 = vmatprep.subr.bf16.mxu0 0
        %2084 = vmatpush1.bf16.xpose.msra.mxu0 0
        %2085 = vmatprep.mubr.bf16.mxu0 0
        %2086 = vmatmul.mubr.bf16.gmra.mrb[0].mxu0 %v2048
        %v2087 = vpop.f32.mrb[0].mxu0
        %v2088 = vadd.f32 0.0, %v2087
        %v2089 = vpop.f32.mrb[0].mxu0
        %v2090 = vpop.f32.mrb[0].mxu0
        %v2091 = vadd.f32 0.0, %v2090
        %v2092 = vpop.f32.mrb[0].mxu0
        %2093 = vdwg.mxu0
        %2095 = vrot.lane.b32.xlu0 %v1822, 96
        %v2096 = vpop.permute.xlu0 %2095
        %2097 = vrot.lane.b32.xlu0 %v1822, 92
        %v2098 = vpop.permute.xlu0 %2097
        %v2100 = vsel %vm1838, %v2096, 0
        %v2103 = vsel %vm1838, %v2098, 0
        %2105 = vmatprep.subr.bf16.mxu0 0
        %2106 = vmatpush1.bf16.xpose.msra.mxu0 %v2103
        %2107 = vmatprep.subr.bf16.mxu0 0
        %2108 = vmatpush1.bf16.xpose.msra.mxu0 0
        %2109 = vmatprep.subr.bf16.mxu0 0
        %2110 = vmatpush1.bf16.xpose.msra.mxu0 0
        %2111 = vmatprep.subr.bf16.mxu0 0
        %2112 = vmatpush1.bf16.xpose.msra.mxu0 0
        %2113 = vmatprep.subr.bf16.mxu0 0
        %2114 = vmatpush1.bf16.xpose.msra.mxu0 0
        %2115 = vmatprep.subr.bf16.mxu0 0
        %2116 = vmatpush1.bf16.xpose.msra.mxu0 0
        %2117 = vmatprep.subr.bf16.mxu0 0
        %2118 = vmatpush1.bf16.xpose.msra.mxu0 0
        %2119 = vmatprep.subr.bf16.mxu0 0
        %2120 = vmatpush1.bf16.xpose.msra.mxu0 0
        %2121 = vmatprep.subr.bf16.mxu0 0
        %2122 = vmatpush1.bf16.xpose.msra.mxu0 0
        %2123 = vmatprep.subr.bf16.mxu0 0
        %2124 = vmatpush1.bf16.xpose.msra.mxu0 0
        %2125 = vmatprep.subr.bf16.mxu0 0
        %2126 = vmatpush1.bf16.xpose.msra.mxu0 0
        %2127 = vmatprep.subr.bf16.mxu0 0
        %2128 = vmatpush1.bf16.xpose.msra.mxu0 0
        %2129 = vmatprep.subr.bf16.mxu0 0
        %2130 = vmatpush1.bf16.xpose.msra.mxu0 0
        %2131 = vmatprep.subr.bf16.mxu0 0
        %2132 = vmatpush1.bf16.xpose.msra.mxu0 0
        %2133 = vmatprep.subr.bf16.mxu0 0
        %2134 = vmatpush1.bf16.xpose.msra.mxu0 0
        %2135 = vmatprep.subr.bf16.mxu0 0
        %2136 = vmatpush1.bf16.xpose.msra.mxu0 0
        %2137 = vmatprep.mubr.bf16.mxu0 0
        %2138 = vmatmul.mubr.bf16.gmra.mrb[0].mxu0 %v2100
        %v2139 = vpop.f32.mrb[0].mxu0
        %v2140 = vadd.f32 0.0, %v2139
        %v2141 = vpop.f32.mrb[0].mxu0
        %v2142 = vpop.f32.mrb[0].mxu0
        %v2143 = vadd.f32 0.0, %v2142
        %v2144 = vpop.f32.mrb[0].mxu0
        %2145 = vdwg.mxu0
        %2147 = vrot.lane.b32.xlu0 %v1823, 96
        %v2148 = vpop.permute.xlu0 %2147
        %2149 = vrot.lane.b32.xlu0 %v1823, 92
        %v2150 = vpop.permute.xlu0 %2149
        %v2152 = vsel %vm1838, %v2148, 0
        %v2155 = vsel %vm1838, %v2150, 0
        %2157 = vmatprep.subr.bf16.mxu0 0
        %2158 = vmatpush1.bf16.xpose.msra.mxu0 %v2155
        %2159 = vmatprep.subr.bf16.mxu0 0
        %2160 = vmatpush1.bf16.xpose.msra.mxu0 0
        %2161 = vmatprep.subr.bf16.mxu0 0
        %2162 = vmatpush1.bf16.xpose.msra.mxu0 0
        %2163 = vmatprep.subr.bf16.mxu0 0
        %2164 = vmatpush1.bf16.xpose.msra.mxu0 0
        %2165 = vmatprep.subr.bf16.mxu0 0
        %2166 = vmatpush1.bf16.xpose.msra.mxu0 0
        %2167 = vmatprep.subr.bf16.mxu0 0
        %2168 = vmatpush1.bf16.xpose.msra.mxu0 0
        %2169 = vmatprep.subr.bf16.mxu0 0
        %2170 = vmatpush1.bf16.xpose.msra.mxu0 0
        %2171 = vmatprep.subr.bf16.mxu0 0
        %2172 = vmatpush1.bf16.xpose.msra.mxu0 0
        %2173 = vmatprep.subr.bf16.mxu0 0
        %2174 = vmatpush1.bf16.xpose.msra.mxu0 0
        %2175 = vmatprep.subr.bf16.mxu0 0
        %2176 = vmatpush1.bf16.xpose.msra.mxu0 0
        %2177 = vmatprep.subr.bf16.mxu0 0
        %2178 = vmatpush1.bf16.xpose.msra.mxu0 0
        %2179 = vmatprep.subr.bf16.mxu0 0
        %2180 = vmatpush1.bf16.xpose.msra.mxu0 0
        %2181 = vmatprep.subr.bf16.mxu0 0
        %2182 = vmatpush1.bf16.xpose.msra.mxu0 0
        %2183 = vmatprep.subr.bf16.mxu0 0
        %2184 = vmatpush1.bf16.xpose.msra.mxu0 0
        %2185 = vmatprep.subr.bf16.mxu0 0
        %2186 = vmatpush1.bf16.xpose.msra.mxu0 0
        %2187 = vmatprep.subr.bf16.mxu0 0
        %2188 = vmatpush1.bf16.xpose.msra.mxu0 0
        %2189 = vmatprep.mubr.bf16.mxu0 0
        %2190 = vmatmul.mubr.bf16.gmra.mrb[0].mxu0 %v2152
        %v2191 = vpop.f32.mrb[0].mxu0
        %v2192 = vadd.f32 0.0, %v2191
        %v2193 = vpop.f32.mrb[0].mxu0
        %v2194 = vpop.f32.mrb[0].mxu0
        %v2195 = vadd.f32 0.0, %v2194
        %v2196 = vpop.f32.mrb[0].mxu0
        %2197 = vdwg.mxu0
        %2199 = vrot.lane.b32.xlu0 %v1824, 96
        %v2200 = vpop.permute.xlu0 %2199
        %2201 = vrot.lane.b32.xlu0 %v1824, 92
        %v2202 = vpop.permute.xlu0 %2201
        %v2204 = vsel %vm1838, %v2200, 0
        %v2207 = vsel %vm1838, %v2202, 0
        %2209 = vmatprep.subr.bf16.mxu0 0
        %2210 = vmatpush1.bf16.xpose.msra.mxu0 %v2207
        %2211 = vmatprep.subr.bf16.mxu0 0
        %2212 = vmatpush1.bf16.xpose.msra.mxu0 0
        %2213 = vmatprep.subr.bf16.mxu0 0
        %2214 = vmatpush1.bf16.xpose.msra.mxu0 0
        %2215 = vmatprep.subr.bf16.mxu0 0
        %2216 = vmatpush1.bf16.xpose.msra.mxu0 0
        %2217 = vmatprep.subr.bf16.mxu0 0
        %2218 = vmatpush1.bf16.xpose.msra.mxu0 0
        %2219 = vmatprep.subr.bf16.mxu0 0
        %2220 = vmatpush1.bf16.xpose.msra.mxu0 0
        %2221 = vmatprep.subr.bf16.mxu0 0
        %2222 = vmatpush1.bf16.xpose.msra.mxu0 0
        %2223 = vmatprep.subr.bf16.mxu0 0
        %2224 = vmatpush1.bf16.xpose.msra.mxu0 0
        %2225 = vmatprep.subr.bf16.mxu0 0
        %2226 = vmatpush1.bf16.xpose.msra.mxu0 0
        %2227 = vmatprep.subr.bf16.mxu0 0
        %2228 = vmatpush1.bf16.xpose.msra.mxu0 0
        %2229 = vmatprep.subr.bf16.mxu0 0
        %2230 = vmatpush1.bf16.xpose.msra.mxu0 0
        %2231 = vmatprep.subr.bf16.mxu0 0
        %2232 = vmatpush1.bf16.xpose.msra.mxu0 0
        %2233 = vmatprep.subr.bf16.mxu0 0
        %2234 = vmatpush1.bf16.xpose.msra.mxu0 0
        %2235 = vmatprep.subr.bf16.mxu0 0
        %2236 = vmatpush1.bf16.xpose.msra.mxu0 0
        %2237 = vmatprep.subr.bf16.mxu0 0
        %2238 = vmatpush1.bf16.xpose.msra.mxu0 0
        %2239 = vmatprep.subr.bf16.mxu0 0
        %2240 = vmatpush1.bf16.xpose.msra.mxu0 0
        %2241 = vmatprep.mubr.bf16.mxu0 0
        %2242 = vmatmul.mubr.bf16.gmra.mrb[0].mxu0 %v2204
        %v2243 = vpop.f32.mrb[0].mxu0
        %v2244 = vadd.f32 0.0, %v2243
        %v2245 = vpop.f32.mrb[0].mxu0
        %v2246 = vpop.f32.mrb[0].mxu0
        %v2247 = vadd.f32 0.0, %v2246
        %v2248 = vpop.f32.mrb[0].mxu0
        %2249 = vdwg.mxu0
        %2251 = vrot.lane.b32.xlu0 %v1825, 96
        %v2252 = vpop.permute.xlu0 %2251
        %2253 = vrot.lane.b32.xlu0 %v1825, 92
        %v2254 = vpop.permute.xlu0 %2253
        %v2256 = vsel %vm1838, %v2252, 0
        %v2259 = vsel %vm1838, %v2254, 0
        %2261 = vmatprep.subr.bf16.mxu0 0
        %2262 = vmatpush1.bf16.xpose.msra.mxu0 %v2259
        %2263 = vmatprep.subr.bf16.mxu0 0
        %2264 = vmatpush1.bf16.xpose.msra.mxu0 0
        %2265 = vmatprep.subr.bf16.mxu0 0
        %2266 = vmatpush1.bf16.xpose.msra.mxu0 0
        %2267 = vmatprep.subr.bf16.mxu0 0
        %2268 = vmatpush1.bf16.xpose.msra.mxu0 0
        %2269 = vmatprep.subr.bf16.mxu0 0
        %2270 = vmatpush1.bf16.xpose.msra.mxu0 0
        %2271 = vmatprep.subr.bf16.mxu0 0
        %2272 = vmatpush1.bf16.xpose.msra.mxu0 0
        %2273 = vmatprep.subr.bf16.mxu0 0
        %2274 = vmatpush1.bf16.xpose.msra.mxu0 0
        %2275 = vmatprep.subr.bf16.mxu0 0
        %2276 = vmatpush1.bf16.xpose.msra.mxu0 0
        %2277 = vmatprep.subr.bf16.mxu0 0
        %2278 = vmatpush1.bf16.xpose.msra.mxu0 0
        %2279 = vmatprep.subr.bf16.mxu0 0
        %2280 = vmatpush1.bf16.xpose.msra.mxu0 0
        %2281 = vmatprep.subr.bf16.mxu0 0
        %2282 = vmatpush1.bf16.xpose.msra.mxu0 0
        %2283 = vmatprep.subr.bf16.mxu0 0
        %2284 = vmatpush1.bf16.xpose.msra.mxu0 0
        %2285 = vmatprep.subr.bf16.mxu0 0
        %2286 = vmatpush1.bf16.xpose.msra.mxu0 0
        %2287 = vmatprep.subr.bf16.mxu0 0
        %2288 = vmatpush1.bf16.xpose.msra.mxu0 0
        %2289 = vmatprep.subr.bf16.mxu0 0
        %2290 = vmatpush1.bf16.xpose.msra.mxu0 0
        %2291 = vmatprep.subr.bf16.mxu0 0
        %2292 = vmatpush1.bf16.xpose.msra.mxu0 0
        %2293 = vmatprep.mubr.bf16.mxu0 0
        %2294 = vmatmul.mubr.bf16.gmra.mrb[0].mxu0 %v2256
        %v2295 = vpop.f32.mrb[0].mxu0
        %v2296 = vadd.f32 0.0, %v2295
        %v2297 = vpop.f32.mrb[0].mxu0
        %v2298 = vpop.f32.mrb[0].mxu0
        %v2299 = vadd.f32 0.0, %v2298
        %v2300 = vpop.f32.mrb[0].mxu0
        %2301 = vdwg.mxu0
        %2303 = vrot.lane.b32.xlu0 %v1826, 96
        %v2304 = vpop.permute.xlu0 %2303
        %2305 = vrot.lane.b32.xlu0 %v1826, 92
        %v2306 = vpop.permute.xlu0 %2305
        %v2308 = vsel %vm1838, %v2304, 0
        %v2311 = vsel %vm1838, %v2306, 0
        %2313 = vmatprep.subr.bf16.mxu0 0
        %2314 = vmatpush1.bf16.xpose.msra.mxu0 %v2311
        %2315 = vmatprep.subr.bf16.mxu0 0
        %2316 = vmatpush1.bf16.xpose.msra.mxu0 0
        %2317 = vmatprep.subr.bf16.mxu0 0
        %2318 = vmatpush1.bf16.xpose.msra.mxu0 0
        %2319 = vmatprep.subr.bf16.mxu0 0
        %2320 = vmatpush1.bf16.xpose.msra.mxu0 0
        %2321 = vmatprep.subr.bf16.mxu0 0
        %2322 = vmatpush1.bf16.xpose.msra.mxu0 0
        %2323 = vmatprep.subr.bf16.mxu0 0
        %2324 = vmatpush1.bf16.xpose.msra.mxu0 0
        %2325 = vmatprep.subr.bf16.mxu0 0
        %2326 = vmatpush1.bf16.xpose.msra.mxu0 0
        %2327 = vmatprep.subr.bf16.mxu0 0
        %2328 = vmatpush1.bf16.xpose.msra.mxu0 0
        %2329 = vmatprep.subr.bf16.mxu0 0
        %2330 = vmatpush1.bf16.xpose.msra.mxu0 0
        %2331 = vmatprep.subr.bf16.mxu0 0
        %2332 = vmatpush1.bf16.xpose.msra.mxu0 0
        %2333 = vmatprep.subr.bf16.mxu0 0
        %2334 = vmatpush1.bf16.xpose.msra.mxu0 0
        %2335 = vmatprep.subr.bf16.mxu0 0
        %2336 = vmatpush1.bf16.xpose.msra.mxu0 0
        %2337 = vmatprep.subr.bf16.mxu0 0
        %2338 = vmatpush1.bf16.xpose.msra.mxu0 0
        %2339 = vmatprep.subr.bf16.mxu0 0
        %2340 = vmatpush1.bf16.xpose.msra.mxu0 0
        %2341 = vmatprep.subr.bf16.mxu0 0
        %2342 = vmatpush1.bf16.xpose.msra.mxu0 0
        %2343 = vmatprep.subr.bf16.mxu0 0
        %2344 = vmatpush1.bf16.xpose.msra.mxu0 0
        %2345 = vmatprep.mubr.bf16.mxu0 0
        %2346 = vmatmul.mubr.bf16.gmra.mrb[0].mxu0 %v2308
        %v2347 = vpop.f32.mrb[0].mxu0
        %v2348 = vadd.f32 0.0, %v2347
        %v2349 = vpop.f32.mrb[0].mxu0
        %v2350 = vpop.f32.mrb[0].mxu0
        %v2351 = vadd.f32 0.0, %v2350
        %v2352 = vpop.f32.mrb[0].mxu0
        %2353 = vdwg.mxu0
        %2355 = vrot.lane.b32.xlu0 %v1827, 96
        %v2356 = vpop.permute.xlu0 %2355
        %2357 = vrot.lane.b32.xlu0 %v1827, 92
        %v2358 = vpop.permute.xlu0 %2357
        %v2360 = vsel %vm1838, %v2356, 0
        %v2363 = vsel %vm1838, %v2358, 0
        %2365 = vmatprep.subr.bf16.mxu0 0
        %2366 = vmatpush1.bf16.xpose.msra.mxu0 %v2363
        %2367 = vmatprep.subr.bf16.mxu0 0
        %2368 = vmatpush1.bf16.xpose.msra.mxu0 0
        %2369 = vmatprep.subr.bf16.mxu0 0
        %2370 = vmatpush1.bf16.xpose.msra.mxu0 0
        %2371 = vmatprep.subr.bf16.mxu0 0
        %2372 = vmatpush1.bf16.xpose.msra.mxu0 0
        %2373 = vmatprep.subr.bf16.mxu0 0
        %2374 = vmatpush1.bf16.xpose.msra.mxu0 0
        %2375 = vmatprep.subr.bf16.mxu0 0
        %2376 = vmatpush1.bf16.xpose.msra.mxu0 0
        %2377 = vmatprep.subr.bf16.mxu0 0
        %2378 = vmatpush1.bf16.xpose.msra.mxu0 0
        %2379 = vmatprep.subr.bf16.mxu0 0
        %2380 = vmatpush1.bf16.xpose.msra.mxu0 0
        %2381 = vmatprep.subr.bf16.mxu0 0
        %2382 = vmatpush1.bf16.xpose.msra.mxu0 0
        %2383 = vmatprep.subr.bf16.mxu0 0
        %2384 = vmatpush1.bf16.xpose.msra.mxu0 0
        %2385 = vmatprep.subr.bf16.mxu0 0
        %2386 = vmatpush1.bf16.xpose.msra.mxu0 0
        %2387 = vmatprep.subr.bf16.mxu0 0
        %2388 = vmatpush1.bf16.xpose.msra.mxu0 0
        %2389 = vmatprep.subr.bf16.mxu0 0
        %2390 = vmatpush1.bf16.xpose.msra.mxu0 0
        %2391 = vmatprep.subr.bf16.mxu0 0
        %2392 = vmatpush1.bf16.xpose.msra.mxu0 0
        %2393 = vmatprep.subr.bf16.mxu0 0
        %2394 = vmatpush1.bf16.xpose.msra.mxu0 0
        %2395 = vmatprep.subr.bf16.mxu0 0
        %2396 = vmatpush1.bf16.xpose.msra.mxu0 0
        %2397 = vmatprep.mubr.bf16.mxu0 0
        %2398 = vmatmul.mubr.bf16.gmra.mrb[0].mxu0 %v2360
        %v2399 = vpop.f32.mrb[0].mxu0
        %v2400 = vadd.f32 0.0, %v2399
        %v2401 = vpop.f32.mrb[0].mxu0
        %v2402 = vpop.f32.mrb[0].mxu0
        %v2403 = vadd.f32 0.0, %v2402
        %v2404 = vpop.f32.mrb[0].mxu0
        %2405 = vdwg.mxu0
        %2407 = vrot.lane.b32.xlu0 %v1828, 96
        %v2408 = vpop.permute.xlu0 %2407
        %2409 = vrot.lane.b32.xlu0 %v1828, 92
        %v2410 = vpop.permute.xlu0 %2409
        %v2412 = vsel %vm1838, %v2408, 0
        %v2415 = vsel %vm1838, %v2410, 0
        %2417 = vmatprep.subr.bf16.mxu0 0
        %2418 = vmatpush1.bf16.xpose.msra.mxu0 %v2415
        %2419 = vmatprep.subr.bf16.mxu0 0
        %2420 = vmatpush1.bf16.xpose.msra.mxu0 0
        %2421 = vmatprep.subr.bf16.mxu0 0
        %2422 = vmatpush1.bf16.xpose.msra.mxu0 0
        %2423 = vmatprep.subr.bf16.mxu0 0
        %2424 = vmatpush1.bf16.xpose.msra.mxu0 0
        %2425 = vmatprep.subr.bf16.mxu0 0
        %2426 = vmatpush1.bf16.xpose.msra.mxu0 0
        %2427 = vmatprep.subr.bf16.mxu0 0
        %2428 = vmatpush1.bf16.xpose.msra.mxu0 0
        %2429 = vmatprep.subr.bf16.mxu0 0
        %2430 = vmatpush1.bf16.xpose.msra.mxu0 0
        %2431 = vmatprep.subr.bf16.mxu0 0
        %2432 = vmatpush1.bf16.xpose.msra.mxu0 0
        %2433 = vmatprep.subr.bf16.mxu0 0
        %2434 = vmatpush1.bf16.xpose.msra.mxu0 0
        %2435 = vmatprep.subr.bf16.mxu0 0
        %2436 = vmatpush1.bf16.xpose.msra.mxu0 0
        %2437 = vmatprep.subr.bf16.mxu0 0
        %2438 = vmatpush1.bf16.xpose.msra.mxu0 0
        %2439 = vmatprep.subr.bf16.mxu0 0
        %2440 = vmatpush1.bf16.xpose.msra.mxu0 0
        %2441 = vmatprep.subr.bf16.mxu0 0
        %2442 = vmatpush1.bf16.xpose.msra.mxu0 0
        %2443 = vmatprep.subr.bf16.mxu0 0
        %2444 = vmatpush1.bf16.xpose.msra.mxu0 0
        %2445 = vmatprep.subr.bf16.mxu0 0
        %2446 = vmatpush1.bf16.xpose.msra.mxu0 0
        %2447 = vmatprep.subr.bf16.mxu0 0
        %2448 = vmatpush1.bf16.xpose.msra.mxu0 0
        %2449 = vmatprep.mubr.bf16.mxu0 0
        %2450 = vmatmul.mubr.bf16.gmra.mrb[0].mxu0 %v2412
        %v2451 = vpop.f32.mrb[0].mxu0
        %v2452 = vadd.f32 0.0, %v2451
        %v2453 = vpop.f32.mrb[0].mxu0
        %v2454 = vpop.f32.mrb[0].mxu0
        %v2455 = vadd.f32 0.0, %v2454
        %v2456 = vpop.f32.mrb[0].mxu0
        %2457 = vdwg.mxu0
        %2459 = vrot.lane.b32.xlu0 %v1829, 96
        %v2460 = vpop.permute.xlu0 %2459
        %2461 = vrot.lane.b32.xlu0 %v1829, 92
        %v2462 = vpop.permute.xlu0 %2461
        %v2464 = vsel %vm1838, %v2460, 0
        %v2467 = vsel %vm1838, %v2462, 0
        %2469 = vmatprep.subr.bf16.mxu0 0
        %2470 = vmatpush1.bf16.xpose.msra.mxu0 %v2467
        %2471 = vmatprep.subr.bf16.mxu0 0
        %2472 = vmatpush1.bf16.xpose.msra.mxu0 0
        %2473 = vmatprep.subr.bf16.mxu0 0
        %2474 = vmatpush1.bf16.xpose.msra.mxu0 0
        %2475 = vmatprep.subr.bf16.mxu0 0
        %2476 = vmatpush1.bf16.xpose.msra.mxu0 0
        %2477 = vmatprep.subr.bf16.mxu0 0
        %2478 = vmatpush1.bf16.xpose.msra.mxu0 0
        %2479 = vmatprep.subr.bf16.mxu0 0
        %2480 = vmatpush1.bf16.xpose.msra.mxu0 0
        %2481 = vmatprep.subr.bf16.mxu0 0
        %2482 = vmatpush1.bf16.xpose.msra.mxu0 0
        %2483 = vmatprep.subr.bf16.mxu0 0
        %2484 = vmatpush1.bf16.xpose.msra.mxu0 0
        %2485 = vmatprep.subr.bf16.mxu0 0
        %2486 = vmatpush1.bf16.xpose.msra.mxu0 0
        %2487 = vmatprep.subr.bf16.mxu0 0
        %2488 = vmatpush1.bf16.xpose.msra.mxu0 0
        %2489 = vmatprep.subr.bf16.mxu0 0
        %2490 = vmatpush1.bf16.xpose.msra.mxu0 0
        %2491 = vmatprep.subr.bf16.mxu0 0
        %2492 = vmatpush1.bf16.xpose.msra.mxu0 0
        %2493 = vmatprep.subr.bf16.mxu0 0
        %2494 = vmatpush1.bf16.xpose.msra.mxu0 0
        %2495 = vmatprep.subr.bf16.mxu0 0
        %2496 = vmatpush1.bf16.xpose.msra.mxu0 0
        %2497 = vmatprep.subr.bf16.mxu0 0
        %2498 = vmatpush1.bf16.xpose.msra.mxu0 0
        %2499 = vmatprep.subr.bf16.mxu0 0
        %2500 = vmatpush1.bf16.xpose.msra.mxu0 0
        %2501 = vmatprep.mubr.bf16.mxu0 0
        %2502 = vmatmul.mubr.bf16.gmra.mrb[0].mxu0 %v2464
        %v2503 = vpop.f32.mrb[0].mxu0
        %v2504 = vadd.f32 0.0, %v2503
        %v2505 = vpop.f32.mrb[0].mxu0
        %v2506 = vpop.f32.mrb[0].mxu0
        %v2507 = vadd.f32 0.0, %v2506
        %v2508 = vpop.f32.mrb[0].mxu0
        %2509 = vdwg.mxu0
        %2511 = vrot.lane.b32.xlu0 %v1830, 96
        %v2512 = vpop.permute.xlu0 %2511
        %2513 = vrot.lane.b32.xlu0 %v1830, 92
        %v2514 = vpop.permute.xlu0 %2513
        %v2516 = vsel %vm1838, %v2512, 0
        %v2519 = vsel %vm1838, %v2514, 0
        %2521 = vmatprep.subr.bf16.mxu0 0
        %2522 = vmatpush1.bf16.xpose.msra.mxu0 %v2519
        %2523 = vmatprep.subr.bf16.mxu0 0
        %2524 = vmatpush1.bf16.xpose.msra.mxu0 0
        %2525 = vmatprep.subr.bf16.mxu0 0
        %2526 = vmatpush1.bf16.xpose.msra.mxu0 0
        %2527 = vmatprep.subr.bf16.mxu0 0
        %2528 = vmatpush1.bf16.xpose.msra.mxu0 0
        %2529 = vmatprep.subr.bf16.mxu0 0
        %2530 = vmatpush1.bf16.xpose.msra.mxu0 0
        %2531 = vmatprep.subr.bf16.mxu0 0
        %2532 = vmatpush1.bf16.xpose.msra.mxu0 0
        %2533 = vmatprep.subr.bf16.mxu0 0
        %2534 = vmatpush1.bf16.xpose.msra.mxu0 0
        %2535 = vmatprep.subr.bf16.mxu0 0
        %2536 = vmatpush1.bf16.xpose.msra.mxu0 0
        %2537 = vmatprep.subr.bf16.mxu0 0
        %2538 = vmatpush1.bf16.xpose.msra.mxu0 0
        %2539 = vmatprep.subr.bf16.mxu0 0
        %2540 = vmatpush1.bf16.xpose.msra.mxu0 0
        %2541 = vmatprep.subr.bf16.mxu0 0
        %2542 = vmatpush1.bf16.xpose.msra.mxu0 0
        %2543 = vmatprep.subr.bf16.mxu0 0
        %2544 = vmatpush1.bf16.xpose.msra.mxu0 0
        %2545 = vmatprep.subr.bf16.mxu0 0
        %2546 = vmatpush1.bf16.xpose.msra.mxu0 0
        %2547 = vmatprep.subr.bf16.mxu0 0
        %2548 = vmatpush1.bf16.xpose.msra.mxu0 0
        %2549 = vmatprep.subr.bf16.mxu0 0
        %2550 = vmatpush1.bf16.xpose.msra.mxu0 0
        %2551 = vmatprep.subr.bf16.mxu0 0
        %2552 = vmatpush1.bf16.xpose.msra.mxu0 0
        %2553 = vmatprep.mubr.bf16.mxu0 0
        %2554 = vmatmul.mubr.bf16.gmra.mrb[0].mxu0 %v2516
        %v2555 = vpop.f32.mrb[0].mxu0
        %v2556 = vadd.f32 0.0, %v2555
        %v2557 = vpop.f32.mrb[0].mxu0
        %v2558 = vpop.f32.mrb[0].mxu0
        %v2559 = vadd.f32 0.0, %v2558
        %v2560 = vpop.f32.mrb[0].mxu0
        %2561 = vdwg.mxu0
        %2563 = vrot.lane.b32.xlu0 %v1831, 96
        %v2564 = vpop.permute.xlu0 %2563
        %2565 = vrot.lane.b32.xlu0 %v1831, 92
        %v2566 = vpop.permute.xlu0 %2565
        %v2568 = vsel %vm1838, %v2564, 0
        %v2571 = vsel %vm1838, %v2566, 0
        %2573 = vmatprep.subr.bf16.mxu0 0
        %2574 = vmatpush1.bf16.xpose.msra.mxu0 %v2571
        %2575 = vmatprep.subr.bf16.mxu0 0
        %2576 = vmatpush1.bf16.xpose.msra.mxu0 0
        %2577 = vmatprep.subr.bf16.mxu0 0
        %2578 = vmatpush1.bf16.xpose.msra.mxu0 0
        %2579 = vmatprep.subr.bf16.mxu0 0
        %2580 = vmatpush1.bf16.xpose.msra.mxu0 0
        %2581 = vmatprep.subr.bf16.mxu0 0
        %2582 = vmatpush1.bf16.xpose.msra.mxu0 0
        %2583 = vmatprep.subr.bf16.mxu0 0
        %2584 = vmatpush1.bf16.xpose.msra.mxu0 0
        %2585 = vmatprep.subr.bf16.mxu0 0
        %2586 = vmatpush1.bf16.xpose.msra.mxu0 0
        %2587 = vmatprep.subr.bf16.mxu0 0
        %2588 = vmatpush1.bf16.xpose.msra.mxu0 0
        %2589 = vmatprep.subr.bf16.mxu0 0
        %2590 = vmatpush1.bf16.xpose.msra.mxu0 0
        %2591 = vmatprep.subr.bf16.mxu0 0
        %2592 = vmatpush1.bf16.xpose.msra.mxu0 0
        %2593 = vmatprep.subr.bf16.mxu0 0
        %2594 = vmatpush1.bf16.xpose.msra.mxu0 0
        %2595 = vmatprep.subr.bf16.mxu0 0
        %2596 = vmatpush1.bf16.xpose.msra.mxu0 0
        %2597 = vmatprep.subr.bf16.mxu0 0
        %2598 = vmatpush1.bf16.xpose.msra.mxu0 0
        %2599 = vmatprep.subr.bf16.mxu0 0
        %2600 = vmatpush1.bf16.xpose.msra.mxu0 0
        %2601 = vmatprep.subr.bf16.mxu0 0
        %2602 = vmatpush1.bf16.xpose.msra.mxu0 0
        %2603 = vmatprep.subr.bf16.mxu0 0
        %2604 = vmatpush1.bf16.xpose.msra.mxu0 0
        %2605 = vmatprep.mubr.bf16.mxu0 0
        %2606 = vmatmul.mubr.bf16.gmra.mrb[0].mxu0 %v2568
        %v2607 = vpop.f32.mrb[0].mxu0
        %v2608 = vadd.f32 0.0, %v2607
        %v2609 = vpop.f32.mrb[0].mxu0
        %v2610 = vpop.f32.mrb[0].mxu0
        %v2611 = vadd.f32 0.0, %v2610
        %v2612 = vpop.f32.mrb[0].mxu0
        %2613 = vdwg.mxu0
        %2615 = vrot.lane.b32.xlu0 %v1832, 96
        %v2616 = vpop.permute.xlu0 %2615
        %2617 = vrot.lane.b32.xlu0 %v1832, 92
        %v2618 = vpop.permute.xlu0 %2617
        %v2620 = vsel %vm1838, %v2616, 0
        %v2623 = vsel %vm1838, %v2618, 0
        %2625 = vmatprep.subr.bf16.mxu0 0
        %2626 = vmatpush1.bf16.xpose.msra.mxu0 %v2623
        %2627 = vmatprep.subr.bf16.mxu0 0
        %2628 = vmatpush1.bf16.xpose.msra.mxu0 0
        %2629 = vmatprep.subr.bf16.mxu0 0
        %2630 = vmatpush1.bf16.xpose.msra.mxu0 0
        %2631 = vmatprep.subr.bf16.mxu0 0
        %2632 = vmatpush1.bf16.xpose.msra.mxu0 0
        %2633 = vmatprep.subr.bf16.mxu0 0
        %2634 = vmatpush1.bf16.xpose.msra.mxu0 0
        %2635 = vmatprep.subr.bf16.mxu0 0
        %2636 = vmatpush1.bf16.xpose.msra.mxu0 0
        %2637 = vmatprep.subr.bf16.mxu0 0
        %2638 = vmatpush1.bf16.xpose.msra.mxu0 0
        %2639 = vmatprep.subr.bf16.mxu0 0
        %2640 = vmatpush1.bf16.xpose.msra.mxu0 0
        %2641 = vmatprep.subr.bf16.mxu0 0
        %2642 = vmatpush1.bf16.xpose.msra.mxu0 0
        %2643 = vmatprep.subr.bf16.mxu0 0
        %2644 = vmatpush1.bf16.xpose.msra.mxu0 0
        %2645 = vmatprep.subr.bf16.mxu0 0
        %2646 = vmatpush1.bf16.xpose.msra.mxu0 0
        %2647 = vmatprep.subr.bf16.mxu0 0
        %2648 = vmatpush1.bf16.xpose.msra.mxu0 0
        %2649 = vmatprep.subr.bf16.mxu0 0
        %2650 = vmatpush1.bf16.xpose.msra.mxu0 0
        %2651 = vmatprep.subr.bf16.mxu0 0
        %2652 = vmatpush1.bf16.xpose.msra.mxu0 0
        %2653 = vmatprep.subr.bf16.mxu0 0
        %2654 = vmatpush1.bf16.xpose.msra.mxu0 0
        %2655 = vmatprep.subr.bf16.mxu0 0
        %2656 = vmatpush1.bf16.xpose.msra.mxu0 0
        %2657 = vmatprep.mubr.bf16.mxu0 0
        %2658 = vmatmul.mubr.bf16.gmra.mrb[0].mxu0 %v2620
        %v2659 = vpop.f32.mrb[0].mxu0
        %v2660 = vadd.f32 0.0, %v2659
        %v2661 = vpop.f32.mrb[0].mxu0
        %v2662 = vpop.f32.mrb[0].mxu0
        %v2663 = vadd.f32 0.0, %v2662
        %v2664 = vpop.f32.mrb[0].mxu0
        %2665 = vdwg.mxu0
        %vm2666 = vcmask 130048
        %v2667 = vsel %vm2666, %v1880, 0.0
        %v2668 = vsel %vm2666, %v1932, 0.0
        %v2669 = vadd.f32 %v2667, %v2668
        %v2670 = vsel %vm2666, %v1984, 0.0
        %v2671 = vadd.f32 %v2669, %v2670
        %v2672 = vsel %vm2666, %v2036, 0.0
        %v2673 = vadd.f32 %v2671, %v2672
        %v2674 = vsel %vm2666, %v2088, 0.0
        %v2675 = vadd.f32 %v2673, %v2674
        %v2676 = vsel %vm2666, %v2140, 0.0
        %v2677 = vadd.f32 %v2675, %v2676
        %v2678 = vsel %vm2666, %v2192, 0.0
        %v2679 = vadd.f32 %v2677, %v2678
        %v2680 = vsel %vm2666, %v2244, 0.0
        %v2681 = vadd.f32 %v2679, %v2680
        %v2682 = vsel %vm2666, %v2296, 0.0
        %v2683 = vadd.f32 %v2681, %v2682
        %v2684 = vsel %vm2666, %v2348, 0.0
        %v2685 = vadd.f32 %v2683, %v2684
        %v2686 = vsel %vm2666, %v2400, 0.0
        %v2687 = vadd.f32 %v2685, %v2686
        %v2688 = vsel %vm2666, %v2452, 0.0
        %v2689 = vadd.f32 %v2687, %v2688
        %v2690 = vsel %vm2666, %v2504, 0.0
        %v2691 = vadd.f32 %v2689, %v2690
        %v2692 = vsel %vm2666, %v2556, 0.0
        %v2693 = vadd.f32 %v2691, %v2692
        %v2694 = vsel %vm2666, %v2608, 0.0
        %v2695 = vadd.f32 %v2693, %v2694
        %v2696 = vsel %vm2666, %v2660, 0.0
        %v2697 = vadd.f32 %v2695, %v2696
        %v2698 = vsel %vm2666, %v1883, 0.0
        %v2699 = vsel %vm2666, %v1935, 0.0
        %v2700 = vadd.f32 %v2698, %v2699
        %v2701 = vsel %vm2666, %v1987, 0.0
        %v2702 = vadd.f32 %v2700, %v2701
        %v2703 = vsel %vm2666, %v2039, 0.0
        %v2704 = vadd.f32 %v2702, %v2703
        %v2705 = vsel %vm2666, %v2091, 0.0
        %v2706 = vadd.f32 %v2704, %v2705
        %v2707 = vsel %vm2666, %v2143, 0.0
        %v2708 = vadd.f32 %v2706, %v2707
        %v2709 = vsel %vm2666, %v2195, 0.0
        %v2710 = vadd.f32 %v2708, %v2709
        %v2711 = vsel %vm2666, %v2247, 0.0
        %v2712 = vadd.f32 %v2710, %v2711
        %v2713 = vsel %vm2666, %v2299, 0.0
        %v2714 = vadd.f32 %v2712, %v2713
        %v2715 = vsel %vm2666, %v2351, 0.0
        %v2716 = vadd.f32 %v2714, %v2715
        %v2717 = vsel %vm2666, %v2403, 0.0
        %v2718 = vadd.f32 %v2716, %v2717
        %v2719 = vsel %vm2666, %v2455, 0.0
        %v2720 = vadd.f32 %v2718, %v2719
        %v2721 = vsel %vm2666, %v2507, 0.0
        %v2722 = vadd.f32 %v2720, %v2721
        %v2723 = vsel %vm2666, %v2559, 0.0
        %v2724 = vadd.f32 %v2722, %v2723
        %v2725 = vsel %vm2666, %v2611, 0.0
        %v2726 = vadd.f32 %v2724, %v2725
        %v2727 = vsel %vm2666, %v2663, 0.0
        %v2728 = vadd.f32 %v2726, %v2727
        %v2729 = vsel %vm2666, %v2697, -inf
        %2730 = vmax.xlane.f32.xlu0 %v2729
        %v2731 = vpop.xlane.xlu0 %2730
        %v2732 = vsel %vm2666, %v2728, -inf
        %2733 = vmax.xlane.f32.xlu0 %v2732
        %v2734 = vpop.xlane.xlu0 %2733
        %v2735 = vsub.f32 %v2697, %v2731
        %v2736 = vsub.f32 %v2728, %v2734
        %v2737 = vmul.f32 %v2735, 1.442695
        %v2738 = vpow.pop %v2737
        %v2739 = vmul.f32 %v2736, 1.442695
        %v2740 = vpow.pop %v2739
        %v2741 = vsel %vm2666, %v2738, 0.0
        %2742 = vadd.xlane.f32.xlu0 %v2741
        %v2743 = vpop.xlane.xlu0 %2742
        %v2744 = vsel %vm2666, %v2740, 0.0
        %2745 = vadd.xlane.f32.xlu0 %v2744
        %v2746 = vpop.xlane.xlu0 %2745
        %v2747 = vrcp.pop %v2743
        %v2748 = vrcp.pop %v2746
        %v2749 = vstv %s1083
        %v2750 = vmul.f32 %v2749, %v2747
        %v2751 = vmul.f32 %v2749, %v2748
        %v2752 = vmul.f32 %v2750, %v2738
        %v2753 = vmul.f32 %v2751, %v2740
        %v2754 = vpack.c.bf16 %v2753, %v2752
        %v2756 = vsel %vm2666, %v2754, 0
        %2758 = vmatprep.subr.bf16.mxu0 0
        %2759 = vmatpush1.bf16.msra.mxu0 %v1817
        %2760 = vmatprep.subr.bf16.mxu0 0
        %2761 = vmatpush1.bf16.msra.mxu0 0
        %2762 = vmatprep.subr.bf16.mxu0 0
        %2763 = vmatpush1.bf16.msra.mxu0 0
        %2764 = vmatprep.subr.bf16.mxu0 0
        %2765 = vmatpush1.bf16.msra.mxu0 0
        %2766 = vmatprep.subr.bf16.mxu0 0
        %2767 = vmatpush1.bf16.msra.mxu0 0
        %2768 = vmatprep.subr.bf16.mxu0 0
        %2769 = vmatpush1.bf16.msra.mxu0 0
        %2770 = vmatprep.subr.bf16.mxu0 0
        %2771 = vmatpush1.bf16.msra.mxu0 0
        %2772 = vmatprep.subr.bf16.mxu0 0
        %2773 = vmatpush1.bf16.msra.mxu0 0
        %2774 = vmatprep.subr.bf16.mxu0 0
        %2775 = vmatpush1.bf16.msra.mxu0 0
        %2776 = vmatprep.subr.bf16.mxu0 0
        %2777 = vmatpush1.bf16.msra.mxu0 0
        %2778 = vmatprep.subr.bf16.mxu0 0
        %2779 = vmatpush1.bf16.msra.mxu0 0
        %2780 = vmatprep.subr.bf16.mxu0 0
        %2781 = vmatpush1.bf16.msra.mxu0 0
        %2782 = vmatprep.subr.bf16.mxu0 0
        %2783 = vmatpush1.bf16.msra.mxu0 0
        %2784 = vmatprep.subr.bf16.mxu0 0
        %2785 = vmatpush1.bf16.msra.mxu0 0
        %2786 = vmatprep.subr.bf16.mxu0 0
        %2787 = vmatpush1.bf16.msra.mxu0 0
        %2788 = vmatprep.subr.bf16.mxu0 0
        %2789 = vmatpush1.bf16.msra.mxu0 0
        %2790 = vmatprep.mubr.bf16.mxu0 0
        %2791 = vmatmul.mubr.bf16.gmra.mrb[0].mxu0 %v2756
        %v2792 = vpop.f32.mrb[0].mxu0
        %v2793 = vadd.f32 %v338, %v2792
        %v2794 = vpop.f32.mrb[0].mxu0
        %v2795 = vpop.f32.mrb[0].mxu0
        %v2796 = vadd.f32 %v341, %v2795
        %v2797 = vpop.f32.mrb[0].mxu0
        %2798 = vdwg.mxu0
        %2799 = vmatprep.subr.bf16.mxu0 0
        %2800 = vmatpush1.bf16.msra.mxu0 %v1818
        %2801 = vmatprep.subr.bf16.mxu0 0
        %2802 = vmatpush1.bf16.msra.mxu0 0
        %2803 = vmatprep.subr.bf16.mxu0 0
        %2804 = vmatpush1.bf16.msra.mxu0 0
        %2805 = vmatprep.subr.bf16.mxu0 0
        %2806 = vmatpush1.bf16.msra.mxu0 0
        %2807 = vmatprep.subr.bf16.mxu0 0
        %2808 = vmatpush1.bf16.msra.mxu0 0
        %2809 = vmatprep.subr.bf16.mxu0 0
        %2810 = vmatpush1.bf16.msra.mxu0 0
        %2811 = vmatprep.subr.bf16.mxu0 0
        %2812 = vmatpush1.bf16.msra.mxu0 0
        %2813 = vmatprep.subr.bf16.mxu0 0
        %2814 = vmatpush1.bf16.msra.mxu0 0
        %2815 = vmatprep.subr.bf16.mxu0 0
        %2816 = vmatpush1.bf16.msra.mxu0 0
        %2817 = vmatprep.subr.bf16.mxu0 0
        %2818 = vmatpush1.bf16.msra.mxu0 0
        %2819 = vmatprep.subr.bf16.mxu0 0
        %2820 = vmatpush1.bf16.msra.mxu0 0
        %2821 = vmatprep.subr.bf16.mxu0 0
        %2822 = vmatpush1.bf16.msra.mxu0 0
        %2823 = vmatprep.subr.bf16.mxu0 0
        %2824 = vmatpush1.bf16.msra.mxu0 0
        %2825 = vmatprep.subr.bf16.mxu0 0
        %2826 = vmatpush1.bf16.msra.mxu0 0
        %2827 = vmatprep.subr.bf16.mxu0 0
        %2828 = vmatpush1.bf16.msra.mxu0 0
        %2829 = vmatprep.subr.bf16.mxu0 0
        %2830 = vmatpush1.bf16.msra.mxu0 0
        %2831 = vmatprep.mubr.bf16.mxu0 0
        %2832 = vmatmul.mubr.bf16.gmra.mrb[0].mxu0 %v2756
        %v2833 = vpop.f32.mrb[0].mxu0
        %v2834 = vadd.f32 %v387, %v2833
        %v2835 = vpop.f32.mrb[0].mxu0
        %v2836 = vpop.f32.mrb[0].mxu0
        %v2837 = vadd.f32 %v390, %v2836
        %v2838 = vpop.f32.mrb[0].mxu0
        %2839 = vdwg.mxu0
        %2840 = vmatprep.subr.bf16.mxu0 0
        %2841 = vmatpush1.bf16.msra.mxu0 %v1819
        %2842 = vmatprep.subr.bf16.mxu0 0
        %2843 = vmatpush1.bf16.msra.mxu0 0
        %2844 = vmatprep.subr.bf16.mxu0 0
        %2845 = vmatpush1.bf16.msra.mxu0 0
        %2846 = vmatprep.subr.bf16.mxu0 0
        %2847 = vmatpush1.bf16.msra.mxu0 0
        %2848 = vmatprep.subr.bf16.mxu0 0
        %2849 = vmatpush1.bf16.msra.mxu0 0
        %2850 = vmatprep.subr.bf16.mxu0 0
        %2851 = vmatpush1.bf16.msra.mxu0 0
        %2852 = vmatprep.subr.bf16.mxu0 0
        %2853 = vmatpush1.bf16.msra.mxu0 0
        %2854 = vmatprep.subr.bf16.mxu0 0
        %2855 = vmatpush1.bf16.msra.mxu0 0
        %2856 = vmatprep.subr.bf16.mxu0 0
        %2857 = vmatpush1.bf16.msra.mxu0 0
        %2858 = vmatprep.subr.bf16.mxu0 0
        %2859 = vmatpush1.bf16.msra.mxu0 0
        %2860 = vmatprep.subr.bf16.mxu0 0
        %2861 = vmatpush1.bf16.msra.mxu0 0
        %2862 = vmatprep.subr.bf16.mxu0 0
        %2863 = vmatpush1.bf16.msra.mxu0 0
        %2864 = vmatprep.subr.bf16.mxu0 0
        %2865 = vmatpush1.bf16.msra.mxu0 0
        %2866 = vmatprep.subr.bf16.mxu0 0
        %2867 = vmatpush1.bf16.msra.mxu0 0
        %2868 = vmatprep.subr.bf16.mxu0 0
        %2869 = vmatpush1.bf16.msra.mxu0 0
        %2870 = vmatprep.subr.bf16.mxu0 0
        %2871 = vmatpush1.bf16.msra.mxu0 0
        %2872 = vmatprep.mubr.bf16.mxu0 0
        %2873 = vmatmul.mubr.bf16.gmra.mrb[0].mxu0 %v2756
        %v2874 = vpop.f32.mrb[0].mxu0
        %v2875 = vadd.f32 %v436, %v2874
        %v2876 = vpop.f32.mrb[0].mxu0
        %v2877 = vpop.f32.mrb[0].mxu0
        %v2878 = vadd.f32 %v439, %v2877
        %v2879 = vpop.f32.mrb[0].mxu0
        %2880 = vdwg.mxu0
        %2881 = vmatprep.subr.bf16.mxu0 0
        %2882 = vmatpush1.bf16.msra.mxu0 %v1820
        %2883 = vmatprep.subr.bf16.mxu0 0
        %2884 = vmatpush1.bf16.msra.mxu0 0
        %2885 = vmatprep.subr.bf16.mxu0 0
        %2886 = vmatpush1.bf16.msra.mxu0 0
        %2887 = vmatprep.subr.bf16.mxu0 0
        %2888 = vmatpush1.bf16.msra.mxu0 0
        %2889 = vmatprep.subr.bf16.mxu0 0
        %2890 = vmatpush1.bf16.msra.mxu0 0
        %2891 = vmatprep.subr.bf16.mxu0 0
        %2892 = vmatpush1.bf16.msra.mxu0 0
        %2893 = vmatprep.subr.bf16.mxu0 0
        %2894 = vmatpush1.bf16.msra.mxu0 0
        %2895 = vmatprep.subr.bf16.mxu0 0
        %2896 = vmatpush1.bf16.msra.mxu0 0
        %2897 = vmatprep.subr.bf16.mxu0 0
        %2898 = vmatpush1.bf16.msra.mxu0 0
        %2899 = vmatprep.subr.bf16.mxu0 0
        %2900 = vmatpush1.bf16.msra.mxu0 0
        %2901 = vmatprep.subr.bf16.mxu0 0
        %2902 = vmatpush1.bf16.msra.mxu0 0
        %2903 = vmatprep.subr.bf16.mxu0 0
        %2904 = vmatpush1.bf16.msra.mxu0 0
        %2905 = vmatprep.subr.bf16.mxu0 0
        %2906 = vmatpush1.bf16.msra.mxu0 0
        %2907 = vmatprep.subr.bf16.mxu0 0
        %2908 = vmatpush1.bf16.msra.mxu0 0
        %2909 = vmatprep.subr.bf16.mxu0 0
        %2910 = vmatpush1.bf16.msra.mxu0 0
        %2911 = vmatprep.subr.bf16.mxu0 0
        %2912 = vmatpush1.bf16.msra.mxu0 0
        %2913 = vmatprep.mubr.bf16.mxu0 0
        %2914 = vmatmul.mubr.bf16.gmra.mrb[0].mxu0 %v2756
        %v2915 = vpop.f32.mrb[0].mxu0
        %v2916 = vadd.f32 %v485, %v2915
        %v2917 = vpop.f32.mrb[0].mxu0
        %v2918 = vpop.f32.mrb[0].mxu0
        %v2919 = vadd.f32 %v488, %v2918
        %v2920 = vpop.f32.mrb[0].mxu0
        %2921 = vdwg.mxu0
        %2922 = vmatprep.subr.bf16.mxu0 0
        %2923 = vmatpush1.bf16.msra.mxu0 %v1821
        %2924 = vmatprep.subr.bf16.mxu0 0
        %2925 = vmatpush1.bf16.msra.mxu0 0
        %2926 = vmatprep.subr.bf16.mxu0 0
        %2927 = vmatpush1.bf16.msra.mxu0 0
        %2928 = vmatprep.subr.bf16.mxu0 0
        %2929 = vmatpush1.bf16.msra.mxu0 0
        %2930 = vmatprep.subr.bf16.mxu0 0
        %2931 = vmatpush1.bf16.msra.mxu0 0
        %2932 = vmatprep.subr.bf16.mxu0 0
        %2933 = vmatpush1.bf16.msra.mxu0 0
        %2934 = vmatprep.subr.bf16.mxu0 0
        %2935 = vmatpush1.bf16.msra.mxu0 0
        %2936 = vmatprep.subr.bf16.mxu0 0
        %2937 = vmatpush1.bf16.msra.mxu0 0
        %2938 = vmatprep.subr.bf16.mxu0 0
        %2939 = vmatpush1.bf16.msra.mxu0 0
        %2940 = vmatprep.subr.bf16.mxu0 0
        %2941 = vmatpush1.bf16.msra.mxu0 0
        %2942 = vmatprep.subr.bf16.mxu0 0
        %2943 = vmatpush1.bf16.msra.mxu0 0
        %2944 = vmatprep.subr.bf16.mxu0 0
        %2945 = vmatpush1.bf16.msra.mxu0 0
        %2946 = vmatprep.subr.bf16.mxu0 0
        %2947 = vmatpush1.bf16.msra.mxu0 0
        %2948 = vmatprep.subr.bf16.mxu0 0
        %2949 = vmatpush1.bf16.msra.mxu0 0
        %2950 = vmatprep.subr.bf16.mxu0 0
        %2951 = vmatpush1.bf16.msra.mxu0 0
        %2952 = vmatprep.subr.bf16.mxu0 0
        %2953 = vmatpush1.bf16.msra.mxu0 0
        %2954 = vmatprep.mubr.bf16.mxu0 0
        %2955 = vmatmul.mubr.bf16.gmra.mrb[0].mxu0 %v2756
        %v2956 = vpop.f32.mrb[0].mxu0
        %v2957 = vadd.f32 %v534, %v2956
        %v2958 = vpop.f32.mrb[0].mxu0
        %v2959 = vpop.f32.mrb[0].mxu0
        %v2960 = vadd.f32 %v537, %v2959
        %v2961 = vpop.f32.mrb[0].mxu0
        %2962 = vdwg.mxu0
        %2963 = vmatprep.subr.bf16.mxu0 0
        %2964 = vmatpush1.bf16.msra.mxu0 %v1822
        %2965 = vmatprep.subr.bf16.mxu0 0
        %2966 = vmatpush1.bf16.msra.mxu0 0
        %2967 = vmatprep.subr.bf16.mxu0 0
        %2968 = vmatpush1.bf16.msra.mxu0 0
        %2969 = vmatprep.subr.bf16.mxu0 0
        %2970 = vmatpush1.bf16.msra.mxu0 0
        %2971 = vmatprep.subr.bf16.mxu0 0
        %2972 = vmatpush1.bf16.msra.mxu0 0
        %2973 = vmatprep.subr.bf16.mxu0 0
        %2974 = vmatpush1.bf16.msra.mxu0 0
        %2975 = vmatprep.subr.bf16.mxu0 0
        %2976 = vmatpush1.bf16.msra.mxu0 0
        %2977 = vmatprep.subr.bf16.mxu0 0
        %2978 = vmatpush1.bf16.msra.mxu0 0
        %2979 = vmatprep.subr.bf16.mxu0 0
        %2980 = vmatpush1.bf16.msra.mxu0 0
        %2981 = vmatprep.subr.bf16.mxu0 0
        %2982 = vmatpush1.bf16.msra.mxu0 0
        %2983 = vmatprep.subr.bf16.mxu0 0
        %2984 = vmatpush1.bf16.msra.mxu0 0
        %2985 = vmatprep.subr.bf16.mxu0 0
        %2986 = vmatpush1.bf16.msra.mxu0 0
        %2987 = vmatprep.subr.bf16.mxu0 0
        %2988 = vmatpush1.bf16.msra.mxu0 0
        %2989 = vmatprep.subr.bf16.mxu0 0
        %2990 = vmatpush1.bf16.msra.mxu0 0
        %2991 = vmatprep.subr.bf16.mxu0 0
        %2992 = vmatpush1.bf16.msra.mxu0 0
        %2993 = vmatprep.subr.bf16.mxu0 0
        %2994 = vmatpush1.bf16.msra.mxu0 0
        %2995 = vmatprep.mubr.bf16.mxu0 0
        %2996 = vmatmul.mubr.bf16.gmra.mrb[0].mxu0 %v2756
        %v2997 = vpop.f32.mrb[0].mxu0
        %v2998 = vadd.f32 %v583, %v2997
        %v2999 = vpop.f32.mrb[0].mxu0
        %v3000 = vpop.f32.mrb[0].mxu0
        %v3001 = vadd.f32 %v586, %v3000
        %v3002 = vpop.f32.mrb[0].mxu0
        %3003 = vdwg.mxu0
        %3004 = vmatprep.subr.bf16.mxu0 0
        %3005 = vmatpush1.bf16.msra.mxu0 %v1823
        %3006 = vmatprep.subr.bf16.mxu0 0
        %3007 = vmatpush1.bf16.msra.mxu0 0
        %3008 = vmatprep.subr.bf16.mxu0 0
        %3009 = vmatpush1.bf16.msra.mxu0 0
        %3010 = vmatprep.subr.bf16.mxu0 0
        %3011 = vmatpush1.bf16.msra.mxu0 0
        %3012 = vmatprep.subr.bf16.mxu0 0
        %3013 = vmatpush1.bf16.msra.mxu0 0
        %3014 = vmatprep.subr.bf16.mxu0 0
        %3015 = vmatpush1.bf16.msra.mxu0 0
        %3016 = vmatprep.subr.bf16.mxu0 0
        %3017 = vmatpush1.bf16.msra.mxu0 0
        %3018 = vmatprep.subr.bf16.mxu0 0
        %3019 = vmatpush1.bf16.msra.mxu0 0
        %3020 = vmatprep.subr.bf16.mxu0 0
        %3021 = vmatpush1.bf16.msra.mxu0 0
        %3022 = vmatprep.subr.bf16.mxu0 0
        %3023 = vmatpush1.bf16.msra.mxu0 0
        %3024 = vmatprep.subr.bf16.mxu0 0
        %3025 = vmatpush1.bf16.msra.mxu0 0
        %3026 = vmatprep.subr.bf16.mxu0 0
        %3027 = vmatpush1.bf16.msra.mxu0 0
        %3028 = vmatprep.subr.bf16.mxu0 0
        %3029 = vmatpush1.bf16.msra.mxu0 0
        %3030 = vmatprep.subr.bf16.mxu0 0
        %3031 = vmatpush1.bf16.msra.mxu0 0
        %3032 = vmatprep.subr.bf16.mxu0 0
        %3033 = vmatpush1.bf16.msra.mxu0 0
        %3034 = vmatprep.subr.bf16.mxu0 0
        %3035 = vmatpush1.bf16.msra.mxu0 0
        %3036 = vmatprep.mubr.bf16.mxu0 0
        %3037 = vmatmul.mubr.bf16.gmra.mrb[0].mxu0 %v2756
        %v3038 = vpop.f32.mrb[0].mxu0
        %v3039 = vadd.f32 %v632, %v3038
        %v3040 = vpop.f32.mrb[0].mxu0
        %v3041 = vpop.f32.mrb[0].mxu0
        %v3042 = vadd.f32 %v635, %v3041
        %v3043 = vpop.f32.mrb[0].mxu0
        %3044 = vdwg.mxu0
        %3045 = vmatprep.subr.bf16.mxu0 0
        %3046 = vmatpush1.bf16.msra.mxu0 %v1824
        %3047 = vmatprep.subr.bf16.mxu0 0
        %3048 = vmatpush1.bf16.msra.mxu0 0
        %3049 = vmatprep.subr.bf16.mxu0 0
        %3050 = vmatpush1.bf16.msra.mxu0 0
        %3051 = vmatprep.subr.bf16.mxu0 0
        %3052 = vmatpush1.bf16.msra.mxu0 0
        %3053 = vmatprep.subr.bf16.mxu0 0
        %3054 = vmatpush1.bf16.msra.mxu0 0
        %3055 = vmatprep.subr.bf16.mxu0 0
        %3056 = vmatpush1.bf16.msra.mxu0 0
        %3057 = vmatprep.subr.bf16.mxu0 0
        %3058 = vmatpush1.bf16.msra.mxu0 0
        %3059 = vmatprep.subr.bf16.mxu0 0
        %3060 = vmatpush1.bf16.msra.mxu0 0
        %3061 = vmatprep.subr.bf16.mxu0 0
        %3062 = vmatpush1.bf16.msra.mxu0 0
        %3063 = vmatprep.subr.bf16.mxu0 0
        %3064 = vmatpush1.bf16.msra.mxu0 0
        %3065 = vmatprep.subr.bf16.mxu0 0
        %3066 = vmatpush1.bf16.msra.mxu0 0
        %3067 = vmatprep.subr.bf16.mxu0 0
        %3068 = vmatpush1.bf16.msra.mxu0 0
        %3069 = vmatprep.subr.bf16.mxu0 0
        %3070 = vmatpush1.bf16.msra.mxu0 0
        %3071 = vmatprep.subr.bf16.mxu0 0
        %3072 = vmatpush1.bf16.msra.mxu0 0
        %3073 = vmatprep.subr.bf16.mxu0 0
        %3074 = vmatpush1.bf16.msra.mxu0 0
        %3075 = vmatprep.subr.bf16.mxu0 0
        %3076 = vmatpush1.bf16.msra.mxu0 0
        %3077 = vmatprep.mubr.bf16.mxu0 0
        %3078 = vmatmul.mubr.bf16.gmra.mrb[0].mxu0 %v2756
        %v3079 = vpop.f32.mrb[0].mxu0
        %v3080 = vadd.f32 %v681, %v3079
        %v3081 = vpop.f32.mrb[0].mxu0
        %v3082 = vpop.f32.mrb[0].mxu0
        %v3083 = vadd.f32 %v684, %v3082
        %v3084 = vpop.f32.mrb[0].mxu0
        %3085 = vdwg.mxu0
        %3086 = vmatprep.subr.bf16.mxu0 0
        %3087 = vmatpush1.bf16.msra.mxu0 %v1825
        %3088 = vmatprep.subr.bf16.mxu0 0
        %3089 = vmatpush1.bf16.msra.mxu0 0
        %3090 = vmatprep.subr.bf16.mxu0 0
        %3091 = vmatpush1.bf16.msra.mxu0 0
        %3092 = vmatprep.subr.bf16.mxu0 0
        %3093 = vmatpush1.bf16.msra.mxu0 0
        %3094 = vmatprep.subr.bf16.mxu0 0
        %3095 = vmatpush1.bf16.msra.mxu0 0
        %3096 = vmatprep.subr.bf16.mxu0 0
        %3097 = vmatpush1.bf16.msra.mxu0 0
        %3098 = vmatprep.subr.bf16.mxu0 0
        %3099 = vmatpush1.bf16.msra.mxu0 0
        %3100 = vmatprep.subr.bf16.mxu0 0
        %3101 = vmatpush1.bf16.msra.mxu0 0
        %3102 = vmatprep.subr.bf16.mxu0 0
        %3103 = vmatpush1.bf16.msra.mxu0 0
        %3104 = vmatprep.subr.bf16.mxu0 0
        %3105 = vmatpush1.bf16.msra.mxu0 0
        %3106 = vmatprep.subr.bf16.mxu0 0
        %3107 = vmatpush1.bf16.msra.mxu0 0
        %3108 = vmatprep.subr.bf16.mxu0 0
        %3109 = vmatpush1.bf16.msra.mxu0 0
        %3110 = vmatprep.subr.bf16.mxu0 0
        %3111 = vmatpush1.bf16.msra.mxu0 0
        %3112 = vmatprep.subr.bf16.mxu0 0
        %3113 = vmatpush1.bf16.msra.mxu0 0
        %3114 = vmatprep.subr.bf16.mxu0 0
        %3115 = vmatpush1.bf16.msra.mxu0 0
        %3116 = vmatprep.subr.bf16.mxu0 0
        %3117 = vmatpush1.bf16.msra.mxu0 0
        %3118 = vmatprep.mubr.bf16.mxu0 0
        %3119 = vmatmul.mubr.bf16.gmra.mrb[0].mxu0 %v2756
        %v3120 = vpop.f32.mrb[0].mxu0
        %v3121 = vadd.f32 %v730, %v3120
        %v3122 = vpop.f32.mrb[0].mxu0
        %v3123 = vpop.f32.mrb[0].mxu0
        %v3124 = vadd.f32 %v733, %v3123
        %v3125 = vpop.f32.mrb[0].mxu0
        %3126 = vdwg.mxu0
        %3127 = vmatprep.subr.bf16.mxu0 0
        %3128 = vmatpush1.bf16.msra.mxu0 %v1826
        %3129 = vmatprep.subr.bf16.mxu0 0
        %3130 = vmatpush1.bf16.msra.mxu0 0
        %3131 = vmatprep.subr.bf16.mxu0 0
        %3132 = vmatpush1.bf16.msra.mxu0 0
        %3133 = vmatprep.subr.bf16.mxu0 0
        %3134 = vmatpush1.bf16.msra.mxu0 0
        %3135 = vmatprep.subr.bf16.mxu0 0
        %3136 = vmatpush1.bf16.msra.mxu0 0
        %3137 = vmatprep.subr.bf16.mxu0 0
        %3138 = vmatpush1.bf16.msra.mxu0 0
        %3139 = vmatprep.subr.bf16.mxu0 0
        %3140 = vmatpush1.bf16.msra.mxu0 0
        %3141 = vmatprep.subr.bf16.mxu0 0
        %3142 = vmatpush1.bf16.msra.mxu0 0
        %3143 = vmatprep.subr.bf16.mxu0 0
        %3144 = vmatpush1.bf16.msra.mxu0 0
        %3145 = vmatprep.subr.bf16.mxu0 0
        %3146 = vmatpush1.bf16.msra.mxu0 0
        %3147 = vmatprep.subr.bf16.mxu0 0
        %3148 = vmatpush1.bf16.msra.mxu0 0
        %3149 = vmatprep.subr.bf16.mxu0 0
        %3150 = vmatpush1.bf16.msra.mxu0 0
        %3151 = vmatprep.subr.bf16.mxu0 0
        %3152 = vmatpush1.bf16.msra.mxu0 0
        %3153 = vmatprep.subr.bf16.mxu0 0
        %3154 = vmatpush1.bf16.msra.mxu0 0
        %3155 = vmatprep.subr.bf16.mxu0 0
        %3156 = vmatpush1.bf16.msra.mxu0 0
        %3157 = vmatprep.subr.bf16.mxu0 0
        %3158 = vmatpush1.bf16.msra.mxu0 0
        %3159 = vmatprep.mubr.bf16.mxu0 0
        %3160 = vmatmul.mubr.bf16.gmra.mrb[0].mxu0 %v2756
        %v3161 = vpop.f32.mrb[0].mxu0
        %v3162 = vadd.f32 %v779, %v3161
        %v3163 = vpop.f32.mrb[0].mxu0
        %v3164 = vpop.f32.mrb[0].mxu0
        %v3165 = vadd.f32 %v782, %v3164
        %v3166 = vpop.f32.mrb[0].mxu0
        %3167 = vdwg.mxu0
        %3168 = vmatprep.subr.bf16.mxu0 0
        %3169 = vmatpush1.bf16.msra.mxu0 %v1827
        %3170 = vmatprep.subr.bf16.mxu0 0
        %3171 = vmatpush1.bf16.msra.mxu0 0
        %3172 = vmatprep.subr.bf16.mxu0 0
        %3173 = vmatpush1.bf16.msra.mxu0 0
        %3174 = vmatprep.subr.bf16.mxu0 0
        %3175 = vmatpush1.bf16.msra.mxu0 0
        %3176 = vmatprep.subr.bf16.mxu0 0
        %3177 = vmatpush1.bf16.msra.mxu0 0
        %3178 = vmatprep.subr.bf16.mxu0 0
        %3179 = vmatpush1.bf16.msra.mxu0 0
        %3180 = vmatprep.subr.bf16.mxu0 0
        %3181 = vmatpush1.bf16.msra.mxu0 0
        %3182 = vmatprep.subr.bf16.mxu0 0
        %3183 = vmatpush1.bf16.msra.mxu0 0
        %3184 = vmatprep.subr.bf16.mxu0 0
        %3185 = vmatpush1.bf16.msra.mxu0 0
        %3186 = vmatprep.subr.bf16.mxu0 0
        %3187 = vmatpush1.bf16.msra.mxu0 0
        %3188 = vmatprep.subr.bf16.mxu0 0
        %3189 = vmatpush1.bf16.msra.mxu0 0
        %3190 = vmatprep.subr.bf16.mxu0 0
        %3191 = vmatpush1.bf16.msra.mxu0 0
        %3192 = vmatprep.subr.bf16.mxu0 0
        %3193 = vmatpush1.bf16.msra.mxu0 0
        %3194 = vmatprep.subr.bf16.mxu0 0
        %3195 = vmatpush1.bf16.msra.mxu0 0
        %3196 = vmatprep.subr.bf16.mxu0 0
        %3197 = vmatpush1.bf16.msra.mxu0 0
        %3198 = vmatprep.subr.bf16.mxu0 0
        %3199 = vmatpush1.bf16.msra.mxu0 0
        %3200 = vmatprep.mubr.bf16.mxu0 0
        %3201 = vmatmul.mubr.bf16.gmra.mrb[0].mxu0 %v2756
        %v3202 = vpop.f32.mrb[0].mxu0
        %v3203 = vadd.f32 %v828, %v3202
        %v3204 = vpop.f32.mrb[0].mxu0
        %v3205 = vpop.f32.mrb[0].mxu0
        %v3206 = vadd.f32 %v831, %v3205
        %v3207 = vpop.f32.mrb[0].mxu0
        %3208 = vdwg.mxu0
        %3209 = vmatprep.subr.bf16.mxu0 0
        %3210 = vmatpush1.bf16.msra.mxu0 %v1828
        %3211 = vmatprep.subr.bf16.mxu0 0
        %3212 = vmatpush1.bf16.msra.mxu0 0
        %3213 = vmatprep.subr.bf16.mxu0 0
        %3214 = vmatpush1.bf16.msra.mxu0 0
        %3215 = vmatprep.subr.bf16.mxu0 0
        %3216 = vmatpush1.bf16.msra.mxu0 0
        %3217 = vmatprep.subr.bf16.mxu0 0
        %3218 = vmatpush1.bf16.msra.mxu0 0
        %3219 = vmatprep.subr.bf16.mxu0 0
        %3220 = vmatpush1.bf16.msra.mxu0 0
        %3221 = vmatprep.subr.bf16.mxu0 0
        %3222 = vmatpush1.bf16.msra.mxu0 0
        %3223 = vmatprep.subr.bf16.mxu0 0
        %3224 = vmatpush1.bf16.msra.mxu0 0
        %3225 = vmatprep.subr.bf16.mxu0 0
        %3226 = vmatpush1.bf16.msra.mxu0 0
        %3227 = vmatprep.subr.bf16.mxu0 0
        %3228 = vmatpush1.bf16.msra.mxu0 0
        %3229 = vmatprep.subr.bf16.mxu0 0
        %3230 = vmatpush1.bf16.msra.mxu0 0
        %3231 = vmatprep.subr.bf16.mxu0 0
        %3232 = vmatpush1.bf16.msra.mxu0 0
        %3233 = vmatprep.subr.bf16.mxu0 0
        %3234 = vmatpush1.bf16.msra.mxu0 0
        %3235 = vmatprep.subr.bf16.mxu0 0
        %3236 = vmatpush1.bf16.msra.mxu0 0
        %3237 = vmatprep.subr.bf16.mxu0 0
        %3238 = vmatpush1.bf16.msra.mxu0 0
        %3239 = vmatprep.subr.bf16.mxu0 0
        %3240 = vmatpush1.bf16.msra.mxu0 0
        %3241 = vmatprep.mubr.bf16.mxu0 0
        %3242 = vmatmul.mubr.bf16.gmra.mrb[0].mxu0 %v2756
        %v3243 = vpop.f32.mrb[0].mxu0
        %v3244 = vadd.f32 %v877, %v3243
        %v3245 = vpop.f32.mrb[0].mxu0
        %v3246 = vpop.f32.mrb[0].mxu0
        %v3247 = vadd.f32 %v880, %v3246
        %v3248 = vpop.f32.mrb[0].mxu0
        %3249 = vdwg.mxu0
        %3250 = vmatprep.subr.bf16.mxu0 0
        %3251 = vmatpush1.bf16.msra.mxu0 %v1829
        %3252 = vmatprep.subr.bf16.mxu0 0
        %3253 = vmatpush1.bf16.msra.mxu0 0
        %3254 = vmatprep.subr.bf16.mxu0 0
        %3255 = vmatpush1.bf16.msra.mxu0 0
        %3256 = vmatprep.subr.bf16.mxu0 0
        %3257 = vmatpush1.bf16.msra.mxu0 0
        %3258 = vmatprep.subr.bf16.mxu0 0
        %3259 = vmatpush1.bf16.msra.mxu0 0
        %3260 = vmatprep.subr.bf16.mxu0 0
        %3261 = vmatpush1.bf16.msra.mxu0 0
        %3262 = vmatprep.subr.bf16.mxu0 0
        %3263 = vmatpush1.bf16.msra.mxu0 0
        %3264 = vmatprep.subr.bf16.mxu0 0
        %3265 = vmatpush1.bf16.msra.mxu0 0
        %3266 = vmatprep.subr.bf16.mxu0 0
        %3267 = vmatpush1.bf16.msra.mxu0 0
        %3268 = vmatprep.subr.bf16.mxu0 0
        %3269 = vmatpush1.bf16.msra.mxu0 0
        %3270 = vmatprep.subr.bf16.mxu0 0
        %3271 = vmatpush1.bf16.msra.mxu0 0
        %3272 = vmatprep.subr.bf16.mxu0 0
        %3273 = vmatpush1.bf16.msra.mxu0 0
        %3274 = vmatprep.subr.bf16.mxu0 0
        %3275 = vmatpush1.bf16.msra.mxu0 0
        %3276 = vmatprep.subr.bf16.mxu0 0
        %3277 = vmatpush1.bf16.msra.mxu0 0
        %3278 = vmatprep.subr.bf16.mxu0 0
        %3279 = vmatpush1.bf16.msra.mxu0 0
        %3280 = vmatprep.subr.bf16.mxu0 0
        %3281 = vmatpush1.bf16.msra.mxu0 0
        %3282 = vmatprep.mubr.bf16.mxu0 0
        %3283 = vmatmul.mubr.bf16.gmra.mrb[0].mxu0 %v2756
        %v3284 = vpop.f32.mrb[0].mxu0
        %v3285 = vadd.f32 %v926, %v3284
        %v3286 = vpop.f32.mrb[0].mxu0
        %v3287 = vpop.f32.mrb[0].mxu0
        %v3288 = vadd.f32 %v929, %v3287
        %v3289 = vpop.f32.mrb[0].mxu0
        %3290 = vdwg.mxu0
        %3291 = vmatprep.subr.bf16.mxu0 0
        %3292 = vmatpush1.bf16.msra.mxu0 %v1830
        %3293 = vmatprep.subr.bf16.mxu0 0
        %3294 = vmatpush1.bf16.msra.mxu0 0
        %3295 = vmatprep.subr.bf16.mxu0 0
        %3296 = vmatpush1.bf16.msra.mxu0 0
        %3297 = vmatprep.subr.bf16.mxu0 0
        %3298 = vmatpush1.bf16.msra.mxu0 0
        %3299 = vmatprep.subr.bf16.mxu0 0
        %3300 = vmatpush1.bf16.msra.mxu0 0
        %3301 = vmatprep.subr.bf16.mxu0 0
        %3302 = vmatpush1.bf16.msra.mxu0 0
        %3303 = vmatprep.subr.bf16.mxu0 0
        %3304 = vmatpush1.bf16.msra.mxu0 0
        %3305 = vmatprep.subr.bf16.mxu0 0
        %3306 = vmatpush1.bf16.msra.mxu0 0
        %3307 = vmatprep.subr.bf16.mxu0 0
        %3308 = vmatpush1.bf16.msra.mxu0 0
        %3309 = vmatprep.subr.bf16.mxu0 0
        %3310 = vmatpush1.bf16.msra.mxu0 0
        %3311 = vmatprep.subr.bf16.mxu0 0
        %3312 = vmatpush1.bf16.msra.mxu0 0
        %3313 = vmatprep.subr.bf16.mxu0 0
        %3314 = vmatpush1.bf16.msra.mxu0 0
        %3315 = vmatprep.subr.bf16.mxu0 0
        %3316 = vmatpush1.bf16.msra.mxu0 0
        %3317 = vmatprep.subr.bf16.mxu0 0
        %3318 = vmatpush1.bf16.msra.mxu0 0
        %3319 = vmatprep.subr.bf16.mxu0 0
        %3320 = vmatpush1.bf16.msra.mxu0 0
        %3321 = vmatprep.subr.bf16.mxu0 0
        %3322 = vmatpush1.bf16.msra.mxu0 0
        %3323 = vmatprep.mubr.bf16.mxu0 0
        %3324 = vmatmul.mubr.bf16.gmra.mrb[0].mxu0 %v2756
        %v3325 = vpop.f32.mrb[0].mxu0
        %v3326 = vadd.f32 %v975, %v3325
        %v3327 = vpop.f32.mrb[0].mxu0
        %v3328 = vpop.f32.mrb[0].mxu0
        %v3329 = vadd.f32 %v978, %v3328
        %v3330 = vpop.f32.mrb[0].mxu0
        %3331 = vdwg.mxu0
        %3332 = vmatprep.subr.bf16.mxu0 0
        %3333 = vmatpush1.bf16.msra.mxu0 %v1831
        %3334 = vmatprep.subr.bf16.mxu0 0
        %3335 = vmatpush1.bf16.msra.mxu0 0
        %3336 = vmatprep.subr.bf16.mxu0 0
        %3337 = vmatpush1.bf16.msra.mxu0 0
        %3338 = vmatprep.subr.bf16.mxu0 0
        %3339 = vmatpush1.bf16.msra.mxu0 0
        %3340 = vmatprep.subr.bf16.mxu0 0
        %3341 = vmatpush1.bf16.msra.mxu0 0
        %3342 = vmatprep.subr.bf16.mxu0 0
        %3343 = vmatpush1.bf16.msra.mxu0 0
        %3344 = vmatprep.subr.bf16.mxu0 0
        %3345 = vmatpush1.bf16.msra.mxu0 0
        %3346 = vmatprep.subr.bf16.mxu0 0
        %3347 = vmatpush1.bf16.msra.mxu0 0
        %3348 = vmatprep.subr.bf16.mxu0 0
        %3349 = vmatpush1.bf16.msra.mxu0 0
        %3350 = vmatprep.subr.bf16.mxu0 0
        %3351 = vmatpush1.bf16.msra.mxu0 0
        %3352 = vmatprep.subr.bf16.mxu0 0
        %3353 = vmatpush1.bf16.msra.mxu0 0
        %3354 = vmatprep.subr.bf16.mxu0 0
        %3355 = vmatpush1.bf16.msra.mxu0 0
        %3356 = vmatprep.subr.bf16.mxu0 0
        %3357 = vmatpush1.bf16.msra.mxu0 0
        %3358 = vmatprep.subr.bf16.mxu0 0
        %3359 = vmatpush1.bf16.msra.mxu0 0
        %3360 = vmatprep.subr.bf16.mxu0 0
        %3361 = vmatpush1.bf16.msra.mxu0 0
        %3362 = vmatprep.subr.bf16.mxu0 0
        %3363 = vmatpush1.bf16.msra.mxu0 0
        %3364 = vmatprep.mubr.bf16.mxu0 0
        %3365 = vmatmul.mubr.bf16.gmra.mrb[0].mxu0 %v2756
        %v3366 = vpop.f32.mrb[0].mxu0
        %v3367 = vadd.f32 %v1024, %v3366
        %v3368 = vpop.f32.mrb[0].mxu0
        %v3369 = vpop.f32.mrb[0].mxu0
        %v3370 = vadd.f32 %v1027, %v3369
        %v3371 = vpop.f32.mrb[0].mxu0
        %3372 = vdwg.mxu0
        %3373 = vmatprep.subr.bf16.mxu0 0
        %3374 = vmatpush1.bf16.msra.mxu0 %v1832
        %3375 = vmatprep.subr.bf16.mxu0 0
        %3376 = vmatpush1.bf16.msra.mxu0 0
        %3377 = vmatprep.subr.bf16.mxu0 0
        %3378 = vmatpush1.bf16.msra.mxu0 0
        %3379 = vmatprep.subr.bf16.mxu0 0
        %3380 = vmatpush1.bf16.msra.mxu0 0
        %3381 = vmatprep.subr.bf16.mxu0 0
        %3382 = vmatpush1.bf16.msra.mxu0 0
        %3383 = vmatprep.subr.bf16.mxu0 0
        %3384 = vmatpush1.bf16.msra.mxu0 0
        %3385 = vmatprep.subr.bf16.mxu0 0
        %3386 = vmatpush1.bf16.msra.mxu0 0
        %3387 = vmatprep.subr.bf16.mxu0 0
        %3388 = vmatpush1.bf16.msra.mxu0 0
        %3389 = vmatprep.subr.bf16.mxu0 0
        %3390 = vmatpush1.bf16.msra.mxu0 0
        %3391 = vmatprep.subr.bf16.mxu0 0
        %3392 = vmatpush1.bf16.msra.mxu0 0
        %3393 = vmatprep.subr.bf16.mxu0 0
        %3394 = vmatpush1.bf16.msra.mxu0 0
        %3395 = vmatprep.subr.bf16.mxu0 0
        %3396 = vmatpush1.bf16.msra.mxu0 0
        %3397 = vmatprep.subr.bf16.mxu0 0
        %3398 = vmatpush1.bf16.msra.mxu0 0
        %3399 = vmatprep.subr.bf16.mxu0 0
        %3400 = vmatpush1.bf16.msra.mxu0 0
        %3401 = vmatprep.subr.bf16.mxu0 0
        %3402 = vmatpush1.bf16.msra.mxu0 0
        %3403 = vmatprep.subr.bf16.mxu0 0
        %3404 = vmatpush1.bf16.msra.mxu0 0
        %3405 = vmatprep.mubr.bf16.mxu0 0
        %3406 = vmatmul.mubr.bf16.gmra.mrb[0].mxu0 %v2756
        %v3407 = vpop.f32.mrb[0].mxu0
        %v3408 = vadd.f32 %v1073, %v3407
        %v3409 = vpop.f32.mrb[0].mxu0
        %v3410 = vpop.f32.mrb[0].mxu0
        %v3411 = vadd.f32 %v1076, %v3410
        %v3412 = vpop.f32.mrb[0].mxu0
        %3413 = vdwg.mxu0
        %v3414 = vld [vmem:[%s4] sm:$0xf]
        %v3415 = vld [vmem:[%s4 + $0x4] sm:$0xf]
        %v3416 = vld [vmem:[%s4 + $0x8] sm:$0xf]
        %v3417 = vld [vmem:[%s4 + $0xc] sm:$0xf]
        %s3418 = sld [smem:[#allocation2 + $0x1]]
        %v3419 = vpack.c.bf16 %v2796, %v2793
        %v3420 = vpack.c.bf16 %v2837, %v2834
        %v3421 = vpack.c.bf16 %v2878, %v2875
        %v3422 = vpack.c.bf16 %v2919, %v2916
        %v3423 = vpack.c.bf16 %v2960, %v2957
        %v3424 = vpack.c.bf16 %v3001, %v2998
        %v3425 = vpack.c.bf16 %v3042, %v3039
        %v3426 = vpack.c.bf16 %v3083, %v3080
        %v3427 = vpack.c.bf16 %v3124, %v3121
        %v3428 = vpack.c.bf16 %v3165, %v3162
        %v3429 = vpack.c.bf16 %v3206, %v3203
        %v3430 = vpack.c.bf16 %v3247, %v3244
        %v3431 = vpack.c.bf16 %v3288, %v3285
        %v3432 = vpack.c.bf16 %v3329, %v3326
        %v3433 = vpack.c.bf16 %v3370, %v3367
        %v3434 = vpack.c.bf16 %v3411, %v3408
        %v3439 = vunpack.c.l.b16 %v3414
        %v3440 = vunpack.c.l.b16 %v3415
        %v3441 = vunpack.c.l.b16 %v3416
        %v3442 = vunpack.c.l.b16 %v3417
        %v3443 = vpack.c.b16 %v3440, %v3439
        %v3444 = vpack.c.b16 %v3442, %v3441
        %v3448 = vsel %vm1112, %v3419, 0
        %3450 = vmatprep.subr.bf16.mxu0 0
        %3451 = vmatpush1.bf16.msra.mxu0 %v3443
        %3452 = vmatprep.subr.bf16.mxu0 0
        %3453 = vmatpush1.bf16.msra.mxu0 %v3444
        %3454 = vmatprep.subr.bf16.mxu0 0
        %3455 = vmatpush1.bf16.msra.mxu0 0
        %3456 = vmatprep.subr.bf16.mxu0 0
        %3457 = vmatpush1.bf16.msra.mxu0 0
        %3458 = vmatprep.subr.bf16.mxu0 0
        %3459 = vmatpush1.bf16.msra.mxu0 0
        %3460 = vmatprep.subr.bf16.mxu0 0
        %3461 = vmatpush1.bf16.msra.mxu0 0
        %3462 = vmatprep.subr.bf16.mxu0 0
        %3463 = vmatpush1.bf16.msra.mxu0 0
        %3464 = vmatprep.subr.bf16.mxu0 0
        %3465 = vmatpush1.bf16.msra.mxu0 0
        %3466 = vmatprep.subr.bf16.mxu0 0
        %3467 = vmatpush1.bf16.msra.mxu0 0
        %3468 = vmatprep.subr.bf16.mxu0 0
        %3469 = vmatpush1.bf16.msra.mxu0 0
        %3470 = vmatprep.subr.bf16.mxu0 0
        %3471 = vmatpush1.bf16.msra.mxu0 0
        %3472 = vmatprep.subr.bf16.mxu0 0
        %3473 = vmatpush1.bf16.msra.mxu0 0
        %3474 = vmatprep.subr.bf16.mxu0 0
        %3475 = vmatpush1.bf16.msra.mxu0 0
        %3476 = vmatprep.subr.bf16.mxu0 0
        %3477 = vmatpush1.bf16.msra.mxu0 0
        %3478 = vmatprep.subr.bf16.mxu0 0
        %3479 = vmatpush1.bf16.msra.mxu0 0
        %3480 = vmatprep.subr.bf16.mxu0 0
        %3481 = vmatpush1.bf16.msra.mxu0 0
        %3482 = vmatprep.mubr.bf16.mxu0 0
        %3483 = vmatmul.mubr.bf16.gmra.mrb[0].mxu0 %v3448
        %v3484 = vpop.f32.mrb[0].mxu0
        %v3485 = vadd.f32 0.0, %v3484
        %v3486 = vpop.f32.mrb[0].mxu0
        %v3487 = vpop.f32.mrb[0].mxu0
        %v3488 = vadd.f32 0.0, %v3487
        %v3489 = vpop.f32.mrb[0].mxu0
        %3490 = vdwg.mxu0
        %v3492 = vsel %vm1112, %v3420, 0
        %3494 = vmatprep.subr.bf16.mxu0 0
        %3495 = vmatpush1.bf16.msra.mxu0 %v3443
        %3496 = vmatprep.subr.bf16.mxu0 0
        %3497 = vmatpush1.bf16.msra.mxu0 %v3444
        %3498 = vmatprep.subr.bf16.mxu0 0
        %3499 = vmatpush1.bf16.msra.mxu0 0
        %3500 = vmatprep.subr.bf16.mxu0 0
        %3501 = vmatpush1.bf16.msra.mxu0 0
        %3502 = vmatprep.subr.bf16.mxu0 0
        %3503 = vmatpush1.bf16.msra.mxu0 0
        %3504 = vmatprep.subr.bf16.mxu0 0
        %3505 = vmatpush1.bf16.msra.mxu0 0
        %3506 = vmatprep.subr.bf16.mxu0 0
        %3507 = vmatpush1.bf16.msra.mxu0 0
        %3508 = vmatprep.subr.bf16.mxu0 0
        %3509 = vmatpush1.bf16.msra.mxu0 0
        %3510 = vmatprep.subr.bf16.mxu0 0
        %3511 = vmatpush1.bf16.msra.mxu0 0
        %3512 = vmatprep.subr.bf16.mxu0 0
        %3513 = vmatpush1.bf16.msra.mxu0 0
        %3514 = vmatprep.subr.bf16.mxu0 0
        %3515 = vmatpush1.bf16.msra.mxu0 0
        %3516 = vmatprep.subr.bf16.mxu0 0
        %3517 = vmatpush1.bf16.msra.mxu0 0
        %3518 = vmatprep.subr.bf16.mxu0 0
        %3519 = vmatpush1.bf16.msra.mxu0 0
        %3520 = vmatprep.subr.bf16.mxu0 0
        %3521 = vmatpush1.bf16.msra.mxu0 0
        %3522 = vmatprep.subr.bf16.mxu0 0
        %3523 = vmatpush1.bf16.msra.mxu0 0
        %3524 = vmatprep.subr.bf16.mxu0 0
        %3525 = vmatpush1.bf16.msra.mxu0 0
        %3526 = vmatprep.mubr.bf16.mxu0 0
        %3527 = vmatmul.mubr.bf16.gmra.mrb[0].mxu0 %v3492
        %v3528 = vpop.f32.mrb[0].mxu0
        %v3529 = vadd.f32 0.0, %v3528
        %v3530 = vpop.f32.mrb[0].mxu0
        %v3531 = vpop.f32.mrb[0].mxu0
        %v3532 = vadd.f32 0.0, %v3531
        %v3533 = vpop.f32.mrb[0].mxu0
        %3534 = vdwg.mxu0
        %v3536 = vsel %vm1112, %v3421, 0
        %3538 = vmatprep.subr.bf16.mxu0 0
        %3539 = vmatpush1.bf16.msra.mxu0 %v3443
        %3540 = vmatprep.subr.bf16.mxu0 0
        %3541 = vmatpush1.bf16.msra.mxu0 %v3444
        %3542 = vmatprep.subr.bf16.mxu0 0
        %3543 = vmatpush1.bf16.msra.mxu0 0
        %3544 = vmatprep.subr.bf16.mxu0 0
        %3545 = vmatpush1.bf16.msra.mxu0 0
        %3546 = vmatprep.subr.bf16.mxu0 0
        %3547 = vmatpush1.bf16.msra.mxu0 0
        %3548 = vmatprep.subr.bf16.mxu0 0
        %3549 = vmatpush1.bf16.msra.mxu0 0
        %3550 = vmatprep.subr.bf16.mxu0 0
        %3551 = vmatpush1.bf16.msra.mxu0 0
        %3552 = vmatprep.subr.bf16.mxu0 0
        %3553 = vmatpush1.bf16.msra.mxu0 0
        %3554 = vmatprep.subr.bf16.mxu0 0
        %3555 = vmatpush1.bf16.msra.mxu0 0
        %3556 = vmatprep.subr.bf16.mxu0 0
        %3557 = vmatpush1.bf16.msra.mxu0 0
        %3558 = vmatprep.subr.bf16.mxu0 0
        %3559 = vmatpush1.bf16.msra.mxu0 0
        %3560 = vmatprep.subr.bf16.mxu0 0
        %3561 = vmatpush1.bf16.msra.mxu0 0
        %3562 = vmatprep.subr.bf16.mxu0 0
        %3563 = vmatpush1.bf16.msra.mxu0 0
        %3564 = vmatprep.subr.bf16.mxu0 0
        %3565 = vmatpush1.bf16.msra.mxu0 0
        %3566 = vmatprep.subr.bf16.mxu0 0
        %3567 = vmatpush1.bf16.msra.mxu0 0
        %3568 = vmatprep.subr.bf16.mxu0 0
        %3569 = vmatpush1.bf16.msra.mxu0 0
        %3570 = vmatprep.mubr.bf16.mxu0 0
        %3571 = vmatmul.mubr.bf16.gmra.mrb[0].mxu0 %v3536
        %v3572 = vpop.f32.mrb[0].mxu0
        %v3573 = vadd.f32 0.0, %v3572
        %v3574 = vpop.f32.mrb[0].mxu0
        %v3575 = vpop.f32.mrb[0].mxu0
        %v3576 = vadd.f32 0.0, %v3575
        %v3577 = vpop.f32.mrb[0].mxu0
        %3578 = vdwg.mxu0
        %v3580 = vsel %vm1112, %v3422, 0
        %3582 = vmatprep.subr.bf16.mxu0 0
        %3583 = vmatpush1.bf16.msra.mxu0 %v3443
        %3584 = vmatprep.subr.bf16.mxu0 0
        %3585 = vmatpush1.bf16.msra.mxu0 %v3444
        %3586 = vmatprep.subr.bf16.mxu0 0
        %3587 = vmatpush1.bf16.msra.mxu0 0
        %3588 = vmatprep.subr.bf16.mxu0 0
        %3589 = vmatpush1.bf16.msra.mxu0 0
        %3590 = vmatprep.subr.bf16.mxu0 0
        %3591 = vmatpush1.bf16.msra.mxu0 0
        %3592 = vmatprep.subr.bf16.mxu0 0
        %3593 = vmatpush1.bf16.msra.mxu0 0
        %3594 = vmatprep.subr.bf16.mxu0 0
        %3595 = vmatpush1.bf16.msra.mxu0 0
        %3596 = vmatprep.subr.bf16.mxu0 0
        %3597 = vmatpush1.bf16.msra.mxu0 0
        %3598 = vmatprep.subr.bf16.mxu0 0
        %3599 = vmatpush1.bf16.msra.mxu0 0
        %3600 = vmatprep.subr.bf16.mxu0 0
        %3601 = vmatpush1.bf16.msra.mxu0 0
        %3602 = vmatprep.subr.bf16.mxu0 0
        %3603 = vmatpush1.bf16.msra.mxu0 0
        %3604 = vmatprep.subr.bf16.mxu0 0
        %3605 = vmatpush1.bf16.msra.mxu0 0
        %3606 = vmatprep.subr.bf16.mxu0 0
        %3607 = vmatpush1.bf16.msra.mxu0 0
        %3608 = vmatprep.subr.bf16.mxu0 0
        %3609 = vmatpush1.bf16.msra.mxu0 0
        %3610 = vmatprep.subr.bf16.mxu0 0
        %3611 = vmatpush1.bf16.msra.mxu0 0
        %3612 = vmatprep.subr.bf16.mxu0 0
        %3613 = vmatpush1.bf16.msra.mxu0 0
        %3614 = vmatprep.mubr.bf16.mxu0 0
        %3615 = vmatmul.mubr.bf16.gmra.mrb[0].mxu0 %v3580
        %v3616 = vpop.f32.mrb[0].mxu0
        %v3617 = vadd.f32 0.0, %v3616
        %v3618 = vpop.f32.mrb[0].mxu0
        %v3619 = vpop.f32.mrb[0].mxu0
        %v3620 = vadd.f32 0.0, %v3619
        %v3621 = vpop.f32.mrb[0].mxu0
        %3622 = vdwg.mxu0
        %v3624 = vsel %vm1112, %v3423, 0
        %3626 = vmatprep.subr.bf16.mxu0 0
        %3627 = vmatpush1.bf16.msra.mxu0 %v3443
        %3628 = vmatprep.subr.bf16.mxu0 0
        %3629 = vmatpush1.bf16.msra.mxu0 %v3444
        %3630 = vmatprep.subr.bf16.mxu0 0
        %3631 = vmatpush1.bf16.msra.mxu0 0
        %3632 = vmatprep.subr.bf16.mxu0 0
        %3633 = vmatpush1.bf16.msra.mxu0 0
        %3634 = vmatprep.subr.bf16.mxu0 0
        %3635 = vmatpush1.bf16.msra.mxu0 0
        %3636 = vmatprep.subr.bf16.mxu0 0
        %3637 = vmatpush1.bf16.msra.mxu0 0
        %3638 = vmatprep.subr.bf16.mxu0 0
        %3639 = vmatpush1.bf16.msra.mxu0 0
        %3640 = vmatprep.subr.bf16.mxu0 0
        %3641 = vmatpush1.bf16.msra.mxu0 0
        %3642 = vmatprep.subr.bf16.mxu0 0
        %3643 = vmatpush1.bf16.msra.mxu0 0
        %3644 = vmatprep.subr.bf16.mxu0 0
        %3645 = vmatpush1.bf16.msra.mxu0 0
        %3646 = vmatprep.subr.bf16.mxu0 0
        %3647 = vmatpush1.bf16.msra.mxu0 0
        %3648 = vmatprep.subr.bf16.mxu0 0
        %3649 = vmatpush1.bf16.msra.mxu0 0
        %3650 = vmatprep.subr.bf16.mxu0 0
        %3651 = vmatpush1.bf16.msra.mxu0 0
        %3652 = vmatprep.subr.bf16.mxu0 0
        %3653 = vmatpush1.bf16.msra.mxu0 0
        %3654 = vmatprep.subr.bf16.mxu0 0
        %3655 = vmatpush1.bf16.msra.mxu0 0
        %3656 = vmatprep.subr.bf16.mxu0 0
        %3657 = vmatpush1.bf16.msra.mxu0 0
        %3658 = vmatprep.mubr.bf16.mxu0 0
        %3659 = vmatmul.mubr.bf16.gmra.mrb[0].mxu0 %v3624
        %v3660 = vpop.f32.mrb[0].mxu0
        %v3661 = vadd.f32 0.0, %v3660
        %v3662 = vpop.f32.mrb[0].mxu0
        %v3663 = vpop.f32.mrb[0].mxu0
        %v3664 = vadd.f32 0.0, %v3663
        %v3665 = vpop.f32.mrb[0].mxu0
        %3666 = vdwg.mxu0
        %v3668 = vsel %vm1112, %v3424, 0
        %3670 = vmatprep.subr.bf16.mxu0 0
        %3671 = vmatpush1.bf16.msra.mxu0 %v3443
        %3672 = vmatprep.subr.bf16.mxu0 0
        %3673 = vmatpush1.bf16.msra.mxu0 %v3444
        %3674 = vmatprep.subr.bf16.mxu0 0
        %3675 = vmatpush1.bf16.msra.mxu0 0
        %3676 = vmatprep.subr.bf16.mxu0 0
        %3677 = vmatpush1.bf16.msra.mxu0 0
        %3678 = vmatprep.subr.bf16.mxu0 0
        %3679 = vmatpush1.bf16.msra.mxu0 0
        %3680 = vmatprep.subr.bf16.mxu0 0
        %3681 = vmatpush1.bf16.msra.mxu0 0
        %3682 = vmatprep.subr.bf16.mxu0 0
        %3683 = vmatpush1.bf16.msra.mxu0 0
        %3684 = vmatprep.subr.bf16.mxu0 0
        %3685 = vmatpush1.bf16.msra.mxu0 0
        %3686 = vmatprep.subr.bf16.mxu0 0
        %3687 = vmatpush1.bf16.msra.mxu0 0
        %3688 = vmatprep.subr.bf16.mxu0 0
        %3689 = vmatpush1.bf16.msra.mxu0 0
        %3690 = vmatprep.subr.bf16.mxu0 0
        %3691 = vmatpush1.bf16.msra.mxu0 0
        %3692 = vmatprep.subr.bf16.mxu0 0
        %3693 = vmatpush1.bf16.msra.mxu0 0
        %3694 = vmatprep.subr.bf16.mxu0 0
        %3695 = vmatpush1.bf16.msra.mxu0 0
        %3696 = vmatprep.subr.bf16.mxu0 0
        %3697 = vmatpush1.bf16.msra.mxu0 0
        %3698 = vmatprep.subr.bf16.mxu0 0
        %3699 = vmatpush1.bf16.msra.mxu0 0
        %3700 = vmatprep.subr.bf16.mxu0 0
        %3701 = vmatpush1.bf16.msra.mxu0 0
        %3702 = vmatprep.mubr.bf16.mxu0 0
        %3703 = vmatmul.mubr.bf16.gmra.mrb[0].mxu0 %v3668
        %v3704 = vpop.f32.mrb[0].mxu0
        %v3705 = vadd.f32 0.0, %v3704
        %v3706 = vpop.f32.mrb[0].mxu0
        %v3707 = vpop.f32.mrb[0].mxu0
        %v3708 = vadd.f32 0.0, %v3707
        %v3709 = vpop.f32.mrb[0].mxu0
        %3710 = vdwg.mxu0
        %v3712 = vsel %vm1112, %v3425, 0
        %3714 = vmatprep.subr.bf16.mxu0 0
        %3715 = vmatpush1.bf16.msra.mxu0 %v3443
        %3716 = vmatprep.subr.bf16.mxu0 0
        %3717 = vmatpush1.bf16.msra.mxu0 %v3444
        %3718 = vmatprep.subr.bf16.mxu0 0
        %3719 = vmatpush1.bf16.msra.mxu0 0
        %3720 = vmatprep.subr.bf16.mxu0 0
        %3721 = vmatpush1.bf16.msra.mxu0 0
        %3722 = vmatprep.subr.bf16.mxu0 0
        %3723 = vmatpush1.bf16.msra.mxu0 0
        %3724 = vmatprep.subr.bf16.mxu0 0
        %3725 = vmatpush1.bf16.msra.mxu0 0
        %3726 = vmatprep.subr.bf16.mxu0 0
        %3727 = vmatpush1.bf16.msra.mxu0 0
        %3728 = vmatprep.subr.bf16.mxu0 0
        %3729 = vmatpush1.bf16.msra.mxu0 0
        %3730 = vmatprep.subr.bf16.mxu0 0
        %3731 = vmatpush1.bf16.msra.mxu0 0
        %3732 = vmatprep.subr.bf16.mxu0 0
        %3733 = vmatpush1.bf16.msra.mxu0 0
        %3734 = vmatprep.subr.bf16.mxu0 0
        %3735 = vmatpush1.bf16.msra.mxu0 0
        %3736 = vmatprep.subr.bf16.mxu0 0
        %3737 = vmatpush1.bf16.msra.mxu0 0
        %3738 = vmatprep.subr.bf16.mxu0 0
        %3739 = vmatpush1.bf16.msra.mxu0 0
        %3740 = vmatprep.subr.bf16.mxu0 0
        %3741 = vmatpush1.bf16.msra.mxu0 0
        %3742 = vmatprep.subr.bf16.mxu0 0
        %3743 = vmatpush1.bf16.msra.mxu0 0
        %3744 = vmatprep.subr.bf16.mxu0 0
        %3745 = vmatpush1.bf16.msra.mxu0 0
        %3746 = vmatprep.mubr.bf16.mxu0 0
        %3747 = vmatmul.mubr.bf16.gmra.mrb[0].mxu0 %v3712
        %v3748 = vpop.f32.mrb[0].mxu0
        %v3749 = vadd.f32 0.0, %v3748
        %v3750 = vpop.f32.mrb[0].mxu0
        %v3751 = vpop.f32.mrb[0].mxu0
        %v3752 = vadd.f32 0.0, %v3751
        %v3753 = vpop.f32.mrb[0].mxu0
        %3754 = vdwg.mxu0
        %v3756 = vsel %vm1112, %v3426, 0
        %3758 = vmatprep.subr.bf16.mxu0 0
        %3759 = vmatpush1.bf16.msra.mxu0 %v3443
        %3760 = vmatprep.subr.bf16.mxu0 0
        %3761 = vmatpush1.bf16.msra.mxu0 %v3444
        %3762 = vmatprep.subr.bf16.mxu0 0
        %3763 = vmatpush1.bf16.msra.mxu0 0
        %3764 = vmatprep.subr.bf16.mxu0 0
        %3765 = vmatpush1.bf16.msra.mxu0 0
        %3766 = vmatprep.subr.bf16.mxu0 0
        %3767 = vmatpush1.bf16.msra.mxu0 0
        %3768 = vmatprep.subr.bf16.mxu0 0
        %3769 = vmatpush1.bf16.msra.mxu0 0
        %3770 = vmatprep.subr.bf16.mxu0 0
        %3771 = vmatpush1.bf16.msra.mxu0 0
        %3772 = vmatprep.subr.bf16.mxu0 0
        %3773 = vmatpush1.bf16.msra.mxu0 0
        %3774 = vmatprep.subr.bf16.mxu0 0
        %3775 = vmatpush1.bf16.msra.mxu0 0
        %3776 = vmatprep.subr.bf16.mxu0 0
        %3777 = vmatpush1.bf16.msra.mxu0 0
        %3778 = vmatprep.subr.bf16.mxu0 0
        %3779 = vmatpush1.bf16.msra.mxu0 0
        %3780 = vmatprep.subr.bf16.mxu0 0
        %3781 = vmatpush1.bf16.msra.mxu0 0
        %3782 = vmatprep.subr.bf16.mxu0 0
        %3783 = vmatpush1.bf16.msra.mxu0 0
        %3784 = vmatprep.subr.bf16.mxu0 0
        %3785 = vmatpush1.bf16.msra.mxu0 0
        %3786 = vmatprep.subr.bf16.mxu0 0
        %3787 = vmatpush1.bf16.msra.mxu0 0
        %3788 = vmatprep.subr.bf16.mxu0 0
        %3789 = vmatpush1.bf16.msra.mxu0 0
        %3790 = vmatprep.mubr.bf16.mxu0 0
        %3791 = vmatmul.mubr.bf16.gmra.mrb[0].mxu0 %v3756
        %v3792 = vpop.f32.mrb[0].mxu0
        %v3793 = vadd.f32 0.0, %v3792
        %v3794 = vpop.f32.mrb[0].mxu0
        %v3795 = vpop.f32.mrb[0].mxu0
        %v3796 = vadd.f32 0.0, %v3795
        %v3797 = vpop.f32.mrb[0].mxu0
        %3798 = vdwg.mxu0
        %v3800 = vsel %vm1112, %v3427, 0
        %3802 = vmatprep.subr.bf16.mxu0 0
        %3803 = vmatpush1.bf16.msra.mxu0 %v3443
        %3804 = vmatprep.subr.bf16.mxu0 0
        %3805 = vmatpush1.bf16.msra.mxu0 %v3444
        %3806 = vmatprep.subr.bf16.mxu0 0
        %3807 = vmatpush1.bf16.msra.mxu0 0
        %3808 = vmatprep.subr.bf16.mxu0 0
        %3809 = vmatpush1.bf16.msra.mxu0 0
        %3810 = vmatprep.subr.bf16.mxu0 0
        %3811 = vmatpush1.bf16.msra.mxu0 0
        %3812 = vmatprep.subr.bf16.mxu0 0
        %3813 = vmatpush1.bf16.msra.mxu0 0
        %3814 = vmatprep.subr.bf16.mxu0 0
        %3815 = vmatpush1.bf16.msra.mxu0 0
        %3816 = vmatprep.subr.bf16.mxu0 0
        %3817 = vmatpush1.bf16.msra.mxu0 0
        %3818 = vmatprep.subr.bf16.mxu0 0
        %3819 = vmatpush1.bf16.msra.mxu0 0
        %3820 = vmatprep.subr.bf16.mxu0 0
        %3821 = vmatpush1.bf16.msra.mxu0 0
        %3822 = vmatprep.subr.bf16.mxu0 0
        %3823 = vmatpush1.bf16.msra.mxu0 0
        %3824 = vmatprep.subr.bf16.mxu0 0
        %3825 = vmatpush1.bf16.msra.mxu0 0
        %3826 = vmatprep.subr.bf16.mxu0 0
        %3827 = vmatpush1.bf16.msra.mxu0 0
        %3828 = vmatprep.subr.bf16.mxu0 0
        %3829 = vmatpush1.bf16.msra.mxu0 0
        %3830 = vmatprep.subr.bf16.mxu0 0
        %3831 = vmatpush1.bf16.msra.mxu0 0
        %3832 = vmatprep.subr.bf16.mxu0 0
        %3833 = vmatpush1.bf16.msra.mxu0 0
        %3834 = vmatprep.mubr.bf16.mxu0 0
        %3835 = vmatmul.mubr.bf16.gmra.mrb[0].mxu0 %v3800
        %v3836 = vpop.f32.mrb[0].mxu0
        %v3837 = vadd.f32 0.0, %v3836
        %v3838 = vpop.f32.mrb[0].mxu0
        %v3839 = vpop.f32.mrb[0].mxu0
        %v3840 = vadd.f32 0.0, %v3839
        %v3841 = vpop.f32.mrb[0].mxu0
        %3842 = vdwg.mxu0
        %v3844 = vsel %vm1112, %v3428, 0
        %3846 = vmatprep.subr.bf16.mxu0 0
        %3847 = vmatpush1.bf16.msra.mxu0 %v3443
        %3848 = vmatprep.subr.bf16.mxu0 0
        %3849 = vmatpush1.bf16.msra.mxu0 %v3444
        %3850 = vmatprep.subr.bf16.mxu0 0
        %3851 = vmatpush1.bf16.msra.mxu0 0
        %3852 = vmatprep.subr.bf16.mxu0 0
        %3853 = vmatpush1.bf16.msra.mxu0 0
        %3854 = vmatprep.subr.bf16.mxu0 0
        %3855 = vmatpush1.bf16.msra.mxu0 0
        %3856 = vmatprep.subr.bf16.mxu0 0
        %3857 = vmatpush1.bf16.msra.mxu0 0
        %3858 = vmatprep.subr.bf16.mxu0 0
        %3859 = vmatpush1.bf16.msra.mxu0 0
        %3860 = vmatprep.subr.bf16.mxu0 0
        %3861 = vmatpush1.bf16.msra.mxu0 0
        %3862 = vmatprep.subr.bf16.mxu0 0
        %3863 = vmatpush1.bf16.msra.mxu0 0
        %3864 = vmatprep.subr.bf16.mxu0 0
        %3865 = vmatpush1.bf16.msra.mxu0 0
        %3866 = vmatprep.subr.bf16.mxu0 0
        %3867 = vmatpush1.bf16.msra.mxu0 0
        %3868 = vmatprep.subr.bf16.mxu0 0
        %3869 = vmatpush1.bf16.msra.mxu0 0
        %3870 = vmatprep.subr.bf16.mxu0 0
        %3871 = vmatpush1.bf16.msra.mxu0 0
        %3872 = vmatprep.subr.bf16.mxu0 0
        %3873 = vmatpush1.bf16.msra.mxu0 0
        %3874 = vmatprep.subr.bf16.mxu0 0
        %3875 = vmatpush1.bf16.msra.mxu0 0
        %3876 = vmatprep.subr.bf16.mxu0 0
        %3877 = vmatpush1.bf16.msra.mxu0 0
        %3878 = vmatprep.mubr.bf16.mxu0 0
        %3879 = vmatmul.mubr.bf16.gmra.mrb[0].mxu0 %v3844
        %v3880 = vpop.f32.mrb[0].mxu0
        %v3881 = vadd.f32 0.0, %v3880
        %v3882 = vpop.f32.mrb[0].mxu0
        %v3883 = vpop.f32.mrb[0].mxu0
        %v3884 = vadd.f32 0.0, %v3883
        %v3885 = vpop.f32.mrb[0].mxu0
        %3886 = vdwg.mxu0
        %v3888 = vsel %vm1112, %v3429, 0
        %3890 = vmatprep.subr.bf16.mxu0 0
        %3891 = vmatpush1.bf16.msra.mxu0 %v3443
        %3892 = vmatprep.subr.bf16.mxu0 0
        %3893 = vmatpush1.bf16.msra.mxu0 %v3444
        %3894 = vmatprep.subr.bf16.mxu0 0
        %3895 = vmatpush1.bf16.msra.mxu0 0
        %3896 = vmatprep.subr.bf16.mxu0 0
        %3897 = vmatpush1.bf16.msra.mxu0 0
        %3898 = vmatprep.subr.bf16.mxu0 0
        %3899 = vmatpush1.bf16.msra.mxu0 0
        %3900 = vmatprep.subr.bf16.mxu0 0
        %3901 = vmatpush1.bf16.msra.mxu0 0
        %3902 = vmatprep.subr.bf16.mxu0 0
        %3903 = vmatpush1.bf16.msra.mxu0 0
        %3904 = vmatprep.subr.bf16.mxu0 0
        %3905 = vmatpush1.bf16.msra.mxu0 0
        %3906 = vmatprep.subr.bf16.mxu0 0
        %3907 = vmatpush1.bf16.msra.mxu0 0
        %3908 = vmatprep.subr.bf16.mxu0 0
        %3909 = vmatpush1.bf16.msra.mxu0 0
        %3910 = vmatprep.subr.bf16.mxu0 0
        %3911 = vmatpush1.bf16.msra.mxu0 0
        %3912 = vmatprep.subr.bf16.mxu0 0
        %3913 = vmatpush1.bf16.msra.mxu0 0
        %3914 = vmatprep.subr.bf16.mxu0 0
        %3915 = vmatpush1.bf16.msra.mxu0 0
        %3916 = vmatprep.subr.bf16.mxu0 0
        %3917 = vmatpush1.bf16.msra.mxu0 0
        %3918 = vmatprep.subr.bf16.mxu0 0
        %3919 = vmatpush1.bf16.msra.mxu0 0
        %3920 = vmatprep.subr.bf16.mxu0 0
        %3921 = vmatpush1.bf16.msra.mxu0 0
        %3922 = vmatprep.mubr.bf16.mxu0 0
        %3923 = vmatmul.mubr.bf16.gmra.mrb[0].mxu0 %v3888
        %v3924 = vpop.f32.mrb[0].mxu0
        %v3925 = vadd.f32 0.0, %v3924
        %v3926 = vpop.f32.mrb[0].mxu0
        %v3927 = vpop.f32.mrb[0].mxu0
        %v3928 = vadd.f32 0.0, %v3927
        %v3929 = vpop.f32.mrb[0].mxu0
        %3930 = vdwg.mxu0
        %v3932 = vsel %vm1112, %v3430, 0
        %3934 = vmatprep.subr.bf16.mxu0 0
        %3935 = vmatpush1.bf16.msra.mxu0 %v3443
        %3936 = vmatprep.subr.bf16.mxu0 0
        %3937 = vmatpush1.bf16.msra.mxu0 %v3444
        %3938 = vmatprep.subr.bf16.mxu0 0
        %3939 = vmatpush1.bf16.msra.mxu0 0
        %3940 = vmatprep.subr.bf16.mxu0 0
        %3941 = vmatpush1.bf16.msra.mxu0 0
        %3942 = vmatprep.subr.bf16.mxu0 0
        %3943 = vmatpush1.bf16.msra.mxu0 0
        %3944 = vmatprep.subr.bf16.mxu0 0
        %3945 = vmatpush1.bf16.msra.mxu0 0
        %3946 = vmatprep.subr.bf16.mxu0 0
        %3947 = vmatpush1.bf16.msra.mxu0 0
        %3948 = vmatprep.subr.bf16.mxu0 0
        %3949 = vmatpush1.bf16.msra.mxu0 0
        %3950 = vmatprep.subr.bf16.mxu0 0
        %3951 = vmatpush1.bf16.msra.mxu0 0
        %3952 = vmatprep.subr.bf16.mxu0 0
        %3953 = vmatpush1.bf16.msra.mxu0 0
        %3954 = vmatprep.subr.bf16.mxu0 0
        %3955 = vmatpush1.bf16.msra.mxu0 0
        %3956 = vmatprep.subr.bf16.mxu0 0
        %3957 = vmatpush1.bf16.msra.mxu0 0
        %3958 = vmatprep.subr.bf16.mxu0 0
        %3959 = vmatpush1.bf16.msra.mxu0 0
        %3960 = vmatprep.subr.bf16.mxu0 0
        %3961 = vmatpush1.bf16.msra.mxu0 0
        %3962 = vmatprep.subr.bf16.mxu0 0
        %3963 = vmatpush1.bf16.msra.mxu0 0
        %3964 = vmatprep.subr.bf16.mxu0 0
        %3965 = vmatpush1.bf16.msra.mxu0 0
        %3966 = vmatprep.mubr.bf16.mxu0 0
        %3967 = vmatmul.mubr.bf16.gmra.mrb[0].mxu0 %v3932
        %v3968 = vpop.f32.mrb[0].mxu0
        %v3969 = vadd.f32 0.0, %v3968
        %v3970 = vpop.f32.mrb[0].mxu0
        %v3971 = vpop.f32.mrb[0].mxu0
        %v3972 = vadd.f32 0.0, %v3971
        %v3973 = vpop.f32.mrb[0].mxu0
        %3974 = vdwg.mxu0
        %v3976 = vsel %vm1112, %v3431, 0
        %3978 = vmatprep.subr.bf16.mxu0 0
        %3979 = vmatpush1.bf16.msra.mxu0 %v3443
        %3980 = vmatprep.subr.bf16.mxu0 0
        %3981 = vmatpush1.bf16.msra.mxu0 %v3444
        %3982 = vmatprep.subr.bf16.mxu0 0
        %3983 = vmatpush1.bf16.msra.mxu0 0
        %3984 = vmatprep.subr.bf16.mxu0 0
        %3985 = vmatpush1.bf16.msra.mxu0 0
        %3986 = vmatprep.subr.bf16.mxu0 0
        %3987 = vmatpush1.bf16.msra.mxu0 0
        %3988 = vmatprep.subr.bf16.mxu0 0
        %3989 = vmatpush1.bf16.msra.mxu0 0
        %3990 = vmatprep.subr.bf16.mxu0 0
        %3991 = vmatpush1.bf16.msra.mxu0 0
        %3992 = vmatprep.subr.bf16.mxu0 0
        %3993 = vmatpush1.bf16.msra.mxu0 0
        %3994 = vmatprep.subr.bf16.mxu0 0
        %3995 = vmatpush1.bf16.msra.mxu0 0
        %3996 = vmatprep.subr.bf16.mxu0 0
        %3997 = vmatpush1.bf16.msra.mxu0 0
        %3998 = vmatprep.subr.bf16.mxu0 0
        %3999 = vmatpush1.bf16.msra.mxu0 0
        %4000 = vmatprep.subr.bf16.mxu0 0
        %4001 = vmatpush1.bf16.msra.mxu0 0
        %4002 = vmatprep.subr.bf16.mxu0 0
        %4003 = vmatpush1.bf16.msra.mxu0 0
        %4004 = vmatprep.subr.bf16.mxu0 0
        %4005 = vmatpush1.bf16.msra.mxu0 0
        %4006 = vmatprep.subr.bf16.mxu0 0
        %4007 = vmatpush1.bf16.msra.mxu0 0
        %4008 = vmatprep.subr.bf16.mxu0 0
        %4009 = vmatpush1.bf16.msra.mxu0 0
        %4010 = vmatprep.mubr.bf16.mxu0 0
        %4011 = vmatmul.mubr.bf16.gmra.mrb[0].mxu0 %v3976
        %v4012 = vpop.f32.mrb[0].mxu0
        %v4013 = vadd.f32 0.0, %v4012
        %v4014 = vpop.f32.mrb[0].mxu0
        %v4015 = vpop.f32.mrb[0].mxu0
        %v4016 = vadd.f32 0.0, %v4015
        %v4017 = vpop.f32.mrb[0].mxu0
        %4018 = vdwg.mxu0
        %v4020 = vsel %vm1112, %v3432, 0
        %4022 = vmatprep.subr.bf16.mxu0 0
        %4023 = vmatpush1.bf16.msra.mxu0 %v3443
        %4024 = vmatprep.subr.bf16.mxu0 0
        %4025 = vmatpush1.bf16.msra.mxu0 %v3444
        %4026 = vmatprep.subr.bf16.mxu0 0
        %4027 = vmatpush1.bf16.msra.mxu0 0
        %4028 = vmatprep.subr.bf16.mxu0 0
        %4029 = vmatpush1.bf16.msra.mxu0 0
        %4030 = vmatprep.subr.bf16.mxu0 0
        %4031 = vmatpush1.bf16.msra.mxu0 0
        %4032 = vmatprep.subr.bf16.mxu0 0
        %4033 = vmatpush1.bf16.msra.mxu0 0
        %4034 = vmatprep.subr.bf16.mxu0 0
        %4035 = vmatpush1.bf16.msra.mxu0 0
        %4036 = vmatprep.subr.bf16.mxu0 0
        %4037 = vmatpush1.bf16.msra.mxu0 0
        %4038 = vmatprep.subr.bf16.mxu0 0
        %4039 = vmatpush1.bf16.msra.mxu0 0
        %4040 = vmatprep.subr.bf16.mxu0 0
        %4041 = vmatpush1.bf16.msra.mxu0 0
        %4042 = vmatprep.subr.bf16.mxu0 0
        %4043 = vmatpush1.bf16.msra.mxu0 0
        %4044 = vmatprep.subr.bf16.mxu0 0
        %4045 = vmatpush1.bf16.msra.mxu0 0
        %4046 = vmatprep.subr.bf16.mxu0 0
        %4047 = vmatpush1.bf16.msra.mxu0 0
        %4048 = vmatprep.subr.bf16.mxu0 0
        %4049 = vmatpush1.bf16.msra.mxu0 0
        %4050 = vmatprep.subr.bf16.mxu0 0
        %4051 = vmatpush1.bf16.msra.mxu0 0
        %4052 = vmatprep.subr.bf16.mxu0 0
        %4053 = vmatpush1.bf16.msra.mxu0 0
        %4054 = vmatprep.mubr.bf16.mxu0 0
        %4055 = vmatmul.mubr.bf16.gmra.mrb[0].mxu0 %v4020
        %v4056 = vpop.f32.mrb[0].mxu0
        %v4057 = vadd.f32 0.0, %v4056
        %v4058 = vpop.f32.mrb[0].mxu0
        %v4059 = vpop.f32.mrb[0].mxu0
        %v4060 = vadd.f32 0.0, %v4059
        %v4061 = vpop.f32.mrb[0].mxu0
        %4062 = vdwg.mxu0
        %v4064 = vsel %vm1112, %v3433, 0
        %4066 = vmatprep.subr.bf16.mxu0 0
        %4067 = vmatpush1.bf16.msra.mxu0 %v3443
        %4068 = vmatprep.subr.bf16.mxu0 0
        %4069 = vmatpush1.bf16.msra.mxu0 %v3444
        %4070 = vmatprep.subr.bf16.mxu0 0
        %4071 = vmatpush1.bf16.msra.mxu0 0
        %4072 = vmatprep.subr.bf16.mxu0 0
        %4073 = vmatpush1.bf16.msra.mxu0 0
        %4074 = vmatprep.subr.bf16.mxu0 0
        %4075 = vmatpush1.bf16.msra.mxu0 0
        %4076 = vmatprep.subr.bf16.mxu0 0
        %4077 = vmatpush1.bf16.msra.mxu0 0
        %4078 = vmatprep.subr.bf16.mxu0 0
        %4079 = vmatpush1.bf16.msra.mxu0 0
        %4080 = vmatprep.subr.bf16.mxu0 0
        %4081 = vmatpush1.bf16.msra.mxu0 0
        %4082 = vmatprep.subr.bf16.mxu0 0
        %4083 = vmatpush1.bf16.msra.mxu0 0
        %4084 = vmatprep.subr.bf16.mxu0 0
        %4085 = vmatpush1.bf16.msra.mxu0 0
        %4086 = vmatprep.subr.bf16.mxu0 0
        %4087 = vmatpush1.bf16.msra.mxu0 0
        %4088 = vmatprep.subr.bf16.mxu0 0
        %4089 = vmatpush1.bf16.msra.mxu0 0
        %4090 = vmatprep.subr.bf16.mxu0 0
        %4091 = vmatpush1.bf16.msra.mxu0 0
        %4092 = vmatprep.subr.bf16.mxu0 0
        %4093 = vmatpush1.bf16.msra.mxu0 0
        %4094 = vmatprep.subr.bf16.mxu0 0
        %4095 = vmatpush1.bf16.msra.mxu0 0
        %4096 = vmatprep.subr.bf16.mxu0 0
        %4097 = vmatpush1.bf16.msra.mxu0 0
        %4098 = vmatprep.mubr.bf16.mxu0 0
        %4099 = vmatmul.mubr.bf16.gmra.mrb[0].mxu0 %v4064
        %v4100 = vpop.f32.mrb[0].mxu0
        %v4101 = vadd.f32 0.0, %v4100
        %v4102 = vpop.f32.mrb[0].mxu0
        %v4103 = vpop.f32.mrb[0].mxu0
        %v4104 = vadd.f32 0.0, %v4103
        %v4105 = vpop.f32.mrb[0].mxu0
        %4106 = vdwg.mxu0
        %v4108 = vsel %vm1112, %v3434, 0
        %4110 = vmatprep.subr.bf16.mxu0 0
        %4111 = vmatpush1.bf16.msra.mxu0 %v3443
        %4112 = vmatprep.subr.bf16.mxu0 0
        %4113 = vmatpush1.bf16.msra.mxu0 %v3444
        %4114 = vmatprep.subr.bf16.mxu0 0
        %4115 = vmatpush1.bf16.msra.mxu0 0
        %4116 = vmatprep.subr.bf16.mxu0 0
        %4117 = vmatpush1.bf16.msra.mxu0 0
        %4118 = vmatprep.subr.bf16.mxu0 0
        %4119 = vmatpush1.bf16.msra.mxu0 0
        %4120 = vmatprep.subr.bf16.mxu0 0
        %4121 = vmatpush1.bf16.msra.mxu0 0
        %4122 = vmatprep.subr.bf16.mxu0 0
        %4123 = vmatpush1.bf16.msra.mxu0 0
        %4124 = vmatprep.subr.bf16.mxu0 0
        %4125 = vmatpush1.bf16.msra.mxu0 0
        %4126 = vmatprep.subr.bf16.mxu0 0
        %4127 = vmatpush1.bf16.msra.mxu0 0
        %4128 = vmatprep.subr.bf16.mxu0 0
        %4129 = vmatpush1.bf16.msra.mxu0 0
        %4130 = vmatprep.subr.bf16.mxu0 0
        %4131 = vmatpush1.bf16.msra.mxu0 0
        %4132 = vmatprep.subr.bf16.mxu0 0
        %4133 = vmatpush1.bf16.msra.mxu0 0
        %4134 = vmatprep.subr.bf16.mxu0 0
        %4135 = vmatpush1.bf16.msra.mxu0 0
        %4136 = vmatprep.subr.bf16.mxu0 0
        %4137 = vmatpush1.bf16.msra.mxu0 0
        %4138 = vmatprep.subr.bf16.mxu0 0
        %4139 = vmatpush1.bf16.msra.mxu0 0
        %4140 = vmatprep.subr.bf16.mxu0 0
        %4141 = vmatpush1.bf16.msra.mxu0 0
        %4142 = vmatprep.mubr.bf16.mxu0 0
        %4143 = vmatmul.mubr.bf16.gmra.mrb[0].mxu0 %v4108
        %v4144 = vpop.f32.mrb[0].mxu0
        %v4145 = vadd.f32 0.0, %v4144
        %v4146 = vpop.f32.mrb[0].mxu0
        %v4147 = vpop.f32.mrb[0].mxu0
        %v4148 = vadd.f32 0.0, %v4147
        %v4149 = vpop.f32.mrb[0].mxu0
        %4150 = vdwg.mxu0
        %v4151 = vpack.c.bf16 %v3488, %v3485
        %v4152 = vpack.c.bf16 %v3532, %v3529
        %v4153 = vpack.c.bf16 %v3576, %v3573
        %v4154 = vpack.c.bf16 %v3620, %v3617
        %v4155 = vpack.c.bf16 %v3664, %v3661
        %v4156 = vpack.c.bf16 %v3708, %v3705
        %v4157 = vpack.c.bf16 %v3752, %v3749
        %v4158 = vpack.c.bf16 %v3796, %v3793
        %v4159 = vpack.c.bf16 %v3840, %v3837
        %v4160 = vpack.c.bf16 %v3884, %v3881
        %v4161 = vpack.c.bf16 %v3928, %v3925
        %v4162 = vpack.c.bf16 %v3972, %v3969
        %v4163 = vpack.c.bf16 %v4016, %v4013
        %v4164 = vpack.c.bf16 %v4060, %v4057
        %v4165 = vpack.c.bf16 %v4104, %v4101
        %v4166 = vpack.c.bf16 %v4148, %v4145
        %4168 = vrot.lane.b32.xlu0 %v4151, 96
        %v4169 = vpop.permute.xlu0 %4168
        %4170 = vrot.lane.b32.xlu0 %v4151, 92
        %v4171 = vpop.permute.xlu0 %4170
        %v4173 = vsel %vm1838, %v4169, 0
        %v4176 = vsel %vm1838, %v4171, 0
        %4178 = vmatprep.subr.bf16.mxu0 0
        %4179 = vmatpush1.bf16.xpose.msra.mxu0 %v4176
        %4180 = vmatprep.subr.bf16.mxu0 0
        %4181 = vmatpush1.bf16.xpose.msra.mxu0 0
        %4182 = vmatprep.subr.bf16.mxu0 0
        %4183 = vmatpush1.bf16.xpose.msra.mxu0 0
        %4184 = vmatprep.subr.bf16.mxu0 0
        %4185 = vmatpush1.bf16.xpose.msra.mxu0 0
        %4186 = vmatprep.subr.bf16.mxu0 0
        %4187 = vmatpush1.bf16.xpose.msra.mxu0 0
        %4188 = vmatprep.subr.bf16.mxu0 0
        %4189 = vmatpush1.bf16.xpose.msra.mxu0 0
        %4190 = vmatprep.subr.bf16.mxu0 0
        %4191 = vmatpush1.bf16.xpose.msra.mxu0 0
        %4192 = vmatprep.subr.bf16.mxu0 0
        %4193 = vmatpush1.bf16.xpose.msra.mxu0 0
        %4194 = vmatprep.subr.bf16.mxu0 0
        %4195 = vmatpush1.bf16.xpose.msra.mxu0 0
        %4196 = vmatprep.subr.bf16.mxu0 0
        %4197 = vmatpush1.bf16.xpose.msra.mxu0 0
        %4198 = vmatprep.subr.bf16.mxu0 0
        %4199 = vmatpush1.bf16.xpose.msra.mxu0 0
        %4200 = vmatprep.subr.bf16.mxu0 0
        %4201 = vmatpush1.bf16.xpose.msra.mxu0 0
        %4202 = vmatprep.subr.bf16.mxu0 0
        %4203 = vmatpush1.bf16.xpose.msra.mxu0 0
        %4204 = vmatprep.subr.bf16.mxu0 0
        %4205 = vmatpush1.bf16.xpose.msra.mxu0 0
        %4206 = vmatprep.subr.bf16.mxu0 0
        %4207 = vmatpush1.bf16.xpose.msra.mxu0 0
        %4208 = vmatprep.subr.bf16.mxu0 0
        %4209 = vmatpush1.bf16.xpose.msra.mxu0 0
        %4210 = vmatprep.mubr.bf16.mxu0 0
        %4211 = vmatmul.mubr.bf16.gmra.mrb[0].mxu0 %v4173
        %v4212 = vpop.f32.mrb[0].mxu0
        %v4213 = vadd.f32 0.0, %v4212
        %v4214 = vpop.f32.mrb[0].mxu0
        %v4215 = vpop.f32.mrb[0].mxu0
        %v4216 = vadd.f32 0.0, %v4215
        %v4217 = vpop.f32.mrb[0].mxu0
        %4218 = vdwg.mxu0
        %4220 = vrot.lane.b32.xlu0 %v4152, 96
        %v4221 = vpop.permute.xlu0 %4220
        %4222 = vrot.lane.b32.xlu0 %v4152, 92
        %v4223 = vpop.permute.xlu0 %4222
        %v4225 = vsel %vm1838, %v4221, 0
        %v4228 = vsel %vm1838, %v4223, 0
        %4230 = vmatprep.subr.bf16.mxu0 0
        %4231 = vmatpush1.bf16.xpose.msra.mxu0 %v4228
        %4232 = vmatprep.subr.bf16.mxu0 0
        %4233 = vmatpush1.bf16.xpose.msra.mxu0 0
        %4234 = vmatprep.subr.bf16.mxu0 0
        %4235 = vmatpush1.bf16.xpose.msra.mxu0 0
        %4236 = vmatprep.subr.bf16.mxu0 0
        %4237 = vmatpush1.bf16.xpose.msra.mxu0 0
        %4238 = vmatprep.subr.bf16.mxu0 0
        %4239 = vmatpush1.bf16.xpose.msra.mxu0 0
        %4240 = vmatprep.subr.bf16.mxu0 0
        %4241 = vmatpush1.bf16.xpose.msra.mxu0 0
        %4242 = vmatprep.subr.bf16.mxu0 0
        %4243 = vmatpush1.bf16.xpose.msra.mxu0 0
        %4244 = vmatprep.subr.bf16.mxu0 0
        %4245 = vmatpush1.bf16.xpose.msra.mxu0 0
        %4246 = vmatprep.subr.bf16.mxu0 0
        %4247 = vmatpush1.bf16.xpose.msra.mxu0 0
        %4248 = vmatprep.subr.bf16.mxu0 0
        %4249 = vmatpush1.bf16.xpose.msra.mxu0 0
        %4250 = vmatprep.subr.bf16.mxu0 0
        %4251 = vmatpush1.bf16.xpose.msra.mxu0 0
        %4252 = vmatprep.subr.bf16.mxu0 0
        %4253 = vmatpush1.bf16.xpose.msra.mxu0 0
        %4254 = vmatprep.subr.bf16.mxu0 0
        %4255 = vmatpush1.bf16.xpose.msra.mxu0 0
        %4256 = vmatprep.subr.bf16.mxu0 0
        %4257 = vmatpush1.bf16.xpose.msra.mxu0 0
        %4258 = vmatprep.subr.bf16.mxu0 0
        %4259 = vmatpush1.bf16.xpose.msra.mxu0 0
        %4260 = vmatprep.subr.bf16.mxu0 0
        %4261 = vmatpush1.bf16.xpose.msra.mxu0 0
        %4262 = vmatprep.mubr.bf16.mxu0 0
        %4263 = vmatmul.mubr.bf16.gmra.mrb[0].mxu0 %v4225
        %v4264 = vpop.f32.mrb[0].mxu0
        %v4265 = vadd.f32 0.0, %v4264
        %v4266 = vpop.f32.mrb[0].mxu0
        %v4267 = vpop.f32.mrb[0].mxu0
        %v4268 = vadd.f32 0.0, %v4267
        %v4269 = vpop.f32.mrb[0].mxu0
        %4270 = vdwg.mxu0
        %4272 = vrot.lane.b32.xlu0 %v4153, 96
        %v4273 = vpop.permute.xlu0 %4272
        %4274 = vrot.lane.b32.xlu0 %v4153, 92
        %v4275 = vpop.permute.xlu0 %4274
        %v4277 = vsel %vm1838, %v4273, 0
        %v4280 = vsel %vm1838, %v4275, 0
        %4282 = vmatprep.subr.bf16.mxu0 0
        %4283 = vmatpush1.bf16.xpose.msra.mxu0 %v4280
        %4284 = vmatprep.subr.bf16.mxu0 0
        %4285 = vmatpush1.bf16.xpose.msra.mxu0 0
        %4286 = vmatprep.subr.bf16.mxu0 0
        %4287 = vmatpush1.bf16.xpose.msra.mxu0 0
        %4288 = vmatprep.subr.bf16.mxu0 0
        %4289 = vmatpush1.bf16.xpose.msra.mxu0 0
        %4290 = vmatprep.subr.bf16.mxu0 0
        %4291 = vmatpush1.bf16.xpose.msra.mxu0 0
        %4292 = vmatprep.subr.bf16.mxu0 0
        %4293 = vmatpush1.bf16.xpose.msra.mxu0 0
        %4294 = vmatprep.subr.bf16.mxu0 0
        %4295 = vmatpush1.bf16.xpose.msra.mxu0 0
        %4296 = vmatprep.subr.bf16.mxu0 0
        %4297 = vmatpush1.bf16.xpose.msra.mxu0 0
        %4298 = vmatprep.subr.bf16.mxu0 0
        %4299 = vmatpush1.bf16.xpose.msra.mxu0 0
        %4300 = vmatprep.subr.bf16.mxu0 0
        %4301 = vmatpush1.bf16.xpose.msra.mxu0 0
        %4302 = vmatprep.subr.bf16.mxu0 0
        %4303 = vmatpush1.bf16.xpose.msra.mxu0 0
        %4304 = vmatprep.subr.bf16.mxu0 0
        %4305 = vmatpush1.bf16.xpose.msra.mxu0 0
        %4306 = vmatprep.subr.bf16.mxu0 0
        %4307 = vmatpush1.bf16.xpose.msra.mxu0 0
        %4308 = vmatprep.subr.bf16.mxu0 0
        %4309 = vmatpush1.bf16.xpose.msra.mxu0 0
        %4310 = vmatprep.subr.bf16.mxu0 0
        %4311 = vmatpush1.bf16.xpose.msra.mxu0 0
        %4312 = vmatprep.subr.bf16.mxu0 0
        %4313 = vmatpush1.bf16.xpose.msra.mxu0 0
        %4314 = vmatprep.mubr.bf16.mxu0 0
        %4315 = vmatmul.mubr.bf16.gmra.mrb[0].mxu0 %v4277
        %v4316 = vpop.f32.mrb[0].mxu0
        %v4317 = vadd.f32 0.0, %v4316
        %v4318 = vpop.f32.mrb[0].mxu0
        %v4319 = vpop.f32.mrb[0].mxu0
        %v4320 = vadd.f32 0.0, %v4319
        %v4321 = vpop.f32.mrb[0].mxu0
        %4322 = vdwg.mxu0
        %4324 = vrot.lane.b32.xlu0 %v4154, 96
        %v4325 = vpop.permute.xlu0 %4324
        %4326 = vrot.lane.b32.xlu0 %v4154, 92
        %v4327 = vpop.permute.xlu0 %4326
        %v4329 = vsel %vm1838, %v4325, 0
        %v4332 = vsel %vm1838, %v4327, 0
        %4334 = vmatprep.subr.bf16.mxu0 0
        %4335 = vmatpush1.bf16.xpose.msra.mxu0 %v4332
        %4336 = vmatprep.subr.bf16.mxu0 0
        %4337 = vmatpush1.bf16.xpose.msra.mxu0 0
        %4338 = vmatprep.subr.bf16.mxu0 0
        %4339 = vmatpush1.bf16.xpose.msra.mxu0 0
        %4340 = vmatprep.subr.bf16.mxu0 0
        %4341 = vmatpush1.bf16.xpose.msra.mxu0 0
        %4342 = vmatprep.subr.bf16.mxu0 0
        %4343 = vmatpush1.bf16.xpose.msra.mxu0 0
        %4344 = vmatprep.subr.bf16.mxu0 0
        %4345 = vmatpush1.bf16.xpose.msra.mxu0 0
        %4346 = vmatprep.subr.bf16.mxu0 0
        %4347 = vmatpush1.bf16.xpose.msra.mxu0 0
        %4348 = vmatprep.subr.bf16.mxu0 0
        %4349 = vmatpush1.bf16.xpose.msra.mxu0 0
        %4350 = vmatprep.subr.bf16.mxu0 0
        %4351 = vmatpush1.bf16.xpose.msra.mxu0 0
        %4352 = vmatprep.subr.bf16.mxu0 0
        %4353 = vmatpush1.bf16.xpose.msra.mxu0 0
        %4354 = vmatprep.subr.bf16.mxu0 0
        %4355 = vmatpush1.bf16.xpose.msra.mxu0 0
        %4356 = vmatprep.subr.bf16.mxu0 0
        %4357 = vmatpush1.bf16.xpose.msra.mxu0 0
        %4358 = vmatprep.subr.bf16.mxu0 0
        %4359 = vmatpush1.bf16.xpose.msra.mxu0 0
        %4360 = vmatprep.subr.bf16.mxu0 0
        %4361 = vmatpush1.bf16.xpose.msra.mxu0 0
        %4362 = vmatprep.subr.bf16.mxu0 0
        %4363 = vmatpush1.bf16.xpose.msra.mxu0 0
        %4364 = vmatprep.subr.bf16.mxu0 0
        %4365 = vmatpush1.bf16.xpose.msra.mxu0 0
        %4366 = vmatprep.mubr.bf16.mxu0 0
        %4367 = vmatmul.mubr.bf16.gmra.mrb[0].mxu0 %v4329
        %v4368 = vpop.f32.mrb[0].mxu0
        %v4369 = vadd.f32 0.0, %v4368
        %v4370 = vpop.f32.mrb[0].mxu0
        %v4371 = vpop.f32.mrb[0].mxu0
        %v4372 = vadd.f32 0.0, %v4371
        %v4373 = vpop.f32.mrb[0].mxu0
        %4374 = vdwg.mxu0
        %4376 = vrot.lane.b32.xlu0 %v4155, 96
        %v4377 = vpop.permute.xlu0 %4376
        %4378 = vrot.lane.b32.xlu0 %v4155, 92
        %v4379 = vpop.permute.xlu0 %4378
        %v4381 = vsel %vm1838, %v4377, 0
        %v4384 = vsel %vm1838, %v4379, 0
        %4386 = vmatprep.subr.bf16.mxu0 0
        %4387 = vmatpush1.bf16.xpose.msra.mxu0 %v4384
        %4388 = vmatprep.subr.bf16.mxu0 0
        %4389 = vmatpush1.bf16.xpose.msra.mxu0 0
        %4390 = vmatprep.subr.bf16.mxu0 0
        %4391 = vmatpush1.bf16.xpose.msra.mxu0 0
        %4392 = vmatprep.subr.bf16.mxu0 0
        %4393 = vmatpush1.bf16.xpose.msra.mxu0 0
        %4394 = vmatprep.subr.bf16.mxu0 0
        %4395 = vmatpush1.bf16.xpose.msra.mxu0 0
        %4396 = vmatprep.subr.bf16.mxu0 0
        %4397 = vmatpush1.bf16.xpose.msra.mxu0 0
        %4398 = vmatprep.subr.bf16.mxu0 0
        %4399 = vmatpush1.bf16.xpose.msra.mxu0 0
        %4400 = vmatprep.subr.bf16.mxu0 0
        %4401 = vmatpush1.bf16.xpose.msra.mxu0 0
        %4402 = vmatprep.subr.bf16.mxu0 0
        %4403 = vmatpush1.bf16.xpose.msra.mxu0 0
        %4404 = vmatprep.subr.bf16.mxu0 0
        %4405 = vmatpush1.bf16.xpose.msra.mxu0 0
        %4406 = vmatprep.subr.bf16.mxu0 0
        %4407 = vmatpush1.bf16.xpose.msra.mxu0 0
        %4408 = vmatprep.subr.bf16.mxu0 0
        %4409 = vmatpush1.bf16.xpose.msra.mxu0 0
        %4410 = vmatprep.subr.bf16.mxu0 0
        %4411 = vmatpush1.bf16.xpose.msra.mxu0 0
        %4412 = vmatprep.subr.bf16.mxu0 0
        %4413 = vmatpush1.bf16.xpose.msra.mxu0 0
        %4414 = vmatprep.subr.bf16.mxu0 0
        %4415 = vmatpush1.bf16.xpose.msra.mxu0 0
        %4416 = vmatprep.subr.bf16.mxu0 0
        %4417 = vmatpush1.bf16.xpose.msra.mxu0 0
        %4418 = vmatprep.mubr.bf16.mxu0 0
        %4419 = vmatmul.mubr.bf16.gmra.mrb[0].mxu0 %v4381
        %v4420 = vpop.f32.mrb[0].mxu0
        %v4421 = vadd.f32 0.0, %v4420
        %v4422 = vpop.f32.mrb[0].mxu0
        %v4423 = vpop.f32.mrb[0].mxu0
        %v4424 = vadd.f32 0.0, %v4423
        %v4425 = vpop.f32.mrb[0].mxu0
        %4426 = vdwg.mxu0
        %4428 = vrot.lane.b32.xlu0 %v4156, 96
        %v4429 = vpop.permute.xlu0 %4428
        %4430 = vrot.lane.b32.xlu0 %v4156, 92
        %v4431 = vpop.permute.xlu0 %4430
        %v4433 = vsel %vm1838, %v4429, 0
        %v4436 = vsel %vm1838, %v4431, 0
        %4438 = vmatprep.subr.bf16.mxu0 0
        %4439 = vmatpush1.bf16.xpose.msra.mxu0 %v4436
        %4440 = vmatprep.subr.bf16.mxu0 0
        %4441 = vmatpush1.bf16.xpose.msra.mxu0 0
        %4442 = vmatprep.subr.bf16.mxu0 0
        %4443 = vmatpush1.bf16.xpose.msra.mxu0 0
        %4444 = vmatprep.subr.bf16.mxu0 0
        %4445 = vmatpush1.bf16.xpose.msra.mxu0 0
        %4446 = vmatprep.subr.bf16.mxu0 0
        %4447 = vmatpush1.bf16.xpose.msra.mxu0 0
        %4448 = vmatprep.subr.bf16.mxu0 0
        %4449 = vmatpush1.bf16.xpose.msra.mxu0 0
        %4450 = vmatprep.subr.bf16.mxu0 0
        %4451 = vmatpush1.bf16.xpose.msra.mxu0 0
        %4452 = vmatprep.subr.bf16.mxu0 0
        %4453 = vmatpush1.bf16.xpose.msra.mxu0 0
        %4454 = vmatprep.subr.bf16.mxu0 0
        %4455 = vmatpush1.bf16.xpose.msra.mxu0 0
        %4456 = vmatprep.subr.bf16.mxu0 0
        %4457 = vmatpush1.bf16.xpose.msra.mxu0 0
        %4458 = vmatprep.subr.bf16.mxu0 0
        %4459 = vmatpush1.bf16.xpose.msra.mxu0 0
        %4460 = vmatprep.subr.bf16.mxu0 0
        %4461 = vmatpush1.bf16.xpose.msra.mxu0 0
        %4462 = vmatprep.subr.bf16.mxu0 0
        %4463 = vmatpush1.bf16.xpose.msra.mxu0 0
        %4464 = vmatprep.subr.bf16.mxu0 0
        %4465 = vmatpush1.bf16.xpose.msra.mxu0 0
        %4466 = vmatprep.subr.bf16.mxu0 0
        %4467 = vmatpush1.bf16.xpose.msra.mxu0 0
        %4468 = vmatprep.subr.bf16.mxu0 0
        %4469 = vmatpush1.bf16.xpose.msra.mxu0 0
        %4470 = vmatprep.mubr.bf16.mxu0 0
        %4471 = vmatmul.mubr.bf16.gmra.mrb[0].mxu0 %v4433
        %v4472 = vpop.f32.mrb[0].mxu0
        %v4473 = vadd.f32 0.0, %v4472
        %v4474 = vpop.f32.mrb[0].mxu0
        %v4475 = vpop.f32.mrb[0].mxu0
        %v4476 = vadd.f32 0.0, %v4475
        %v4477 = vpop.f32.mrb[0].mxu0
        %4478 = vdwg.mxu0
        %4480 = vrot.lane.b32.xlu0 %v4157, 96
        %v4481 = vpop.permute.xlu0 %4480
        %4482 = vrot.lane.b32.xlu0 %v4157, 92
        %v4483 = vpop.permute.xlu0 %4482
        %v4485 = vsel %vm1838, %v4481, 0
        %v4488 = vsel %vm1838, %v4483, 0
        %4490 = vmatprep.subr.bf16.mxu0 0
        %4491 = vmatpush1.bf16.xpose.msra.mxu0 %v4488
        %4492 = vmatprep.subr.bf16.mxu0 0
        %4493 = vmatpush1.bf16.xpose.msra.mxu0 0
        %4494 = vmatprep.subr.bf16.mxu0 0
        %4495 = vmatpush1.bf16.xpose.msra.mxu0 0
        %4496 = vmatprep.subr.bf16.mxu0 0
        %4497 = vmatpush1.bf16.xpose.msra.mxu0 0
        %4498 = vmatprep.subr.bf16.mxu0 0
        %4499 = vmatpush1.bf16.xpose.msra.mxu0 0
        %4500 = vmatprep.subr.bf16.mxu0 0
        %4501 = vmatpush1.bf16.xpose.msra.mxu0 0
        %4502 = vmatprep.subr.bf16.mxu0 0
        %4503 = vmatpush1.bf16.xpose.msra.mxu0 0
        %4504 = vmatprep.subr.bf16.mxu0 0
        %4505 = vmatpush1.bf16.xpose.msra.mxu0 0
        %4506 = vmatprep.subr.bf16.mxu0 0
        %4507 = vmatpush1.bf16.xpose.msra.mxu0 0
        %4508 = vmatprep.subr.bf16.mxu0 0
        %4509 = vmatpush1.bf16.xpose.msra.mxu0 0
        %4510 = vmatprep.subr.bf16.mxu0 0
        %4511 = vmatpush1.bf16.xpose.msra.mxu0 0
        %4512 = vmatprep.subr.bf16.mxu0 0
        %4513 = vmatpush1.bf16.xpose.msra.mxu0 0
        %4514 = vmatprep.subr.bf16.mxu0 0
        %4515 = vmatpush1.bf16.xpose.msra.mxu0 0
        %4516 = vmatprep.subr.bf16.mxu0 0
        %4517 = vmatpush1.bf16.xpose.msra.mxu0 0
        %4518 = vmatprep.subr.bf16.mxu0 0
        %4519 = vmatpush1.bf16.xpose.msra.mxu0 0
        %4520 = vmatprep.subr.bf16.mxu0 0
        %4521 = vmatpush1.bf16.xpose.msra.mxu0 0
        %4522 = vmatprep.mubr.bf16.mxu0 0
        %4523 = vmatmul.mubr.bf16.gmra.mrb[0].mxu0 %v4485
        %v4524 = vpop.f32.mrb[0].mxu0
        %v4525 = vadd.f32 0.0, %v4524
        %v4526 = vpop.f32.mrb[0].mxu0
        %v4527 = vpop.f32.mrb[0].mxu0
        %v4528 = vadd.f32 0.0, %v4527
        %v4529 = vpop.f32.mrb[0].mxu0
        %4530 = vdwg.mxu0
        %4532 = vrot.lane.b32.xlu0 %v4158, 96
        %v4533 = vpop.permute.xlu0 %4532
        %4534 = vrot.lane.b32.xlu0 %v4158, 92
        %v4535 = vpop.permute.xlu0 %4534
        %v4537 = vsel %vm1838, %v4533, 0
        %v4540 = vsel %vm1838, %v4535, 0
        %4542 = vmatprep.subr.bf16.mxu0 0
        %4543 = vmatpush1.bf16.xpose.msra.mxu0 %v4540
        %4544 = vmatprep.subr.bf16.mxu0 0
        %4545 = vmatpush1.bf16.xpose.msra.mxu0 0
        %4546 = vmatprep.subr.bf16.mxu0 0
        %4547 = vmatpush1.bf16.xpose.msra.mxu0 0
        %4548 = vmatprep.subr.bf16.mxu0 0
        %4549 = vmatpush1.bf16.xpose.msra.mxu0 0
        %4550 = vmatprep.subr.bf16.mxu0 0
        %4551 = vmatpush1.bf16.xpose.msra.mxu0 0
        %4552 = vmatprep.subr.bf16.mxu0 0
        %4553 = vmatpush1.bf16.xpose.msra.mxu0 0
        %4554 = vmatprep.subr.bf16.mxu0 0
        %4555 = vmatpush1.bf16.xpose.msra.mxu0 0
        %4556 = vmatprep.subr.bf16.mxu0 0
        %4557 = vmatpush1.bf16.xpose.msra.mxu0 0
        %4558 = vmatprep.subr.bf16.mxu0 0
        %4559 = vmatpush1.bf16.xpose.msra.mxu0 0
        %4560 = vmatprep.subr.bf16.mxu0 0
        %4561 = vmatpush1.bf16.xpose.msra.mxu0 0
        %4562 = vmatprep.subr.bf16.mxu0 0
        %4563 = vmatpush1.bf16.xpose.msra.mxu0 0
        %4564 = vmatprep.subr.bf16.mxu0 0
        %4565 = vmatpush1.bf16.xpose.msra.mxu0 0
        %4566 = vmatprep.subr.bf16.mxu0 0
        %4567 = vmatpush1.bf16.xpose.msra.mxu0 0
        %4568 = vmatprep.subr.bf16.mxu0 0
        %4569 = vmatpush1.bf16.xpose.msra.mxu0 0
        %4570 = vmatprep.subr.bf16.mxu0 0
        %4571 = vmatpush1.bf16.xpose.msra.mxu0 0
        %4572 = vmatprep.subr.bf16.mxu0 0
        %4573 = vmatpush1.bf16.xpose.msra.mxu0 0
        %4574 = vmatprep.mubr.bf16.mxu0 0
        %4575 = vmatmul.mubr.bf16.gmra.mrb[0].mxu0 %v4537
        %v4576 = vpop.f32.mrb[0].mxu0
        %v4577 = vadd.f32 0.0, %v4576
        %v4578 = vpop.f32.mrb[0].mxu0
        %v4579 = vpop.f32.mrb[0].mxu0
        %v4580 = vadd.f32 0.0, %v4579
        %v4581 = vpop.f32.mrb[0].mxu0
        %4582 = vdwg.mxu0
        %4584 = vrot.lane.b32.xlu0 %v4159, 96
        %v4585 = vpop.permute.xlu0 %4584
        %4586 = vrot.lane.b32.xlu0 %v4159, 92
        %v4587 = vpop.permute.xlu0 %4586
        %v4589 = vsel %vm1838, %v4585, 0
        %v4592 = vsel %vm1838, %v4587, 0
        %4594 = vmatprep.subr.bf16.mxu0 0
        %4595 = vmatpush1.bf16.xpose.msra.mxu0 %v4592
        %4596 = vmatprep.subr.bf16.mxu0 0
        %4597 = vmatpush1.bf16.xpose.msra.mxu0 0
        %4598 = vmatprep.subr.bf16.mxu0 0
        %4599 = vmatpush1.bf16.xpose.msra.mxu0 0
        %4600 = vmatprep.subr.bf16.mxu0 0
        %4601 = vmatpush1.bf16.xpose.msra.mxu0 0
        %4602 = vmatprep.subr.bf16.mxu0 0
        %4603 = vmatpush1.bf16.xpose.msra.mxu0 0
        %4604 = vmatprep.subr.bf16.mxu0 0
        %4605 = vmatpush1.bf16.xpose.msra.mxu0 0
        %4606 = vmatprep.subr.bf16.mxu0 0
        %4607 = vmatpush1.bf16.xpose.msra.mxu0 0
        %4608 = vmatprep.subr.bf16.mxu0 0
        %4609 = vmatpush1.bf16.xpose.msra.mxu0 0
        %4610 = vmatprep.subr.bf16.mxu0 0
        %4611 = vmatpush1.bf16.xpose.msra.mxu0 0
        %4612 = vmatprep.subr.bf16.mxu0 0
        %4613 = vmatpush1.bf16.xpose.msra.mxu0 0
        %4614 = vmatprep.subr.bf16.mxu0 0
        %4615 = vmatpush1.bf16.xpose.msra.mxu0 0
        %4616 = vmatprep.subr.bf16.mxu0 0
        %4617 = vmatpush1.bf16.xpose.msra.mxu0 0
        %4618 = vmatprep.subr.bf16.mxu0 0
        %4619 = vmatpush1.bf16.xpose.msra.mxu0 0
        %4620 = vmatprep.subr.bf16.mxu0 0
        %4621 = vmatpush1.bf16.xpose.msra.mxu0 0
        %4622 = vmatprep.subr.bf16.mxu0 0
        %4623 = vmatpush1.bf16.xpose.msra.mxu0 0
        %4624 = vmatprep.subr.bf16.mxu0 0
        %4625 = vmatpush1.bf16.xpose.msra.mxu0 0
        %4626 = vmatprep.mubr.bf16.mxu0 0
        %4627 = vmatmul.mubr.bf16.gmra.mrb[0].mxu0 %v4589
        %v4628 = vpop.f32.mrb[0].mxu0
        %v4629 = vadd.f32 0.0, %v4628
        %v4630 = vpop.f32.mrb[0].mxu0
        %v4631 = vpop.f32.mrb[0].mxu0
        %v4632 = vadd.f32 0.0, %v4631
        %v4633 = vpop.f32.mrb[0].mxu0
        %4634 = vdwg.mxu0
        %4636 = vrot.lane.b32.xlu0 %v4160, 96
        %v4637 = vpop.permute.xlu0 %4636
        %4638 = vrot.lane.b32.xlu0 %v4160, 92
        %v4639 = vpop.permute.xlu0 %4638
        %v4641 = vsel %vm1838, %v4637, 0
        %v4644 = vsel %vm1838, %v4639, 0
        %4646 = vmatprep.subr.bf16.mxu0 0
        %4647 = vmatpush1.bf16.xpose.msra.mxu0 %v4644
        %4648 = vmatprep.subr.bf16.mxu0 0
        %4649 = vmatpush1.bf16.xpose.msra.mxu0 0
        %4650 = vmatprep.subr.bf16.mxu0 0
        %4651 = vmatpush1.bf16.xpose.msra.mxu0 0
        %4652 = vmatprep.subr.bf16.mxu0 0
        %4653 = vmatpush1.bf16.xpose.msra.mxu0 0
        %4654 = vmatprep.subr.bf16.mxu0 0
        %4655 = vmatpush1.bf16.xpose.msra.mxu0 0
        %4656 = vmatprep.subr.bf16.mxu0 0
        %4657 = vmatpush1.bf16.xpose.msra.mxu0 0
        %4658 = vmatprep.subr.bf16.mxu0 0
        %4659 = vmatpush1.bf16.xpose.msra.mxu0 0
        %4660 = vmatprep.subr.bf16.mxu0 0
        %4661 = vmatpush1.bf16.xpose.msra.mxu0 0
        %4662 = vmatprep.subr.bf16.mxu0 0
        %4663 = vmatpush1.bf16.xpose.msra.mxu0 0
        %4664 = vmatprep.subr.bf16.mxu0 0
        %4665 = vmatpush1.bf16.xpose.msra.mxu0 0
        %4666 = vmatprep.subr.bf16.mxu0 0
        %4667 = vmatpush1.bf16.xpose.msra.mxu0 0
        %4668 = vmatprep.subr.bf16.mxu0 0
        %4669 = vmatpush1.bf16.xpose.msra.mxu0 0
        %4670 = vmatprep.subr.bf16.mxu0 0
        %4671 = vmatpush1.bf16.xpose.msra.mxu0 0
        %4672 = vmatprep.subr.bf16.mxu0 0
        %4673 = vmatpush1.bf16.xpose.msra.mxu0 0
        %4674 = vmatprep.subr.bf16.mxu0 0
        %4675 = vmatpush1.bf16.xpose.msra.mxu0 0
        %4676 = vmatprep.subr.bf16.mxu0 0
        %4677 = vmatpush1.bf16.xpose.msra.mxu0 0
        %4678 = vmatprep.mubr.bf16.mxu0 0
        %4679 = vmatmul.mubr.bf16.gmra.mrb[0].mxu0 %v4641
        %v4680 = vpop.f32.mrb[0].mxu0
        %v4681 = vadd.f32 0.0, %v4680
        %v4682 = vpop.f32.mrb[0].mxu0
        %v4683 = vpop.f32.mrb[0].mxu0
        %v4684 = vadd.f32 0.0, %v4683
        %v4685 = vpop.f32.mrb[0].mxu0
        %4686 = vdwg.mxu0
        %4688 = vrot.lane.b32.xlu0 %v4161, 96
        %v4689 = vpop.permute.xlu0 %4688
        %4690 = vrot.lane.b32.xlu0 %v4161, 92
        %v4691 = vpop.permute.xlu0 %4690
        %v4693 = vsel %vm1838, %v4689, 0
        %v4696 = vsel %vm1838, %v4691, 0
        %4698 = vmatprep.subr.bf16.mxu0 0
        %4699 = vmatpush1.bf16.xpose.msra.mxu0 %v4696
        %4700 = vmatprep.subr.bf16.mxu0 0
        %4701 = vmatpush1.bf16.xpose.msra.mxu0 0
        %4702 = vmatprep.subr.bf16.mxu0 0
        %4703 = vmatpush1.bf16.xpose.msra.mxu0 0
        %4704 = vmatprep.subr.bf16.mxu0 0
        %4705 = vmatpush1.bf16.xpose.msra.mxu0 0
        %4706 = vmatprep.subr.bf16.mxu0 0
        %4707 = vmatpush1.bf16.xpose.msra.mxu0 0
        %4708 = vmatprep.subr.bf16.mxu0 0
        %4709 = vmatpush1.bf16.xpose.msra.mxu0 0
        %4710 = vmatprep.subr.bf16.mxu0 0
        %4711 = vmatpush1.bf16.xpose.msra.mxu0 0
        %4712 = vmatprep.subr.bf16.mxu0 0
        %4713 = vmatpush1.bf16.xpose.msra.mxu0 0
        %4714 = vmatprep.subr.bf16.mxu0 0
        %4715 = vmatpush1.bf16.xpose.msra.mxu0 0
        %4716 = vmatprep.subr.bf16.mxu0 0
        %4717 = vmatpush1.bf16.xpose.msra.mxu0 0
        %4718 = vmatprep.subr.bf16.mxu0 0
        %4719 = vmatpush1.bf16.xpose.msra.mxu0 0
        %4720 = vmatprep.subr.bf16.mxu0 0
        %4721 = vmatpush1.bf16.xpose.msra.mxu0 0
        %4722 = vmatprep.subr.bf16.mxu0 0
        %4723 = vmatpush1.bf16.xpose.msra.mxu0 0
        %4724 = vmatprep.subr.bf16.mxu0 0
        %4725 = vmatpush1.bf16.xpose.msra.mxu0 0
        %4726 = vmatprep.subr.bf16.mxu0 0
        %4727 = vmatpush1.bf16.xpose.msra.mxu0 0
        %4728 = vmatprep.subr.bf16.mxu0 0
        %4729 = vmatpush1.bf16.xpose.msra.mxu0 0
        %4730 = vmatprep.mubr.bf16.mxu0 0
        %4731 = vmatmul.mubr.bf16.gmra.mrb[0].mxu0 %v4693
        %v4732 = vpop.f32.mrb[0].mxu0
        %v4733 = vadd.f32 0.0, %v4732
        %v4734 = vpop.f32.mrb[0].mxu0
        %v4735 = vpop.f32.mrb[0].mxu0
        %v4736 = vadd.f32 0.0, %v4735
        %v4737 = vpop.f32.mrb[0].mxu0
        %4738 = vdwg.mxu0
        %4740 = vrot.lane.b32.xlu0 %v4162, 96
        %v4741 = vpop.permute.xlu0 %4740
        %4742 = vrot.lane.b32.xlu0 %v4162, 92
        %v4743 = vpop.permute.xlu0 %4742
        %v4745 = vsel %vm1838, %v4741, 0
        %v4748 = vsel %vm1838, %v4743, 0
        %4750 = vmatprep.subr.bf16.mxu0 0
        %4751 = vmatpush1.bf16.xpose.msra.mxu0 %v4748
        %4752 = vmatprep.subr.bf16.mxu0 0
        %4753 = vmatpush1.bf16.xpose.msra.mxu0 0
        %4754 = vmatprep.subr.bf16.mxu0 0
        %4755 = vmatpush1.bf16.xpose.msra.mxu0 0
        %4756 = vmatprep.subr.bf16.mxu0 0
        %4757 = vmatpush1.bf16.xpose.msra.mxu0 0
        %4758 = vmatprep.subr.bf16.mxu0 0
        %4759 = vmatpush1.bf16.xpose.msra.mxu0 0
        %4760 = vmatprep.subr.bf16.mxu0 0
        %4761 = vmatpush1.bf16.xpose.msra.mxu0 0
        %4762 = vmatprep.subr.bf16.mxu0 0
        %4763 = vmatpush1.bf16.xpose.msra.mxu0 0
        %4764 = vmatprep.subr.bf16.mxu0 0
        %4765 = vmatpush1.bf16.xpose.msra.mxu0 0
        %4766 = vmatprep.subr.bf16.mxu0 0
        %4767 = vmatpush1.bf16.xpose.msra.mxu0 0
        %4768 = vmatprep.subr.bf16.mxu0 0
        %4769 = vmatpush1.bf16.xpose.msra.mxu0 0
        %4770 = vmatprep.subr.bf16.mxu0 0
        %4771 = vmatpush1.bf16.xpose.msra.mxu0 0
        %4772 = vmatprep.subr.bf16.mxu0 0
        %4773 = vmatpush1.bf16.xpose.msra.mxu0 0
        %4774 = vmatprep.subr.bf16.mxu0 0
        %4775 = vmatpush1.bf16.xpose.msra.mxu0 0
        %4776 = vmatprep.subr.bf16.mxu0 0
        %4777 = vmatpush1.bf16.xpose.msra.mxu0 0
        %4778 = vmatprep.subr.bf16.mxu0 0
        %4779 = vmatpush1.bf16.xpose.msra.mxu0 0
        %4780 = vmatprep.subr.bf16.mxu0 0
        %4781 = vmatpush1.bf16.xpose.msra.mxu0 0
        %4782 = vmatprep.mubr.bf16.mxu0 0
        %4783 = vmatmul.mubr.bf16.gmra.mrb[0].mxu0 %v4745
        %v4784 = vpop.f32.mrb[0].mxu0
        %v4785 = vadd.f32 0.0, %v4784
        %v4786 = vpop.f32.mrb[0].mxu0
        %v4787 = vpop.f32.mrb[0].mxu0
        %v4788 = vadd.f32 0.0, %v4787
        %v4789 = vpop.f32.mrb[0].mxu0
        %4790 = vdwg.mxu0
        %4792 = vrot.lane.b32.xlu0 %v4163, 96
        %v4793 = vpop.permute.xlu0 %4792
        %4794 = vrot.lane.b32.xlu0 %v4163, 92
        %v4795 = vpop.permute.xlu0 %4794
        %v4797 = vsel %vm1838, %v4793, 0
        %v4800 = vsel %vm1838, %v4795, 0
        %4802 = vmatprep.subr.bf16.mxu0 0
        %4803 = vmatpush1.bf16.xpose.msra.mxu0 %v4800
        %4804 = vmatprep.subr.bf16.mxu0 0
        %4805 = vmatpush1.bf16.xpose.msra.mxu0 0
        %4806 = vmatprep.subr.bf16.mxu0 0
        %4807 = vmatpush1.bf16.xpose.msra.mxu0 0
        %4808 = vmatprep.subr.bf16.mxu0 0
        %4809 = vmatpush1.bf16.xpose.msra.mxu0 0
        %4810 = vmatprep.subr.bf16.mxu0 0
        %4811 = vmatpush1.bf16.xpose.msra.mxu0 0
        %4812 = vmatprep.subr.bf16.mxu0 0
        %4813 = vmatpush1.bf16.xpose.msra.mxu0 0
        %4814 = vmatprep.subr.bf16.mxu0 0
        %4815 = vmatpush1.bf16.xpose.msra.mxu0 0
        %4816 = vmatprep.subr.bf16.mxu0 0
        %4817 = vmatpush1.bf16.xpose.msra.mxu0 0
        %4818 = vmatprep.subr.bf16.mxu0 0
        %4819 = vmatpush1.bf16.xpose.msra.mxu0 0
        %4820 = vmatprep.subr.bf16.mxu0 0
        %4821 = vmatpush1.bf16.xpose.msra.mxu0 0
        %4822 = vmatprep.subr.bf16.mxu0 0
        %4823 = vmatpush1.bf16.xpose.msra.mxu0 0
        %4824 = vmatprep.subr.bf16.mxu0 0
        %4825 = vmatpush1.bf16.xpose.msra.mxu0 0
        %4826 = vmatprep.subr.bf16.mxu0 0
        %4827 = vmatpush1.bf16.xpose.msra.mxu0 0
        %4828 = vmatprep.subr.bf16.mxu0 0
        %4829 = vmatpush1.bf16.xpose.msra.mxu0 0
        %4830 = vmatprep.subr.bf16.mxu0 0
        %4831 = vmatpush1.bf16.xpose.msra.mxu0 0
        %4832 = vmatprep.subr.bf16.mxu0 0
        %4833 = vmatpush1.bf16.xpose.msra.mxu0 0
        %4834 = vmatprep.mubr.bf16.mxu0 0
        %4835 = vmatmul.mubr.bf16.gmra.mrb[0].mxu0 %v4797
        %v4836 = vpop.f32.mrb[0].mxu0
        %v4837 = vadd.f32 0.0, %v4836
        %v4838 = vpop.f32.mrb[0].mxu0
        %v4839 = vpop.f32.mrb[0].mxu0
        %v4840 = vadd.f32 0.0, %v4839
        %v4841 = vpop.f32.mrb[0].mxu0
        %4842 = vdwg.mxu0
        %4844 = vrot.lane.b32.xlu0 %v4164, 96
        %v4845 = vpop.permute.xlu0 %4844
        %4846 = vrot.lane.b32.xlu0 %v4164, 92
        %v4847 = vpop.permute.xlu0 %4846
        %v4849 = vsel %vm1838, %v4845, 0
        %v4852 = vsel %vm1838, %v4847, 0
        %4854 = vmatprep.subr.bf16.mxu0 0
        %4855 = vmatpush1.bf16.xpose.msra.mxu0 %v4852
        %4856 = vmatprep.subr.bf16.mxu0 0
        %4857 = vmatpush1.bf16.xpose.msra.mxu0 0
        %4858 = vmatprep.subr.bf16.mxu0 0
        %4859 = vmatpush1.bf16.xpose.msra.mxu0 0
        %4860 = vmatprep.subr.bf16.mxu0 0
        %4861 = vmatpush1.bf16.xpose.msra.mxu0 0
        %4862 = vmatprep.subr.bf16.mxu0 0
        %4863 = vmatpush1.bf16.xpose.msra.mxu0 0
        %4864 = vmatprep.subr.bf16.mxu0 0
        %4865 = vmatpush1.bf16.xpose.msra.mxu0 0
        %4866 = vmatprep.subr.bf16.mxu0 0
        %4867 = vmatpush1.bf16.xpose.msra.mxu0 0
        %4868 = vmatprep.subr.bf16.mxu0 0
        %4869 = vmatpush1.bf16.xpose.msra.mxu0 0
        %4870 = vmatprep.subr.bf16.mxu0 0
        %4871 = vmatpush1.bf16.xpose.msra.mxu0 0
        %4872 = vmatprep.subr.bf16.mxu0 0
        %4873 = vmatpush1.bf16.xpose.msra.mxu0 0
        %4874 = vmatprep.subr.bf16.mxu0 0
        %4875 = vmatpush1.bf16.xpose.msra.mxu0 0
        %4876 = vmatprep.subr.bf16.mxu0 0
        %4877 = vmatpush1.bf16.xpose.msra.mxu0 0
        %4878 = vmatprep.subr.bf16.mxu0 0
        %4879 = vmatpush1.bf16.xpose.msra.mxu0 0
        %4880 = vmatprep.subr.bf16.mxu0 0
        %4881 = vmatpush1.bf16.xpose.msra.mxu0 0
        %4882 = vmatprep.subr.bf16.mxu0 0
        %4883 = vmatpush1.bf16.xpose.msra.mxu0 0
        %4884 = vmatprep.subr.bf16.mxu0 0
        %4885 = vmatpush1.bf16.xpose.msra.mxu0 0
        %4886 = vmatprep.mubr.bf16.mxu0 0
        %4887 = vmatmul.mubr.bf16.gmra.mrb[0].mxu0 %v4849
        %v4888 = vpop.f32.mrb[0].mxu0
        %v4889 = vadd.f32 0.0, %v4888
        %v4890 = vpop.f32.mrb[0].mxu0
        %v4891 = vpop.f32.mrb[0].mxu0
        %v4892 = vadd.f32 0.0, %v4891
        %v4893 = vpop.f32.mrb[0].mxu0
        %4894 = vdwg.mxu0
        %4896 = vrot.lane.b32.xlu0 %v4165, 96
        %v4897 = vpop.permute.xlu0 %4896
        %4898 = vrot.lane.b32.xlu0 %v4165, 92
        %v4899 = vpop.permute.xlu0 %4898
        %v4901 = vsel %vm1838, %v4897, 0
        %v4904 = vsel %vm1838, %v4899, 0
        %4906 = vmatprep.subr.bf16.mxu0 0
        %4907 = vmatpush1.bf16.xpose.msra.mxu0 %v4904
        %4908 = vmatprep.subr.bf16.mxu0 0
        %4909 = vmatpush1.bf16.xpose.msra.mxu0 0
        %4910 = vmatprep.subr.bf16.mxu0 0
        %4911 = vmatpush1.bf16.xpose.msra.mxu0 0
        %4912 = vmatprep.subr.bf16.mxu0 0
        %4913 = vmatpush1.bf16.xpose.msra.mxu0 0
        %4914 = vmatprep.subr.bf16.mxu0 0
        %4915 = vmatpush1.bf16.xpose.msra.mxu0 0
        %4916 = vmatprep.subr.bf16.mxu0 0
        %4917 = vmatpush1.bf16.xpose.msra.mxu0 0
        %4918 = vmatprep.subr.bf16.mxu0 0
        %4919 = vmatpush1.bf16.xpose.msra.mxu0 0
        %4920 = vmatprep.subr.bf16.mxu0 0
        %4921 = vmatpush1.bf16.xpose.msra.mxu0 0
        %4922 = vmatprep.subr.bf16.mxu0 0
        %4923 = vmatpush1.bf16.xpose.msra.mxu0 0
        %4924 = vmatprep.subr.bf16.mxu0 0
        %4925 = vmatpush1.bf16.xpose.msra.mxu0 0
        %4926 = vmatprep.subr.bf16.mxu0 0
        %4927 = vmatpush1.bf16.xpose.msra.mxu0 0
        %4928 = vmatprep.subr.bf16.mxu0 0
        %4929 = vmatpush1.bf16.xpose.msra.mxu0 0
        %4930 = vmatprep.subr.bf16.mxu0 0
        %4931 = vmatpush1.bf16.xpose.msra.mxu0 0
        %4932 = vmatprep.subr.bf16.mxu0 0
        %4933 = vmatpush1.bf16.xpose.msra.mxu0 0
        %4934 = vmatprep.subr.bf16.mxu0 0
        %4935 = vmatpush1.bf16.xpose.msra.mxu0 0
        %4936 = vmatprep.subr.bf16.mxu0 0
        %4937 = vmatpush1.bf16.xpose.msra.mxu0 0
        %4938 = vmatprep.mubr.bf16.mxu0 0
        %4939 = vmatmul.mubr.bf16.gmra.mrb[0].mxu0 %v4901
        %v4940 = vpop.f32.mrb[0].mxu0
        %v4941 = vadd.f32 0.0, %v4940
        %v4942 = vpop.f32.mrb[0].mxu0
        %v4943 = vpop.f32.mrb[0].mxu0
        %v4944 = vadd.f32 0.0, %v4943
        %v4945 = vpop.f32.mrb[0].mxu0
        %4946 = vdwg.mxu0
        %4948 = vrot.lane.b32.xlu0 %v4166, 96
        %v4949 = vpop.permute.xlu0 %4948
        %4950 = vrot.lane.b32.xlu0 %v4166, 92
        %v4951 = vpop.permute.xlu0 %4950
        %v4953 = vsel %vm1838, %v4949, 0
        %v4956 = vsel %vm1838, %v4951, 0
        %4958 = vmatprep.subr.bf16.mxu0 0
        %4959 = vmatpush1.bf16.xpose.msra.mxu0 %v4956
        %4960 = vmatprep.subr.bf16.mxu0 0
        %4961 = vmatpush1.bf16.xpose.msra.mxu0 0
        %4962 = vmatprep.subr.bf16.mxu0 0
        %4963 = vmatpush1.bf16.xpose.msra.mxu0 0
        %4964 = vmatprep.subr.bf16.mxu0 0
        %4965 = vmatpush1.bf16.xpose.msra.mxu0 0
        %4966 = vmatprep.subr.bf16.mxu0 0
        %4967 = vmatpush1.bf16.xpose.msra.mxu0 0
        %4968 = vmatprep.subr.bf16.mxu0 0
        %4969 = vmatpush1.bf16.xpose.msra.mxu0 0
        %4970 = vmatprep.subr.bf16.mxu0 0
        %4971 = vmatpush1.bf16.xpose.msra.mxu0 0
        %4972 = vmatprep.subr.bf16.mxu0 0
        %4973 = vmatpush1.bf16.xpose.msra.mxu0 0
        %4974 = vmatprep.subr.bf16.mxu0 0
        %4975 = vmatpush1.bf16.xpose.msra.mxu0 0
        %4976 = vmatprep.subr.bf16.mxu0 0
        %4977 = vmatpush1.bf16.xpose.msra.mxu0 0
        %4978 = vmatprep.subr.bf16.mxu0 0
        %4979 = vmatpush1.bf16.xpose.msra.mxu0 0
        %4980 = vmatprep.subr.bf16.mxu0 0
        %4981 = vmatpush1.bf16.xpose.msra.mxu0 0
        %4982 = vmatprep.subr.bf16.mxu0 0
        %4983 = vmatpush1.bf16.xpose.msra.mxu0 0
        %4984 = vmatprep.subr.bf16.mxu0 0
        %4985 = vmatpush1.bf16.xpose.msra.mxu0 0
        %4986 = vmatprep.subr.bf16.mxu0 0
        %4987 = vmatpush1.bf16.xpose.msra.mxu0 0
        %4988 = vmatprep.subr.bf16.mxu0 0
        %4989 = vmatpush1.bf16.xpose.msra.mxu0 0
        %4990 = vmatprep.mubr.bf16.mxu0 0
        %4991 = vmatmul.mubr.bf16.gmra.mrb[0].mxu0 %v4953
        %v4992 = vpop.f32.mrb[0].mxu0
        %v4993 = vadd.f32 0.0, %v4992
        %v4994 = vpop.f32.mrb[0].mxu0
        %v4995 = vpop.f32.mrb[0].mxu0
        %v4996 = vadd.f32 0.0, %v4995
        %v4997 = vpop.f32.mrb[0].mxu0
        %4998 = vdwg.mxu0
        %v4999 = vsel %vm2666, %v4213, 0.0
        %v5000 = vsel %vm2666, %v4265, 0.0
        %v5001 = vadd.f32 %v4999, %v5000
        %v5002 = vsel %vm2666, %v4317, 0.0
        %v5003 = vadd.f32 %v5001, %v5002
        %v5004 = vsel %vm2666, %v4369, 0.0
        %v5005 = vadd.f32 %v5003, %v5004
        %v5006 = vsel %vm2666, %v4421, 0.0
        %v5007 = vadd.f32 %v5005, %v5006
        %v5008 = vsel %vm2666, %v4473, 0.0
        %v5009 = vadd.f32 %v5007, %v5008
        %v5010 = vsel %vm2666, %v4525, 0.0
        %v5011 = vadd.f32 %v5009, %v5010
        %v5012 = vsel %vm2666, %v4577, 0.0
        %v5013 = vadd.f32 %v5011, %v5012
        %v5014 = vsel %vm2666, %v4629, 0.0
        %v5015 = vadd.f32 %v5013, %v5014
        %v5016 = vsel %vm2666, %v4681, 0.0
        %v5017 = vadd.f32 %v5015, %v5016
        %v5018 = vsel %vm2666, %v4733, 0.0
        %v5019 = vadd.f32 %v5017, %v5018
        %v5020 = vsel %vm2666, %v4785, 0.0
        %v5021 = vadd.f32 %v5019, %v5020
        %v5022 = vsel %vm2666, %v4837, 0.0
        %v5023 = vadd.f32 %v5021, %v5022
        %v5024 = vsel %vm2666, %v4889, 0.0
        %v5025 = vadd.f32 %v5023, %v5024
        %v5026 = vsel %vm2666, %v4941, 0.0
        %v5027 = vadd.f32 %v5025, %v5026
        %v5028 = vsel %vm2666, %v4993, 0.0
        %v5029 = vadd.f32 %v5027, %v5028
        %v5030 = vsel %vm2666, %v4216, 0.0
        %v5031 = vsel %vm2666, %v4268, 0.0
        %v5032 = vadd.f32 %v5030, %v5031
        %v5033 = vsel %vm2666, %v4320, 0.0
        %v5034 = vadd.f32 %v5032, %v5033
        %v5035 = vsel %vm2666, %v4372, 0.0
        %v5036 = vadd.f32 %v5034, %v5035
        %v5037 = vsel %vm2666, %v4424, 0.0
        %v5038 = vadd.f32 %v5036, %v5037
        %v5039 = vsel %vm2666, %v4476, 0.0
        %v5040 = vadd.f32 %v5038, %v5039
        %v5041 = vsel %vm2666, %v4528, 0.0
        %v5042 = vadd.f32 %v5040, %v5041
        %v5043 = vsel %vm2666, %v4580, 0.0
        %v5044 = vadd.f32 %v5042, %v5043
        %v5045 = vsel %vm2666, %v4632, 0.0
        %v5046 = vadd.f32 %v5044, %v5045
        %v5047 = vsel %vm2666, %v4684, 0.0
        %v5048 = vadd.f32 %v5046, %v5047
        %v5049 = vsel %vm2666, %v4736, 0.0
        %v5050 = vadd.f32 %v5048, %v5049
        %v5051 = vsel %vm2666, %v4788, 0.0
        %v5052 = vadd.f32 %v5050, %v5051
        %v5053 = vsel %vm2666, %v4840, 0.0
        %v5054 = vadd.f32 %v5052, %v5053
        %v5055 = vsel %vm2666, %v4892, 0.0
        %v5056 = vadd.f32 %v5054, %v5055
        %v5057 = vsel %vm2666, %v4944, 0.0
        %v5058 = vadd.f32 %v5056, %v5057
        %v5059 = vsel %vm2666, %v4996, 0.0
        %v5060 = vadd.f32 %v5058, %v5059
        %v5061 = vsel %vm2666, %v5029, -inf
        %5062 = vmax.xlane.f32.xlu0 %v5061
        %v5063 = vpop.xlane.xlu0 %5062
        %v5064 = vsel %vm2666, %v5060, -inf
        %5065 = vmax.xlane.f32.xlu0 %v5064
        %v5066 = vpop.xlane.xlu0 %5065
        %v5067 = vsub.f32 %v5029, %v5063
        %v5068 = vsub.f32 %v5060, %v5066
        %v5069 = vmul.f32 %v5067, 1.442695
        %v5070 = vpow.pop %v5069
        %v5071 = vmul.f32 %v5068, 1.442695
        %v5072 = vpow.pop %v5071
        %v5073 = vsel %vm2666, %v5070, 0.0
        %5074 = vadd.xlane.f32.xlu0 %v5073
        %v5075 = vpop.xlane.xlu0 %5074
        %v5076 = vsel %vm2666, %v5072, 0.0
        %5077 = vadd.xlane.f32.xlu0 %v5076
        %v5078 = vpop.xlane.xlu0 %5077
        %v5079 = vrcp.pop %v5075
        %v5080 = vrcp.pop %v5078
        %v5081 = vstv %s3418
        %v5082 = vmul.f32 %v5081, %v5079
        %v5083 = vmul.f32 %v5081, %v5080
        %v5084 = vmul.f32 %v5082, %v5070
        %v5085 = vmul.f32 %v5083, %v5072
        %v5086 = vpack.c.bf16 %v5085, %v5084
        %v5088 = vsel %vm2666, %v5086, 0
        %5090 = vmatprep.subr.bf16.mxu0 0
        %5091 = vmatpush1.bf16.msra.mxu0 %v4151
        %5092 = vmatprep.subr.bf16.mxu0 0
        %5093 = vmatpush1.bf16.msra.mxu0 0
        %5094 = vmatprep.subr.bf16.mxu0 0
        %5095 = vmatpush1.bf16.msra.mxu0 0
        %5096 = vmatprep.subr.bf16.mxu0 0
        %5097 = vmatpush1.bf16.msra.mxu0 0
        %5098 = vmatprep.subr.bf16.mxu0 0
        %5099 = vmatpush1.bf16.msra.mxu0 0
        %5100 = vmatprep.subr.bf16.mxu0 0
        %5101 = vmatpush1.bf16.msra.mxu0 0
        %5102 = vmatprep.subr.bf16.mxu0 0
        %5103 = vmatpush1.bf16.msra.mxu0 0
        %5104 = vmatprep.subr.bf16.mxu0 0
        %5105 = vmatpush1.bf16.msra.mxu0 0
        %5106 = vmatprep.subr.bf16.mxu0 0
        %5107 = vmatpush1.bf16.msra.mxu0 0
        %5108 = vmatprep.subr.bf16.mxu0 0
        %5109 = vmatpush1.bf16.msra.mxu0 0
        %5110 = vmatprep.subr.bf16.mxu0 0
        %5111 = vmatpush1.bf16.msra.mxu0 0
        %5112 = vmatprep.subr.bf16.mxu0 0
        %5113 = vmatpush1.bf16.msra.mxu0 0
        %5114 = vmatprep.subr.bf16.mxu0 0
        %5115 = vmatpush1.bf16.msra.mxu0 0
        %5116 = vmatprep.subr.bf16.mxu0 0
        %5117 = vmatpush1.bf16.msra.mxu0 0
        %5118 = vmatprep.subr.bf16.mxu0 0
        %5119 = vmatpush1.bf16.msra.mxu0 0
        %5120 = vmatprep.subr.bf16.mxu0 0
        %5121 = vmatpush1.bf16.msra.mxu0 0
        %5122 = vmatprep.mubr.bf16.mxu0 0
        %5123 = vmatmul.mubr.bf16.gmra.mrb[0].mxu0 %v5088
        %v5124 = vpop.f32.mrb[0].mxu0
        %v5125 = vadd.f32 %v2793, %v5124
        %v5126 = vpop.f32.mrb[0].mxu0
        %v5127 = vpop.f32.mrb[0].mxu0
        %v5128 = vadd.f32 %v2796, %v5127
        %v5129 = vpop.f32.mrb[0].mxu0
        %5130 = vdwg.mxu0
        %5131 = vmatprep.subr.bf16.mxu0 0
        %5132 = vmatpush1.bf16.msra.mxu0 %v4152
        %5133 = vmatprep.subr.bf16.mxu0 0
        %5134 = vmatpush1.bf16.msra.mxu0 0
        %5135 = vmatprep.subr.bf16.mxu0 0
        %5136 = vmatpush1.bf16.msra.mxu0 0
        %5137 = vmatprep.subr.bf16.mxu0 0
        %5138 = vmatpush1.bf16.msra.mxu0 0
        %5139 = vmatprep.subr.bf16.mxu0 0
        %5140 = vmatpush1.bf16.msra.mxu0 0
        %5141 = vmatprep.subr.bf16.mxu0 0
        %5142 = vmatpush1.bf16.msra.mxu0 0
        %5143 = vmatprep.subr.bf16.mxu0 0
        %5144 = vmatpush1.bf16.msra.mxu0 0
        %5145 = vmatprep.subr.bf16.mxu0 0
        %5146 = vmatpush1.bf16.msra.mxu0 0
        %5147 = vmatprep.subr.bf16.mxu0 0
        %5148 = vmatpush1.bf16.msra.mxu0 0
        %5149 = vmatprep.subr.bf16.mxu0 0
        %5150 = vmatpush1.bf16.msra.mxu0 0
        %5151 = vmatprep.subr.bf16.mxu0 0
        %5152 = vmatpush1.bf16.msra.mxu0 0
        %5153 = vmatprep.subr.bf16.mxu0 0
        %5154 = vmatpush1.bf16.msra.mxu0 0
        %5155 = vmatprep.subr.bf16.mxu0 0
        %5156 = vmatpush1.bf16.msra.mxu0 0
        %5157 = vmatprep.subr.bf16.mxu0 0
        %5158 = vmatpush1.bf16.msra.mxu0 0
        %5159 = vmatprep.subr.bf16.mxu0 0
        %5160 = vmatpush1.bf16.msra.mxu0 0
        %5161 = vmatprep.subr.bf16.mxu0 0
        %5162 = vmatpush1.bf16.msra.mxu0 0
        %5163 = vmatprep.mubr.bf16.mxu0 0
        %5164 = vmatmul.mubr.bf16.gmra.mrb[0].mxu0 %v5088
        %v5165 = vpop.f32.mrb[0].mxu0
        %v5166 = vadd.f32 %v2834, %v5165
        %v5167 = vpop.f32.mrb[0].mxu0
        %v5168 = vpop.f32.mrb[0].mxu0
        %v5169 = vadd.f32 %v2837, %v5168
        %v5170 = vpop.f32.mrb[0].mxu0
        %5171 = vdwg.mxu0
        %5172 = vmatprep.subr.bf16.mxu0 0
        %5173 = vmatpush1.bf16.msra.mxu0 %v4153
        %5174 = vmatprep.subr.bf16.mxu0 0
        %5175 = vmatpush1.bf16.msra.mxu0 0
        %5176 = vmatprep.subr.bf16.mxu0 0
        %5177 = vmatpush1.bf16.msra.mxu0 0
        %5178 = vmatprep.subr.bf16.mxu0 0
        %5179 = vmatpush1.bf16.msra.mxu0 0
        %5180 = vmatprep.subr.bf16.mxu0 0
        %5181 = vmatpush1.bf16.msra.mxu0 0
        %5182 = vmatprep.subr.bf16.mxu0 0
        %5183 = vmatpush1.bf16.msra.mxu0 0
        %5184 = vmatprep.subr.bf16.mxu0 0
        %5185 = vmatpush1.bf16.msra.mxu0 0
        %5186 = vmatprep.subr.bf16.mxu0 0
        %5187 = vmatpush1.bf16.msra.mxu0 0
        %5188 = vmatprep.subr.bf16.mxu0 0
        %5189 = vmatpush1.bf16.msra.mxu0 0
        %5190 = vmatprep.subr.bf16.mxu0 0
        %5191 = vmatpush1.bf16.msra.mxu0 0
        %5192 = vmatprep.subr.bf16.mxu0 0
        %5193 = vmatpush1.bf16.msra.mxu0 0
        %5194 = vmatprep.subr.bf16.mxu0 0
        %5195 = vmatpush1.bf16.msra.mxu0 0
        %5196 = vmatprep.subr.bf16.mxu0 0
        %5197 = vmatpush1.bf16.msra.mxu0 0
        %5198 = vmatprep.subr.bf16.mxu0 0
        %5199 = vmatpush1.bf16.msra.mxu0 0
        %5200 = vmatprep.subr.bf16.mxu0 0
        %5201 = vmatpush1.bf16.msra.mxu0 0
        %5202 = vmatprep.subr.bf16.mxu0 0
        %5203 = vmatpush1.bf16.msra.mxu0 0
        %5204 = vmatprep.mubr.bf16.mxu0 0
        %5205 = vmatmul.mubr.bf16.gmra.mrb[0].mxu0 %v5088
        %v5206 = vpop.f32.mrb[0].mxu0
        %v5207 = vadd.f32 %v2875, %v5206
        %v5208 = vpop.f32.mrb[0].mxu0
        %v5209 = vpop.f32.mrb[0].mxu0
        %v5210 = vadd.f32 %v2878, %v5209
        %v5211 = vpop.f32.mrb[0].mxu0
        %5212 = vdwg.mxu0
        %5213 = vmatprep.subr.bf16.mxu0 0
        %5214 = vmatpush1.bf16.msra.mxu0 %v4154
        %5215 = vmatprep.subr.bf16.mxu0 0
        %5216 = vmatpush1.bf16.msra.mxu0 0
        %5217 = vmatprep.subr.bf16.mxu0 0
        %5218 = vmatpush1.bf16.msra.mxu0 0
        %5219 = vmatprep.subr.bf16.mxu0 0
        %5220 = vmatpush1.bf16.msra.mxu0 0
        %5221 = vmatprep.subr.bf16.mxu0 0
        %5222 = vmatpush1.bf16.msra.mxu0 0
        %5223 = vmatprep.subr.bf16.mxu0 0
        %5224 = vmatpush1.bf16.msra.mxu0 0
        %5225 = vmatprep.subr.bf16.mxu0 0
        %5226 = vmatpush1.bf16.msra.mxu0 0
        %5227 = vmatprep.subr.bf16.mxu0 0
        %5228 = vmatpush1.bf16.msra.mxu0 0
        %5229 = vmatprep.subr.bf16.mxu0 0
        %5230 = vmatpush1.bf16.msra.mxu0 0
        %5231 = vmatprep.subr.bf16.mxu0 0
        %5232 = vmatpush1.bf16.msra.mxu0 0
        %5233 = vmatprep.subr.bf16.mxu0 0
        %5234 = vmatpush1.bf16.msra.mxu0 0
        %5235 = vmatprep.subr.bf16.mxu0 0
        %5236 = vmatpush1.bf16.msra.mxu0 0
        %5237 = vmatprep.subr.bf16.mxu0 0
        %5238 = vmatpush1.bf16.msra.mxu0 0
        %5239 = vmatprep.subr.bf16.mxu0 0
        %5240 = vmatpush1.bf16.msra.mxu0 0
        %5241 = vmatprep.subr.bf16.mxu0 0
        %5242 = vmatpush1.bf16.msra.mxu0 0
        %5243 = vmatprep.subr.bf16.mxu0 0
        %5244 = vmatpush1.bf16.msra.mxu0 0
        %5245 = vmatprep.mubr.bf16.mxu0 0
        %5246 = vmatmul.mubr.bf16.gmra.mrb[0].mxu0 %v5088
        %v5247 = vpop.f32.mrb[0].mxu0
        %v5248 = vadd.f32 %v2916, %v5247
        %v5249 = vpop.f32.mrb[0].mxu0
        %v5250 = vpop.f32.mrb[0].mxu0
        %v5251 = vadd.f32 %v2919, %v5250
        %v5252 = vpop.f32.mrb[0].mxu0
        %5253 = vdwg.mxu0
        %5254 = vmatprep.subr.bf16.mxu0 0
        %5255 = vmatpush1.bf16.msra.mxu0 %v4155
        %5256 = vmatprep.subr.bf16.mxu0 0
        %5257 = vmatpush1.bf16.msra.mxu0 0
        %5258 = vmatprep.subr.bf16.mxu0 0
        %5259 = vmatpush1.bf16.msra.mxu0 0
        %5260 = vmatprep.subr.bf16.mxu0 0
        %5261 = vmatpush1.bf16.msra.mxu0 0
        %5262 = vmatprep.subr.bf16.mxu0 0
        %5263 = vmatpush1.bf16.msra.mxu0 0
        %5264 = vmatprep.subr.bf16.mxu0 0
        %5265 = vmatpush1.bf16.msra.mxu0 0
        %5266 = vmatprep.subr.bf16.mxu0 0
        %5267 = vmatpush1.bf16.msra.mxu0 0
        %5268 = vmatprep.subr.bf16.mxu0 0
        %5269 = vmatpush1.bf16.msra.mxu0 0
        %5270 = vmatprep.subr.bf16.mxu0 0
        %5271 = vmatpush1.bf16.msra.mxu0 0
        %5272 = vmatprep.subr.bf16.mxu0 0
        %5273 = vmatpush1.bf16.msra.mxu0 0
        %5274 = vmatprep.subr.bf16.mxu0 0
        %5275 = vmatpush1.bf16.msra.mxu0 0
        %5276 = vmatprep.subr.bf16.mxu0 0
        %5277 = vmatpush1.bf16.msra.mxu0 0
        %5278 = vmatprep.subr.bf16.mxu0 0
        %5279 = vmatpush1.bf16.msra.mxu0 0
        %5280 = vmatprep.subr.bf16.mxu0 0
        %5281 = vmatpush1.bf16.msra.mxu0 0
        %5282 = vmatprep.subr.bf16.mxu0 0
        %5283 = vmatpush1.bf16.msra.mxu0 0
        %5284 = vmatprep.subr.bf16.mxu0 0
        %5285 = vmatpush1.bf16.msra.mxu0 0
        %5286 = vmatprep.mubr.bf16.mxu0 0
        %5287 = vmatmul.mubr.bf16.gmra.mrb[0].mxu0 %v5088
        %v5288 = vpop.f32.mrb[0].mxu0
        %v5289 = vadd.f32 %v2957, %v5288
        %v5290 = vpop.f32.mrb[0].mxu0
        %v5291 = vpop.f32.mrb[0].mxu0
        %v5292 = vadd.f32 %v2960, %v5291
        %v5293 = vpop.f32.mrb[0].mxu0
        %5294 = vdwg.mxu0
        %5295 = vmatprep.subr.bf16.mxu0 0
        %5296 = vmatpush1.bf16.msra.mxu0 %v4156
        %5297 = vmatprep.subr.bf16.mxu0 0
        %5298 = vmatpush1.bf16.msra.mxu0 0
        %5299 = vmatprep.subr.bf16.mxu0 0
        %5300 = vmatpush1.bf16.msra.mxu0 0
        %5301 = vmatprep.subr.bf16.mxu0 0
        %5302 = vmatpush1.bf16.msra.mxu0 0
        %5303 = vmatprep.subr.bf16.mxu0 0
        %5304 = vmatpush1.bf16.msra.mxu0 0
        %5305 = vmatprep.subr.bf16.mxu0 0
        %5306 = vmatpush1.bf16.msra.mxu0 0
        %5307 = vmatprep.subr.bf16.mxu0 0
        %5308 = vmatpush1.bf16.msra.mxu0 0
        %5309 = vmatprep.subr.bf16.mxu0 0
        %5310 = vmatpush1.bf16.msra.mxu0 0
        %5311 = vmatprep.subr.bf16.mxu0 0
        %5312 = vmatpush1.bf16.msra.mxu0 0
        %5313 = vmatprep.subr.bf16.mxu0 0
        %5314 = vmatpush1.bf16.msra.mxu0 0
        %5315 = vmatprep.subr.bf16.mxu0 0
        %5316 = vmatpush1.bf16.msra.mxu0 0
        %5317 = vmatprep.subr.bf16.mxu0 0
        %5318 = vmatpush1.bf16.msra.mxu0 0
        %5319 = vmatprep.subr.bf16.mxu0 0
        %5320 = vmatpush1.bf16.msra.mxu0 0
        %5321 = vmatprep.subr.bf16.mxu0 0
        %5322 = vmatpush1.bf16.msra.mxu0 0
        %5323 = vmatprep.subr.bf16.mxu0 0
        %5324 = vmatpush1.bf16.msra.mxu0 0
        %5325 = vmatprep.subr.bf16.mxu0 0
        %5326 = vmatpush1.bf16.msra.mxu0 0
        %5327 = vmatprep.mubr.bf16.mxu0 0
        %5328 = vmatmul.mubr.bf16.gmra.mrb[0].mxu0 %v5088
        %v5329 = vpop.f32.mrb[0].mxu0
        %v5330 = vadd.f32 %v2998, %v5329
        %v5331 = vpop.f32.mrb[0].mxu0
        %v5332 = vpop.f32.mrb[0].mxu0
        %v5333 = vadd.f32 %v3001, %v5332
        %v5334 = vpop.f32.mrb[0].mxu0
        %5335 = vdwg.mxu0
        %5336 = vmatprep.subr.bf16.mxu0 0
        %5337 = vmatpush1.bf16.msra.mxu0 %v4157
        %5338 = vmatprep.subr.bf16.mxu0 0
        %5339 = vmatpush1.bf16.msra.mxu0 0
        %5340 = vmatprep.subr.bf16.mxu0 0
        %5341 = vmatpush1.bf16.msra.mxu0 0
        %5342 = vmatprep.subr.bf16.mxu0 0
        %5343 = vmatpush1.bf16.msra.mxu0 0
        %5344 = vmatprep.subr.bf16.mxu0 0
        %5345 = vmatpush1.bf16.msra.mxu0 0
        %5346 = vmatprep.subr.bf16.mxu0 0
        %5347 = vmatpush1.bf16.msra.mxu0 0
        %5348 = vmatprep.subr.bf16.mxu0 0
        %5349 = vmatpush1.bf16.msra.mxu0 0
        %5350 = vmatprep.subr.bf16.mxu0 0
        %5351 = vmatpush1.bf16.msra.mxu0 0
        %5352 = vmatprep.subr.bf16.mxu0 0
        %5353 = vmatpush1.bf16.msra.mxu0 0
        %5354 = vmatprep.subr.bf16.mxu0 0
        %5355 = vmatpush1.bf16.msra.mxu0 0
        %5356 = vmatprep.subr.bf16.mxu0 0
        %5357 = vmatpush1.bf16.msra.mxu0 0
        %5358 = vmatprep.subr.bf16.mxu0 0
        %5359 = vmatpush1.bf16.msra.mxu0 0
        %5360 = vmatprep.subr.bf16.mxu0 0
        %5361 = vmatpush1.bf16.msra.mxu0 0
        %5362 = vmatprep.subr.bf16.mxu0 0
        %5363 = vmatpush1.bf16.msra.mxu0 0
        %5364 = vmatprep.subr.bf16.mxu0 0
        %5365 = vmatpush1.bf16.msra.mxu0 0
        %5366 = vmatprep.subr.bf16.mxu0 0
        %5367 = vmatpush1.bf16.msra.mxu0 0
        %5368 = vmatprep.mubr.bf16.mxu0 0
        %5369 = vmatmul.mubr.bf16.gmra.mrb[0].mxu0 %v5088
        %v5370 = vpop.f32.mrb[0].mxu0
        %v5371 = vadd.f32 %v3039, %v5370
        %v5372 = vpop.f32.mrb[0].mxu0
        %v5373 = vpop.f32.mrb[0].mxu0
        %v5374 = vadd.f32 %v3042, %v5373
        %v5375 = vpop.f32.mrb[0].mxu0
        %5376 = vdwg.mxu0
        %5377 = vmatprep.subr.bf16.mxu0 0
        %5378 = vmatpush1.bf16.msra.mxu0 %v4158
        %5379 = vmatprep.subr.bf16.mxu0 0
        %5380 = vmatpush1.bf16.msra.mxu0 0
        %5381 = vmatprep.subr.bf16.mxu0 0
        %5382 = vmatpush1.bf16.msra.mxu0 0
        %5383 = vmatprep.subr.bf16.mxu0 0
        %5384 = vmatpush1.bf16.msra.mxu0 0
        %5385 = vmatprep.subr.bf16.mxu0 0
        %5386 = vmatpush1.bf16.msra.mxu0 0
        %5387 = vmatprep.subr.bf16.mxu0 0
        %5388 = vmatpush1.bf16.msra.mxu0 0
        %5389 = vmatprep.subr.bf16.mxu0 0
        %5390 = vmatpush1.bf16.msra.mxu0 0
        %5391 = vmatprep.subr.bf16.mxu0 0
        %5392 = vmatpush1.bf16.msra.mxu0 0
        %5393 = vmatprep.subr.bf16.mxu0 0
        %5394 = vmatpush1.bf16.msra.mxu0 0
        %5395 = vmatprep.subr.bf16.mxu0 0
        %5396 = vmatpush1.bf16.msra.mxu0 0
        %5397 = vmatprep.subr.bf16.mxu0 0
        %5398 = vmatpush1.bf16.msra.mxu0 0
        %5399 = vmatprep.subr.bf16.mxu0 0
        %5400 = vmatpush1.bf16.msra.mxu0 0
        %5401 = vmatprep.subr.bf16.mxu0 0
        %5402 = vmatpush1.bf16.msra.mxu0 0
        %5403 = vmatprep.subr.bf16.mxu0 0
        %5404 = vmatpush1.bf16.msra.mxu0 0
        %5405 = vmatprep.subr.bf16.mxu0 0
        %5406 = vmatpush1.bf16.msra.mxu0 0
        %5407 = vmatprep.subr.bf16.mxu0 0
        %5408 = vmatpush1.bf16.msra.mxu0 0
        %5409 = vmatprep.mubr.bf16.mxu0 0
        %5410 = vmatmul.mubr.bf16.gmra.mrb[0].mxu0 %v5088
        %v5411 = vpop.f32.mrb[0].mxu0
        %v5412 = vadd.f32 %v3080, %v5411
        %v5413 = vpop.f32.mrb[0].mxu0
        %v5414 = vpop.f32.mrb[0].mxu0
        %v5415 = vadd.f32 %v3083, %v5414
        %v5416 = vpop.f32.mrb[0].mxu0
        %5417 = vdwg.mxu0
        %5418 = vmatprep.subr.bf16.mxu0 0
        %5419 = vmatpush1.bf16.msra.mxu0 %v4159
        %5420 = vmatprep.subr.bf16.mxu0 0
        %5421 = vmatpush1.bf16.msra.mxu0 0
        %5422 = vmatprep.subr.bf16.mxu0 0
        %5423 = vmatpush1.bf16.msra.mxu0 0
        %5424 = vmatprep.subr.bf16.mxu0 0
        %5425 = vmatpush1.bf16.msra.mxu0 0
        %5426 = vmatprep.subr.bf16.mxu0 0
        %5427 = vmatpush1.bf16.msra.mxu0 0
        %5428 = vmatprep.subr.bf16.mxu0 0
        %5429 = vmatpush1.bf16.msra.mxu0 0
        %5430 = vmatprep.subr.bf16.mxu0 0
        %5431 = vmatpush1.bf16.msra.mxu0 0
        %5432 = vmatprep.subr.bf16.mxu0 0
        %5433 = vmatpush1.bf16.msra.mxu0 0
        %5434 = vmatprep.subr.bf16.mxu0 0
        %5435 = vmatpush1.bf16.msra.mxu0 0
        %5436 = vmatprep.subr.bf16.mxu0 0
        %5437 = vmatpush1.bf16.msra.mxu0 0
        %5438 = vmatprep.subr.bf16.mxu0 0
        %5439 = vmatpush1.bf16.msra.mxu0 0
        %5440 = vmatprep.subr.bf16.mxu0 0
        %5441 = vmatpush1.bf16.msra.mxu0 0
        %5442 = vmatprep.subr.bf16.mxu0 0
        %5443 = vmatpush1.bf16.msra.mxu0 0
        %5444 = vmatprep.subr.bf16.mxu0 0
        %5445 = vmatpush1.bf16.msra.mxu0 0
        %5446 = vmatprep.subr.bf16.mxu0 0
        %5447 = vmatpush1.bf16.msra.mxu0 0
        %5448 = vmatprep.subr.bf16.mxu0 0
        %5449 = vmatpush1.bf16.msra.mxu0 0
        %5450 = vmatprep.mubr.bf16.mxu0 0
        %5451 = vmatmul.mubr.bf16.gmra.mrb[0].mxu0 %v5088
        %v5452 = vpop.f32.mrb[0].mxu0
        %v5453 = vadd.f32 %v3121, %v5452
        %v5454 = vpop.f32.mrb[0].mxu0
        %v5455 = vpop.f32.mrb[0].mxu0
        %v5456 = vadd.f32 %v3124, %v5455
        %v5457 = vpop.f32.mrb[0].mxu0
        %5458 = vdwg.mxu0
        %5459 = vmatprep.subr.bf16.mxu0 0
        %5460 = vmatpush1.bf16.msra.mxu0 %v4160
        %5461 = vmatprep.subr.bf16.mxu0 0
        %5462 = vmatpush1.bf16.msra.mxu0 0
        %5463 = vmatprep.subr.bf16.mxu0 0
        %5464 = vmatpush1.bf16.msra.mxu0 0
        %5465 = vmatprep.subr.bf16.mxu0 0
        %5466 = vmatpush1.bf16.msra.mxu0 0
        %5467 = vmatprep.subr.bf16.mxu0 0
        %5468 = vmatpush1.bf16.msra.mxu0 0
        %5469 = vmatprep.subr.bf16.mxu0 0
        %5470 = vmatpush1.bf16.msra.mxu0 0
        %5471 = vmatprep.subr.bf16.mxu0 0
        %5472 = vmatpush1.bf16.msra.mxu0 0
        %5473 = vmatprep.subr.bf16.mxu0 0
        %5474 = vmatpush1.bf16.msra.mxu0 0
        %5475 = vmatprep.subr.bf16.mxu0 0
        %5476 = vmatpush1.bf16.msra.mxu0 0
        %5477 = vmatprep.subr.bf16.mxu0 0
        %5478 = vmatpush1.bf16.msra.mxu0 0
        %5479 = vmatprep.subr.bf16.mxu0 0
        %5480 = vmatpush1.bf16.msra.mxu0 0
        %5481 = vmatprep.subr.bf16.mxu0 0
        %5482 = vmatpush1.bf16.msra.mxu0 0
        %5483 = vmatprep.subr.bf16.mxu0 0
        %5484 = vmatpush1.bf16.msra.mxu0 0
        %5485 = vmatprep.subr.bf16.mxu0 0
        %5486 = vmatpush1.bf16.msra.mxu0 0
        %5487 = vmatprep.subr.bf16.mxu0 0
        %5488 = vmatpush1.bf16.msra.mxu0 0
        %5489 = vmatprep.subr.bf16.mxu0 0
        %5490 = vmatpush1.bf16.msra.mxu0 0
        %5491 = vmatprep.mubr.bf16.mxu0 0
        %5492 = vmatmul.mubr.bf16.gmra.mrb[0].mxu0 %v5088
        %v5493 = vpop.f32.mrb[0].mxu0
        %v5494 = vadd.f32 %v3162, %v5493
        %v5495 = vpop.f32.mrb[0].mxu0
        %v5496 = vpop.f32.mrb[0].mxu0
        %v5497 = vadd.f32 %v3165, %v5496
        %v5498 = vpop.f32.mrb[0].mxu0
        %5499 = vdwg.mxu0
        %5500 = vmatprep.subr.bf16.mxu0 0
        %5501 = vmatpush1.bf16.msra.mxu0 %v4161
        %5502 = vmatprep.subr.bf16.mxu0 0
        %5503 = vmatpush1.bf16.msra.mxu0 0
        %5504 = vmatprep.subr.bf16.mxu0 0
        %5505 = vmatpush1.bf16.msra.mxu0 0
        %5506 = vmatprep.subr.bf16.mxu0 0
        %5507 = vmatpush1.bf16.msra.mxu0 0
        %5508 = vmatprep.subr.bf16.mxu0 0
        %5509 = vmatpush1.bf16.msra.mxu0 0
        %5510 = vmatprep.subr.bf16.mxu0 0
        %5511 = vmatpush1.bf16.msra.mxu0 0
        %5512 = vmatprep.subr.bf16.mxu0 0
        %5513 = vmatpush1.bf16.msra.mxu0 0
        %5514 = vmatprep.subr.bf16.mxu0 0
        %5515 = vmatpush1.bf16.msra.mxu0 0
        %5516 = vmatprep.subr.bf16.mxu0 0
        %5517 = vmatpush1.bf16.msra.mxu0 0
        %5518 = vmatprep.subr.bf16.mxu0 0
        %5519 = vmatpush1.bf16.msra.mxu0 0
        %5520 = vmatprep.subr.bf16.mxu0 0
        %5521 = vmatpush1.bf16.msra.mxu0 0
        %5522 = vmatprep.subr.bf16.mxu0 0
        %5523 = vmatpush1.bf16.msra.mxu0 0
        %5524 = vmatprep.subr.bf16.mxu0 0
        %5525 = vmatpush1.bf16.msra.mxu0 0
        %5526 = vmatprep.subr.bf16.mxu0 0
        %5527 = vmatpush1.bf16.msra.mxu0 0
        %5528 = vmatprep.subr.bf16.mxu0 0
        %5529 = vmatpush1.bf16.msra.mxu0 0
        %5530 = vmatprep.subr.bf16.mxu0 0
        %5531 = vmatpush1.bf16.msra.mxu0 0
        %5532 = vmatprep.mubr.bf16.mxu0 0
        %5533 = vmatmul.mubr.bf16.gmra.mrb[0].mxu0 %v5088
        %v5534 = vpop.f32.mrb[0].mxu0
        %v5535 = vadd.f32 %v3203, %v5534
        %v5536 = vpop.f32.mrb[0].mxu0
        %v5537 = vpop.f32.mrb[0].mxu0
        %v5538 = vadd.f32 %v3206, %v5537
        %v5539 = vpop.f32.mrb[0].mxu0
        %5540 = vdwg.mxu0
        %5541 = vmatprep.subr.bf16.mxu0 0
        %5542 = vmatpush1.bf16.msra.mxu0 %v4162
        %5543 = vmatprep.subr.bf16.mxu0 0
        %5544 = vmatpush1.bf16.msra.mxu0 0
        %5545 = vmatprep.subr.bf16.mxu0 0
        %5546 = vmatpush1.bf16.msra.mxu0 0
        %5547 = vmatprep.subr.bf16.mxu0 0
        %5548 = vmatpush1.bf16.msra.mxu0 0
        %5549 = vmatprep.subr.bf16.mxu0 0
        %5550 = vmatpush1.bf16.msra.mxu0 0
        %5551 = vmatprep.subr.bf16.mxu0 0
        %5552 = vmatpush1.bf16.msra.mxu0 0
        %5553 = vmatprep.subr.bf16.mxu0 0
        %5554 = vmatpush1.bf16.msra.mxu0 0
        %5555 = vmatprep.subr.bf16.mxu0 0
        %5556 = vmatpush1.bf16.msra.mxu0 0
        %5557 = vmatprep.subr.bf16.mxu0 0
        %5558 = vmatpush1.bf16.msra.mxu0 0
        %5559 = vmatprep.subr.bf16.mxu0 0
        %5560 = vmatpush1.bf16.msra.mxu0 0
        %5561 = vmatprep.subr.bf16.mxu0 0
        %5562 = vmatpush1.bf16.msra.mxu0 0
        %5563 = vmatprep.subr.bf16.mxu0 0
        %5564 = vmatpush1.bf16.msra.mxu0 0
        %5565 = vmatprep.subr.bf16.mxu0 0
        %5566 = vmatpush1.bf16.msra.mxu0 0
        %5567 = vmatprep.subr.bf16.mxu0 0
        %5568 = vmatpush1.bf16.msra.mxu0 0
        %5569 = vmatprep.subr.bf16.mxu0 0
        %5570 = vmatpush1.bf16.msra.mxu0 0
        %5571 = vmatprep.subr.bf16.mxu0 0
        %5572 = vmatpush1.bf16.msra.mxu0 0
        %5573 = vmatprep.mubr.bf16.mxu0 0
        %5574 = vmatmul.mubr.bf16.gmra.mrb[0].mxu0 %v5088
        %v5575 = vpop.f32.mrb[0].mxu0
        %v5576 = vadd.f32 %v3244, %v5575
        %v5577 = vpop.f32.mrb[0].mxu0
        %v5578 = vpop.f32.mrb[0].mxu0
        %v5579 = vadd.f32 %v3247, %v5578
        %v5580 = vpop.f32.mrb[0].mxu0
        %5581 = vdwg.mxu0
        %5582 = vmatprep.subr.bf16.mxu0 0
        %5583 = vmatpush1.bf16.msra.mxu0 %v4163
        %5584 = vmatprep.subr.bf16.mxu0 0
        %5585 = vmatpush1.bf16.msra.mxu0 0
        %5586 = vmatprep.subr.bf16.mxu0 0
        %5587 = vmatpush1.bf16.msra.mxu0 0
        %5588 = vmatprep.subr.bf16.mxu0 0
        %5589 = vmatpush1.bf16.msra.mxu0 0
        %5590 = vmatprep.subr.bf16.mxu0 0
        %5591 = vmatpush1.bf16.msra.mxu0 0
        %5592 = vmatprep.subr.bf16.mxu0 0
        %5593 = vmatpush1.bf16.msra.mxu0 0
        %5594 = vmatprep.subr.bf16.mxu0 0
        %5595 = vmatpush1.bf16.msra.mxu0 0
        %5596 = vmatprep.subr.bf16.mxu0 0
        %5597 = vmatpush1.bf16.msra.mxu0 0
        %5598 = vmatprep.subr.bf16.mxu0 0
        %5599 = vmatpush1.bf16.msra.mxu0 0
        %5600 = vmatprep.subr.bf16.mxu0 0
        %5601 = vmatpush1.bf16.msra.mxu0 0
        %5602 = vmatprep.subr.bf16.mxu0 0
        %5603 = vmatpush1.bf16.msra.mxu0 0
        %5604 = vmatprep.subr.bf16.mxu0 0
        %5605 = vmatpush1.bf16.msra.mxu0 0
        %5606 = vmatprep.subr.bf16.mxu0 0
        %5607 = vmatpush1.bf16.msra.mxu0 0
        %5608 = vmatprep.subr.bf16.mxu0 0
        %5609 = vmatpush1.bf16.msra.mxu0 0
        %5610 = vmatprep.subr.bf16.mxu0 0
        %5611 = vmatpush1.bf16.msra.mxu0 0
        %5612 = vmatprep.subr.bf16.mxu0 0
        %5613 = vmatpush1.bf16.msra.mxu0 0
        %5614 = vmatprep.mubr.bf16.mxu0 0
        %5615 = vmatmul.mubr.bf16.gmra.mrb[0].mxu0 %v5088
        %v5616 = vpop.f32.mrb[0].mxu0
        %v5617 = vadd.f32 %v3285, %v5616
        %v5618 = vpop.f32.mrb[0].mxu0
        %v5619 = vpop.f32.mrb[0].mxu0
        %v5620 = vadd.f32 %v3288, %v5619
        %v5621 = vpop.f32.mrb[0].mxu0
        %5622 = vdwg.mxu0
        %5623 = vmatprep.subr.bf16.mxu0 0
        %5624 = vmatpush1.bf16.msra.mxu0 %v4164
        %5625 = vmatprep.subr.bf16.mxu0 0
        %5626 = vmatpush1.bf16.msra.mxu0 0
        %5627 = vmatprep.subr.bf16.mxu0 0
        %5628 = vmatpush1.bf16.msra.mxu0 0
        %5629 = vmatprep.subr.bf16.mxu0 0
        %5630 = vmatpush1.bf16.msra.mxu0 0
        %5631 = vmatprep.subr.bf16.mxu0 0
        %5632 = vmatpush1.bf16.msra.mxu0 0
        %5633 = vmatprep.subr.bf16.mxu0 0
        %5634 = vmatpush1.bf16.msra.mxu0 0
        %5635 = vmatprep.subr.bf16.mxu0 0
        %5636 = vmatpush1.bf16.msra.mxu0 0
        %5637 = vmatprep.subr.bf16.mxu0 0
        %5638 = vmatpush1.bf16.msra.mxu0 0
        %5639 = vmatprep.subr.bf16.mxu0 0
        %5640 = vmatpush1.bf16.msra.mxu0 0
        %5641 = vmatprep.subr.bf16.mxu0 0
        %5642 = vmatpush1.bf16.msra.mxu0 0
        %5643 = vmatprep.subr.bf16.mxu0 0
        %5644 = vmatpush1.bf16.msra.mxu0 0
        %5645 = vmatprep.subr.bf16.mxu0 0
        %5646 = vmatpush1.bf16.msra.mxu0 0
        %5647 = vmatprep.subr.bf16.mxu0 0
        %5648 = vmatpush1.bf16.msra.mxu0 0
        %5649 = vmatprep.subr.bf16.mxu0 0
        %5650 = vmatpush1.bf16.msra.mxu0 0
        %5651 = vmatprep.subr.bf16.mxu0 0
        %5652 = vmatpush1.bf16.msra.mxu0 0
        %5653 = vmatprep.subr.bf16.mxu0 0
        %5654 = vmatpush1.bf16.msra.mxu0 0
        %5655 = vmatprep.mubr.bf16.mxu0 0
        %5656 = vmatmul.mubr.bf16.gmra.mrb[0].mxu0 %v5088
        %v5657 = vpop.f32.mrb[0].mxu0
        %v5658 = vadd.f32 %v3326, %v5657
        %v5659 = vpop.f32.mrb[0].mxu0
        %v5660 = vpop.f32.mrb[0].mxu0
        %v5661 = vadd.f32 %v3329, %v5660
        %v5662 = vpop.f32.mrb[0].mxu0
        %5663 = vdwg.mxu0
        %5664 = vmatprep.subr.bf16.mxu0 0
        %5665 = vmatpush1.bf16.msra.mxu0 %v4165
        %5666 = vmatprep.subr.bf16.mxu0 0
        %5667 = vmatpush1.bf16.msra.mxu0 0
        %5668 = vmatprep.subr.bf16.mxu0 0
        %5669 = vmatpush1.bf16.msra.mxu0 0
        %5670 = vmatprep.subr.bf16.mxu0 0
        %5671 = vmatpush1.bf16.msra.mxu0 0
        %5672 = vmatprep.subr.bf16.mxu0 0
        %5673 = vmatpush1.bf16.msra.mxu0 0
        %5674 = vmatprep.subr.bf16.mxu0 0
        %5675 = vmatpush1.bf16.msra.mxu0 0
        %5676 = vmatprep.subr.bf16.mxu0 0
        %5677 = vmatpush1.bf16.msra.mxu0 0
        %5678 = vmatprep.subr.bf16.mxu0 0
        %5679 = vmatpush1.bf16.msra.mxu0 0
        %5680 = vmatprep.subr.bf16.mxu0 0
        %5681 = vmatpush1.bf16.msra.mxu0 0
        %5682 = vmatprep.subr.bf16.mxu0 0
        %5683 = vmatpush1.bf16.msra.mxu0 0
        %5684 = vmatprep.subr.bf16.mxu0 0
        %5685 = vmatpush1.bf16.msra.mxu0 0
        %5686 = vmatprep.subr.bf16.mxu0 0
        %5687 = vmatpush1.bf16.msra.mxu0 0
        %5688 = vmatprep.subr.bf16.mxu0 0
        %5689 = vmatpush1.bf16.msra.mxu0 0
        %5690 = vmatprep.subr.bf16.mxu0 0
        %5691 = vmatpush1.bf16.msra.mxu0 0
        %5692 = vmatprep.subr.bf16.mxu0 0
        %5693 = vmatpush1.bf16.msra.mxu0 0
        %5694 = vmatprep.subr.bf16.mxu0 0
        %5695 = vmatpush1.bf16.msra.mxu0 0
        %5696 = vmatprep.mubr.bf16.mxu0 0
        %5697 = vmatmul.mubr.bf16.gmra.mrb[0].mxu0 %v5088
        %v5698 = vpop.f32.mrb[0].mxu0
        %v5699 = vadd.f32 %v3367, %v5698
        %v5700 = vpop.f32.mrb[0].mxu0
        %v5701 = vpop.f32.mrb[0].mxu0
        %v5702 = vadd.f32 %v3370, %v5701
        %v5703 = vpop.f32.mrb[0].mxu0
        %5704 = vdwg.mxu0
        %5705 = vmatprep.subr.bf16.mxu0 0
        %5706 = vmatpush1.bf16.msra.mxu0 %v4166
        %5707 = vmatprep.subr.bf16.mxu0 0
        %5708 = vmatpush1.bf16.msra.mxu0 0
        %5709 = vmatprep.subr.bf16.mxu0 0
        %5710 = vmatpush1.bf16.msra.mxu0 0
        %5711 = vmatprep.subr.bf16.mxu0 0
        %5712 = vmatpush1.bf16.msra.mxu0 0
        %5713 = vmatprep.subr.bf16.mxu0 0
        %5714 = vmatpush1.bf16.msra.mxu0 0
        %5715 = vmatprep.subr.bf16.mxu0 0
        %5716 = vmatpush1.bf16.msra.mxu0 0
        %5717 = vmatprep.subr.bf16.mxu0 0
        %5718 = vmatpush1.bf16.msra.mxu0 0
        %5719 = vmatprep.subr.bf16.mxu0 0
        %5720 = vmatpush1.bf16.msra.mxu0 0
        %5721 = vmatprep.subr.bf16.mxu0 0
        %5722 = vmatpush1.bf16.msra.mxu0 0
        %5723 = vmatprep.subr.bf16.mxu0 0
        %5724 = vmatpush1.bf16.msra.mxu0 0
        %5725 = vmatprep.subr.bf16.mxu0 0
        %5726 = vmatpush1.bf16.msra.mxu0 0
        %5727 = vmatprep.subr.bf16.mxu0 0
        %5728 = vmatpush1.bf16.msra.mxu0 0
        %5729 = vmatprep.subr.bf16.mxu0 0
        %5730 = vmatpush1.bf16.msra.mxu0 0
        %5731 = vmatprep.subr.bf16.mxu0 0
        %5732 = vmatpush1.bf16.msra.mxu0 0
        %5733 = vmatprep.subr.bf16.mxu0 0
        %5734 = vmatpush1.bf16.msra.mxu0 0
        %5735 = vmatprep.subr.bf16.mxu0 0
        %5736 = vmatpush1.bf16.msra.mxu0 0
        %5737 = vmatprep.mubr.bf16.mxu0 0
        %5738 = vmatmul.mubr.bf16.gmra.mrb[0].mxu0 %v5088
        %v5739 = vpop.f32.mrb[0].mxu0
        %v5740 = vadd.f32 %v3408, %v5739
        %v5741 = vpop.f32.mrb[0].mxu0
        %v5742 = vpop.f32.mrb[0].mxu0
        %v5743 = vadd.f32 %v3411, %v5742
        %v5744 = vpop.f32.mrb[0].mxu0
        %5745 = vdwg.mxu0
        %5746 = vst.msk [vmem:[%s231] sm:$0xff] %vm1112, %v5125
        %5747 = vst.msk [vmem:[%s231 + $0x8] sm:$0xff] %vm1112, %v5128
        %5748 = vst.msk [vmem:[%s231 + $0x10] sm:$0xff] %vm1112, %v5166
        %5749 = vst.msk [vmem:[%s231 + $0x18] sm:$0xff] %vm1112, %v5169
        %5750 = vst.msk [vmem:[%s231 + $0x20] sm:$0xff] %vm1112, %v5207
        %5751 = vst.msk [vmem:[%s231 + $0x28] sm:$0xff] %vm1112, %v5210
        %5752 = vst.msk [vmem:[%s231 + $0x30] sm:$0xff] %vm1112, %v5248
        %5753 = vst.msk [vmem:[%s231 + $0x38] sm:$0xff] %vm1112, %v5251
        %5754 = vst.msk [vmem:[%s231 + $0x40] sm:$0xff] %vm1112, %v5289
        %5755 = vst.msk [vmem:[%s231 + $0x48] sm:$0xff] %vm1112, %v5292
        %5756 = vst.msk [vmem:[%s231 + $0x50] sm:$0xff] %vm1112, %v5330
        %5757 = vst.msk [vmem:[%s231 + $0x58] sm:$0xff] %vm1112, %v5333
        %5758 = vst.msk [vmem:[%s231 + $0x60] sm:$0xff] %vm1112, %v5371
        %5759 = vst.msk [vmem:[%s231 + $0x68] sm:$0xff] %vm1112, %v5374
        %5760 = vst.msk [vmem:[%s231 + $0x70] sm:$0xff] %vm1112, %v5412
        %5761 = vst.msk [vmem:[%s231 + $0x78] sm:$0xff] %vm1112, %v5415
        %5762 = vst.msk [vmem:[%s231 + $0x80] sm:$0xff] %vm1112, %v5453
        %5763 = vst.msk [vmem:[%s231 + $0x88] sm:$0xff] %vm1112, %v5456
        %5764 = vst.msk [vmem:[%s231 + $0x90] sm:$0xff] %vm1112, %v5494
        %5765 = vst.msk [vmem:[%s231 + $0x98] sm:$0xff] %vm1112, %v5497
        %5766 = vst.msk [vmem:[%s231 + $0xa0] sm:$0xff] %vm1112, %v5535
        %5767 = vst.msk [vmem:[%s231 + $0xa8] sm:$0xff] %vm1112, %v5538
        %5768 = vst.msk [vmem:[%s231 + $0xb0] sm:$0xff] %vm1112, %v5576
        %5769 = vst.msk [vmem:[%s231 + $0xb8] sm:$0xff] %vm1112, %v5579
        %5770 = vst.msk [vmem:[%s231 + $0xc0] sm:$0xff] %vm1112, %v5617
        %5771 = vst.msk [vmem:[%s231 + $0xc8] sm:$0xff] %vm1112, %v5620
        %5772 = vst.msk [vmem:[%s231 + $0xd0] sm:$0xff] %vm1112, %v5658
        %5773 = vst.msk [vmem:[%s231 + $0xd8] sm:$0xff] %vm1112, %v5661
        %5774 = vst.msk [vmem:[%s231 + $0xe0] sm:$0xff] %vm1112, %v5699
        %5775 = vst.msk [vmem:[%s231 + $0xe8] sm:$0xff] %vm1112, %v5702
        %5776 = vst.msk [vmem:[%s231 + $0xf0] sm:$0xff] %vm1112, %v5740
        %5777 = vst.msk [vmem:[%s231 + $0xf8] sm:$0xff] %vm1112, %v5743
        %s5778 = sand.u32 %s138, 1
        %s5779 = scalar_lea.sflag [#allocation3], %s5778
        %s5780 = sand.u32 %s138, 1
        %s5781 = smul.addr %s5780, 256
        %s5782 = scalar_lea.vmem [#allocation5], %s5781
        // Predicated region
        $region45: #{aa_kernel_forward.1} parent=39 // pred_check
          %p5783 = pneg %p148
        $region46: #{aa_kernel_forward.1} parent=39 // pred_check_branch
          %5785 = sbr.rel (%p5783) target = $region48
        $region47: #{aa_kernel_forward.1} parent=39 // pred_region
          %s5787 = ssub.s32 4096, 4096
          %5788 = vsyncadd %s5779, %s5787
          %s5789 = smul.addr %s20, 32
          %s5790 = smul.addr %s5789, 128
          %s5791 = scalar_lea.hbm %s5, %s5790
          %s5792 = sshll.u32 %s5782, 4
          %s5793 = int_to_ptr.vmem [resolvable:$true] %s5792
          %5798 = dma.vmem_to_hbm [thread:$0]  %s5793, 4096, %s5791, %s5779, 128, 128, 8
        $region48: #{aa_kernel_forward.1} parent=39 // pred_fallthru
          _
      $region40: #{aa_kernel_forward.1} parent=5 // pred_fallthru
        _
      %p5799 = scmp.le.s32.totalorder 2, %s15
      // Predicated region
      $region49: #{aa_kernel_forward.1} parent=5 // pred_check
        %p5800 = pneg %p5799
      $region50: #{aa_kernel_forward.1} parent=5 // pred_check_branch
        %5802 = sbr.rel (%p5800) target = $region52
      $region51: #{aa_kernel_forward.1} parent=5 // pred_region
        %s5803 = ssub.s32 %s15, 2
        // Predicated region
        $region53: #{aa_kernel_forward.1} parent=51 // pred_check
          %p5804 = pneg %p154
        $region54: #{aa_kernel_forward.1} parent=51 // pred_check_branch
          %5806 = sbr.rel (%p5804) target = $region56
        $region55: #{aa_kernel_forward.1} parent=51 // pred_region
          %s5807 = sand.u32 %s139, 1
          %s5808 = scalar_lea.sflag [#allocation3], %s5807
          %s5809 = sand.u32 %s139, 1
          %s5810 = smul.addr %s5809, 256
          %s5811 = scalar_lea.vmem [#allocation5], %s5810
          %5812 = dma.done %s5808, 4096
        $region56: #{aa_kernel_forward.1} parent=51 // pred_fallthru
          _
      $region52: #{aa_kernel_forward.1} parent=5 // pred_fallthru
        _
    $region6: #{aa_kernel_forward.1} parent=1 // loop_footer
      %s19 = sadd.s32 1, %s15
    $region7: #{aa_kernel_forward.1} parent=1 // loop_footer_branch
      %14 = sbr.rel target = $region3
    $region8: #{aa_kernel_forward.1} parent=1 // loop_exit
      _
    %5813 = vsyncpa [#allocation3], 1
    %s5814 = scalar_lea.sflag [#allocation3], 1
    %5815 = vsyncpa %s5814, 1
    %5816 = vsyncpa [#allocation4], 1
    %s5817 = scalar_lea.sflag [#allocation4], 1
    %5818 = vsyncpa %s5817, 1

</llo_original>
